<compile_context>
chip_gen: v7x
topology: tpu7x:2x2x1
jax: 0.10.0
libtpu: 0.0.40
codegen_flags: <defaults>
</compile_context>

<pallas_src>
import jax
import jax.numpy as jnp
from jax import lax
from jax.experimental import pallas as pl
from jax.experimental.pallas import tpu as pltpu


FEAT_DIM = 512      # CLIP image-embedding width (stand-in encoder output)
HIDDEN = 1024       # projector output / classifier input
LANE_PAD = 128      # num_labels padded up to one full lane tile


def _round_up(x, m):
    return ((x + m - 1) // m) * m


def _head_kernel(x_ref, we_ref, be_ref, wp_ref, bp_ref, wc_ref, bc_ref,
                 out_ref, acc_ref):
    # x_ref  : [TM, TK]   bf16   flattened-image tile (streamed)
    # we_ref : [TK, 512]  bf16   stand-in encode_image weight tile (streamed)
    # be_ref : [1, 512]   f32    (resident)
    # wp_ref : [512,1024] bf16 ; bp_ref : [1,1024] f32   (resident)
    # wc_ref : [1024,128] bf16 (zero-padded cols) ; bc_ref : [1,128] f32   (resident)
    # out_ref: [TM, 128]  f32    lane-dense logits block
    # acc_ref: [TM, 512]  f32    encode_image accumulator (persists across K steps)
    k = pl.program_id(1)

    @pl.when(k == 0)
    def _zero():
        acc_ref[...] = jnp.zeros_like(acc_ref)

    # partial product of the frozen encoder: [TM,TK] @ [TK,512], f32 accumulate on MXU
    acc_ref[...] += jnp.dot(x_ref[...], we_ref[...],
                            preferred_element_type=jnp.float32)

    @pl.when(k == pl.num_programs(1) - 1)
    def _finalize():
        feats = acc_ref[...] + be_ref[...]                       # [TM, 512] f32

        # F.normalize(dim=-1, eps=1e-12): x / max(||x||, eps) == x * rsqrt(max(sumsq, eps^2))
        sumsq = jnp.sum(feats * feats, axis=-1, keepdims=True)
        feats = feats * lax.rsqrt(jnp.maximum(sumsq, 1e-24))

        # projector: Linear(512 -> 1024), bf16 operands, f32 accumulate
        proj = jnp.dot(feats.astype(wp_ref.dtype), wp_ref[...],
                       preferred_element_type=jnp.float32) + bp_ref[...]

        # classifier: Linear(1024 -> num_labels), lane-padded to 128 output columns
        logits = jnp.dot(proj.astype(wc_ref.dtype), wc_ref[...],
                         preferred_element_type=jnp.float32) + bc_ref[...]

        out_ref[...] = logits.astype(out_ref.dtype)


def _choose_k_tiling(d_in, tk_target=4096):
    """Reduction tile: as large as 4096, always a multiple of 512, dividing d_pad."""
    d_512 = _round_up(d_in, 512)
    tk = min(tk_target, d_512)
    return _round_up(d_in, tk), tk


def _choose_batch_tiling(batch):
    """Pad batch only to the bf16 sublane-pair multiple (16).  Prefer two batch tiles
    (so both v7x TensorCores get work) when that costs no extra padding; use tm=256
    for large batches so the dominant `we` stream is re-read fewer times."""
    b_pad = _round_up(max(batch, 1), 16)
    if 32 <= b_pad <= 512 and b_pad % 32 == 0:
        return b_pad, b_pad // 2          # exactly two batch tiles, no extra padding
    tm = min(256, b_pad)
    return _round_up(b_pad, tm), tm


def prepare_head_params(params, *, tk_target=4096):
    """One-time prep of the frozen weights (bf16 cast + padding), hoisted out of the
    per-call forward so the HBM-bound `we` stream is never re-materialized."""
    d_in = params["we"].shape[0]
    num_labels = params["wc"].shape[1]
    d_pad, tk = _choose_k_tiling(d_in, tk_target)

    prepped = {
        "we": jnp.pad(params["we"].astype(jnp.bfloat16),
                      ((0, d_pad - d_in), (0, 0))),
        "be": params["be"].astype(jnp.float32).reshape(1, FEAT_DIM),
        "wp": params["wp"].astype(jnp.bfloat16),
        "bp": params["bp"].astype(jnp.float32).reshape(1, HIDDEN),
        "wc": jnp.pad(params["wc"].astype(jnp.bfloat16),
                      ((0, 0), (0, LANE_PAD - num_labels))),
        "bc": jnp.pad(params["bc"].astype(jnp.float32).reshape(1, num_labels),
                      ((0, 0), (0, LANE_PAD - num_labels))),
    }
    meta = dict(d_in=d_in, d_pad=d_pad, tk=tk, num_labels=num_labels)
    return prepped, meta


def make_clip_head_forward(params, *, tk_target=4096):
    """Returns a jitted forward(x_nchw) -> logits [B, num_labels] closure over the
    pre-padded bf16 frozen weights."""
    prepped, meta = prepare_head_params(params, tk_target=tk_target)
    d_in, d_pad, tk = meta["d_in"], meta["d_pad"], meta["tk"]
    num_labels = meta["num_labels"]

    # Generation-aware VMEM ceiling: ~96 MiB on v5e/v6e (128 MiB physical),
    # ~48 MiB on v7x (64 MiB physical). Conservative fallback if query fails.
    try:
        vmem_cap = int(pltpu.get_tpu_info().vmem_capacity_bytes)
    except Exception:
        vmem_cap = 64 * 1024 * 1024
    vmem_limit = min(vmem_cap * 3 // 4, 96 * 1024 * 1024)

    @jax.jit
    def forward(x_nchw):
        B = x_nchw.shape[0]
        x_flat = x_nchw.reshape(B, -1)            # glue: flatten NCHW -> [B, d_in]
        assert x_flat.shape[1] == d_in, "input spatial size does not match weights"
        b_pad, tm = _choose_batch_tiling(B)
        n_btiles = b_pad // tm
        grid = (n_btiles, d_pad // tk)

        # only x is padded per-call (zero rows / zero K-columns are inert)
        x_b = jnp.pad(x_flat.astype(jnp.bfloat16),
                      ((0, b_pad - B), (0, d_pad - d_in)))

        flops = 2 * b_pad * (d_pad * FEAT_DIM + FEAT_DIM * HIDDEN + HIDDEN * LANE_PAD)
        bytes_accessed = (
            b_pad * d_pad * 2                             # x stream (bf16)
            + n_btiles * d_pad * FEAT_DIM * 2             # we re-streamed per batch tile
            + (prepped["wp"].size + prepped["wc"].size) * 2
            + (prepped["be"].size + prepped["bp"].size + prepped["bc"].size) * 4
            + b_pad * LANE_PAD * 4)                       # f32 output

        out = pl.pallas_call(
            _head_kernel,
            out_shape=jax.ShapeDtypeStruct((b_pad, LANE_PAD), jnp.float32),
            grid_spec=pltpu.PrefetchScalarGridSpec(
                num_scalar_prefetch=0,
                grid=grid,
                in_specs=[
                    pl.BlockSpec((tm, tk), lambda i, k: (i, k)),            # x (streamed)
                    pl.BlockSpec((tk, FEAT_DIM), lambda i, k: (k, 0)),      # we (streamed)
                    pl.BlockSpec((1, FEAT_DIM), lambda i, k: (0, 0)),       # be (resident)
                    pl.BlockSpec((FEAT_DIM, HIDDEN), lambda i, k: (0, 0)),  # wp (resident)
                    pl.BlockSpec((1, HIDDEN), lambda i, k: (0, 0)),         # bp (resident)
                    pl.BlockSpec((HIDDEN, LANE_PAD), lambda i, k: (0, 0)),  # wc (resident)
                    pl.BlockSpec((1, LANE_PAD), lambda i, k: (0, 0)),       # bc (resident)
                ],
                out_specs=pl.BlockSpec((tm, LANE_PAD), lambda i, k: (i, 0)),
                scratch_shapes=[pltpu.VMEM((tm, FEAT_DIM), jnp.float32)],
            ),
            compiler_params=pltpu.CompilerParams(
                dimension_semantics=("parallel", "arbitrary"),
                vmem_limit_bytes=vmem_limit,
            ),
            cost_estimate=pl.CostEstimate(
                flops=flops, transcendentals=b_pad, bytes_accessed=bytes_accessed),
        )(x_b, prepped["we"], prepped["be"], prepped["wp"], prepped["bp"],
          prepped["wc"], prepped["bc"])

        return out[:B, :num_labels]

    return forward


def init_params(key, d_in, feat_dim=FEAT_DIM, hidden=HIDDEN, num_labels=2):
    k1, k2, k3, k4, k5, k6 = jax.random.split(key, 6)
    scale_e = 1.0 / jnp.sqrt(jnp.float32(d_in))
    scale_p = 1.0 / jnp.sqrt(jnp.float32(feat_dim))
    scale_c = 1.0 / jnp.sqrt(jnp.float32(hidden))
    return {
        # frozen stand-in encoder (flatten -> feat_dim)
        "we": jax.random.normal(k1, (d_in, feat_dim), jnp.float32) * scale_e,
        "be": jax.random.normal(k2, (1, feat_dim), jnp.float32) * scale_e,
        # projector: Linear(512, 1024)
        "wp": jax.random.normal(k3, (feat_dim, hidden), jnp.float32) * scale_p,
        "bp": jax.random.normal(k4, (1, hidden), jnp.float32) * scale_p,
        # classifier: Linear(1024, num_labels)
        "wc": jax.random.normal(k5, (hidden, num_labels), jnp.float32) * scale_c,
        "bc": jax.random.normal(k6, (1, num_labels), jnp.float32) * scale_c,
    }


if __name__ == "__main__":
    key = jax.random.PRNGKey(0)
    kx, kp = jax.random.split(key)

    # small image batch, NCHW like PyTorch
    B, C, H, W = 2, 4, 16, 16
    x = jax.random.normal(kx, (B, C, H, W), jnp.float32)

    params = init_params(kp, d_in=C * H * W, num_labels=2)

    forward = make_clip_head_forward(params)   # one-time weight prep + jit
    logits = forward(x)
    jax.block_until_ready(logits)

    # reference in plain JAX with matching bf16 operands / f32 accumulation
    x_flat = x.reshape(B, -1)
    feats = jnp.dot(x_flat.astype(jnp.bfloat16), params["we"].astype(jnp.bfloat16),
                    preferred_element_type=jnp.float32) + params["be"]
    feats = feats * lax.rsqrt(
        jnp.maximum(jnp.sum(feats * feats, axis=-1, keepdims=True), 1e-24))
    proj = jnp.dot(feats.astype(jnp.bfloat16), params["wp"].astype(jnp.bfloat16),
                   preferred_element_type=jnp.float32) + params["bp"]
    ref = jnp.dot(proj.astype(jnp.bfloat16), params["wc"].astype(jnp.bfloat16),
                  preferred_element_type=jnp.float32) + params["bc"]

    assert logits.shape == (B, 2)
    assert jnp.allclose(logits, ref, atol=2e-2, rtol=2e-2), (
        f"max abs err = {jnp.max(jnp.abs(logits - ref))}")

    print("KERNEL_OK")
</pallas_src>

<mosaic_0001>
module attributes {stable_mosaic.version = 11 : i64} {
  func.func @_head_kernel(%arg0: i32, %arg1: i32, %arg2: memref<16x1024xbf16, #tpu.memory_space<vmem>>, %arg3: memref<1024x512xbf16, #tpu.memory_space<vmem>>, %arg4: memref<1x512xf32, #tpu.memory_space<vmem>>, %arg5: memref<512x1024xbf16, #tpu.memory_space<vmem>>, %arg6: memref<1x1024xf32, #tpu.memory_space<vmem>>, %arg7: memref<1024x128xbf16, #tpu.memory_space<vmem>>, %arg8: memref<1x128xf32, #tpu.memory_space<vmem>>, %arg9: memref<16x128xf32, #tpu.memory_space<vmem>>, %arg10: memref<16x512xf32, #tpu.memory_space<vmem>>) attributes {dimension_semantics = [#tpu.dimension_semantics<parallel>, #tpu.dimension_semantics<arbitrary>], iteration_bounds = array<i64: 1, 1>, scalar_prefetch = 0 : i64, scratch_operands = 1 : i64, tpu.core_type = #tpu.core_type<tc>, window_params = [{transform_indices = @transform_0, window_bounds = array<i64: 16, 1024>}, {transform_indices = @transform_1, window_bounds = array<i64: 1024, 512>}, {pipeline_mode = #tpu.pipeline_mode<synchronous>, transform_indices = @transform_2, window_bounds = array<i64: 1, 512>}, {pipeline_mode = #tpu.pipeline_mode<synchronous>, transform_indices = @transform_3, window_bounds = array<i64: 512, 1024>}, {pipeline_mode = #tpu.pipeline_mode<synchronous>, transform_indices = @transform_4, window_bounds = array<i64: 1, 1024>}, {pipeline_mode = #tpu.pipeline_mode<synchronous>, transform_indices = @transform_5, window_bounds = array<i64: 1024, 128>}, {pipeline_mode = #tpu.pipeline_mode<synchronous>, transform_indices = @transform_6, window_bounds = array<i64: 1, 128>}, {transform_indices = @transform_7, window_bounds = array<i64: 16, 128>}]} {
    %c0_i32 = arith.constant 0 : i32
    %0 = arith.cmpi eq, %arg1, %c0_i32 : i32
    %1 = arith.extui %0 : i1 to i32
    %c0_i32_0 = arith.constant 0 : i32
    %2 = arith.cmpi ne, %1, %c0_i32_0 : i32
    scf.if %2 {
      %cst_10 = arith.constant 0.000000e+00 : f32
      %12 = vector.broadcast %cst_10 : f32 to vector<16x512xf32>
      %c0_11 = arith.constant 0 : index
      %c0_12 = arith.constant 0 : index
      %13 = vector.load %arg10[%c0_11, %c0_12] : memref<16x512xf32, #tpu.memory_space<vmem>>, vector<16x512xf32>
      tpu.vector_store %arg10[%c0_11, %c0_12], %12 {strides = array<i32>} : memref<16x512xf32, #tpu.memory_space<vmem>>, vector<16x512xf32>,
    } else {
    }
    %c0 = arith.constant 0 : index
    %c0_1 = arith.constant 0 : index
    %3 = vector.load %arg10[%c0, %c0_1] : memref<16x512xf32, #tpu.memory_space<vmem>>, vector<16x512xf32>
    %c0_2 = arith.constant 0 : index
    %c0_3 = arith.constant 0 : index
    %4 = vector.load %arg2[%c0_2, %c0_3] : memref<16x1024xbf16, #tpu.memory_space<vmem>>, vector<16x1024xbf16>
    %c0_4 = arith.constant 0 : index
    %c0_5 = arith.constant 0 : index
    %5 = vector.load %arg3[%c0_4, %c0_5] : memref<1024x512xbf16, #tpu.memory_space<vmem>>, vector<1024x512xbf16>
    %cst = arith.constant dense<0.000000e+00> : vector<16x512xf32>
    %6 = tpu.matmul %4, %5, %cst {dimension_numbers = #tpu.dot_dimension_numbers<[1], [0], [0], [1], [0, 0, 1, 1], [], []>} : vector<16x1024xbf16>, vector<1024x512xbf16>, vector<16x512xf32> -> vector<16x512xf32>
    %7 = arith.addf %3, %6 : vector<16x512xf32>
    %c0_6 = arith.constant 0 : index
    %c0_7 = arith.constant 0 : index
    %8 = vector.load %arg10[%c0_6, %c0_7] : memref<16x512xf32, #tpu.memory_space<vmem>>, vector<16x512xf32>
    tpu.vector_store %arg10[%c0_6, %c0_7], %7 {strides = array<i32>} : memref<16x512xf32, #tpu.memory_space<vmem>>, vector<16x512xf32>,
    %c0_i32_8 = arith.constant 0 : i32
    %9 = arith.cmpi eq, %arg1, %c0_i32_8 : i32
    %10 = arith.extui %9 : i1 to i32
    %c0_i32_9 = arith.constant 0 : i32
    %11 = arith.cmpi ne, %10, %c0_i32_9 : i32
    scf.if %11 {
      %c0_10 = arith.constant 0 : index
      %c0_11 = arith.constant 0 : index
      %12 = vector.load %arg10[%c0_10, %c0_11] : memref<16x512xf32, #tpu.memory_space<vmem>>, vector<16x512xf32>
      %c0_12 = arith.constant 0 : index
      %c0_13 = arith.constant 0 : index
      %13 = vector.load %arg4[%c0_12, %c0_13] : memref<1x512xf32, #tpu.memory_space<vmem>>, vector<1x512xf32>
      %14 = vector.broadcast %13 : vector<1x512xf32> to vector<16x512xf32>
      %15 = arith.addf %12, %14 : vector<16x512xf32>
      %16 = arith.mulf %15, %15 : vector<16x512xf32>
      %cst_14 = arith.constant dense<0.000000e+00> : vector<16xf32>
      %17 = vector.multi_reduction <add>, %16, %cst_14 [1] : vector<16x512xf32> to vector<16xf32>
      %18 = vector.shape_cast %17 : vector<16xf32> to vector<16x1xf32>
      %cst_15 = arith.constant 1.000000e-24 : f32
      %19 = vector.broadcast %cst_15 : f32 to vector<16x1xf32>
      %20 = arith.maximumf %18, %19 : vector<16x1xf32>
      %21 = math.rsqrt %20 : vector<16x1xf32>
      %22 = vector.broadcast %21 : vector<16x1xf32> to vector<16x512xf32>
      %23 = arith.mulf %15, %22 : vector<16x512xf32>
      %24 = arith.truncf %23 : vector<16x512xf32> to vector<16x512xbf16>
      %c0_16 = arith.constant 0 : index
      %c0_17 = arith.constant 0 : index
      %25 = vector.load %arg5[%c0_16, %c0_17] : memref<512x1024xbf16, #tpu.memory_space<vmem>>, vector<512x1024xbf16>
      %cst_18 = arith.constant dense<0.000000e+00> : vector<16x1024xf32>
      %26 = tpu.matmul %24, %25, %cst_18 {dimension_numbers = #tpu.dot_dimension_numbers<[1], [0], [0], [1], [0, 0, 1, 1], [], []>} : vector<16x512xbf16>, vector<512x1024xbf16>, vector<16x1024xf32> -> vector<16x1024xf32>
      %c0_19 = arith.constant 0 : index
      %c0_20 = arith.constant 0 : index
      %27 = vector.load %arg6[%c0_19, %c0_20] : memref<1x1024xf32, #tpu.memory_space<vmem>>, vector<1x1024xf32>
      %28 = vector.broadcast %27 : vector<1x1024xf32> to vector<16x1024xf32>
      %29 = arith.addf %26, %28 : vector<16x1024xf32>
      %30 = arith.truncf %29 : vector<16x1024xf32> to vector<16x1024xbf16>
      %c0_21 = arith.constant 0 : index
      %c0_22 = arith.constant 0 : index
      %31 = vector.load %arg7[%c0_21, %c0_22] : memref<1024x128xbf16, #tpu.memory_space<vmem>>, vector<1024x128xbf16>
      %cst_23 = arith.constant dense<0.000000e+00> : vector<16x128xf32>
      %32 = tpu.matmul %30, %31, %cst_23 {dimension_numbers = #tpu.dot_dimension_numbers<[1], [0], [0], [1], [0, 0, 1, 1], [], []>} : vector<16x1024xbf16>, vector<1024x128xbf16>, vector<16x128xf32> -> vector<16x128xf32>
      %c0_24 = arith.constant 0 : index
      %c0_25 = arith.constant 0 : index
      %33 = vector.load %arg8[%c0_24, %c0_25] : memref<1x128xf32, #tpu.memory_space<vmem>>, vector<1x128xf32>
      %34 = vector.broadcast %33 : vector<1x128xf32> to vector<16x128xf32>
      %35 = arith.addf %32, %34 : vector<16x128xf32>
      %c0_26 = arith.constant 0 : index
      %c0_27 = arith.constant 0 : index
      %36 = vector.load %arg9[%c0_26, %c0_27] : memref<16x128xf32, #tpu.memory_space<vmem>>, vector<16x128xf32>
      tpu.vector_store %arg9[%c0_26, %c0_27], %35 {strides = array<i32>} : memref<16x128xf32, #tpu.memory_space<vmem>>, vector<16x128xf32>,
    } else {
    }
    return
  }
  func.func @transform_0(%arg0: i32, %arg1: i32) -> (i32, i32) {
    %c0_i32 = arith.constant 0 : i32
    return %arg0, %arg1 : i32, i32
  }
  func.func @transform_1(%arg0: i32, %arg1: i32) -> (i32, i32) {
    %c0_i32 = arith.constant 0 : i32
    %c0_i32_0 = arith.constant 0 : i32
    return %arg1, %c0_i32 : i32, i32
  }
  func.func @transform_2(%arg0: i32, %arg1: i32) -> (i32, i32) {
    %c0_i32 = arith.constant 0 : i32
    %c0_i32_0 = arith.constant 0 : i32
    %c0_i32_1 = arith.constant 0 : i32
    return %c0_i32, %c0_i32_0 : i32, i32
  }
  func.func @transform_3(%arg0: i32, %arg1: i32) -> (i32, i32) {
    %c0_i32 = arith.constant 0 : i32
    %c0_i32_0 = arith.constant 0 : i32
    %c0_i32_1 = arith.constant 0 : i32
    return %c0_i32, %c0_i32_0 : i32, i32
  }
  func.func @transform_4(%arg0: i32, %arg1: i32) -> (i32, i32) {
    %c0_i32 = arith.constant 0 : i32
    %c0_i32_0 = arith.constant 0 : i32
    %c0_i32_1 = arith.constant 0 : i32
    return %c0_i32, %c0_i32_0 : i32, i32
  }
  func.func @transform_5(%arg0: i32, %arg1: i32) -> (i32, i32) {
    %c0_i32 = arith.constant 0 : i32
    %c0_i32_0 = arith.constant 0 : i32
    %c0_i32_1 = arith.constant 0 : i32
    return %c0_i32, %c0_i32_0 : i32, i32
  }
  func.func @transform_6(%arg0: i32, %arg1: i32) -> (i32, i32) {
    %c0_i32 = arith.constant 0 : i32
    %c0_i32_0 = arith.constant 0 : i32
    %c0_i32_1 = arith.constant 0 : i32
    return %c0_i32, %c0_i32_0 : i32, i32
  }
  func.func @transform_7(%arg0: i32, %arg1: i32) -> (i32, i32) {
    %c0_i32 = arith.constant 0 : i32
    %c0_i32_0 = arith.constant 0 : i32
    return %arg0, %c0_i32 : i32, i32
  }
}

</mosaic_0001>

<llo_original>
// kernel: forward.1
$region0: #{forward.1}
  #allocation0 [shape = 'u32[]', space=smem, size = 0x4, offset = 0x4, fixed_abs, tag = 'smem constant byte address 0x4 - core index']
  #allocation1 [shape = 'u32[144,128]{1,0:T(1,128)}', space=vmem, size = 0x12000, scoped, tag = 'internal scratch']
  #allocation2 [shape = 'f32[16,512]{1,0:T(8,128)}', space=vmem, size = 0x8000, scoped, tag = 'scratch operand']
  %s0 = inlined_call_operand.vmem [shape: bf16[16,1024], index: 0, kind: input, shape index: {}]
  %s1 = inlined_call_operand.vmem [shape: bf16[1024,512], index: 1, kind: input, shape index: {}]
  %s2 = inlined_call_operand.vmem [shape: f32[1,512], index: 2, kind: input, shape index: {}]
  %s3 = inlined_call_operand.vmem [shape: bf16[512,1024], index: 3, kind: input, shape index: {}]
  %s4 = inlined_call_operand.vmem [shape: f32[1,1024], index: 4, kind: input, shape index: {}]
  %s5 = inlined_call_operand.vmem [shape: bf16[1024,128], index: 5, kind: input, shape index: {}]
  %s6 = inlined_call_operand.vmem [shape: f32[1,128], index: 6, kind: input, shape index: {}]
  %s7 = inlined_call_operand.vmem [shape: f32[16,128], index: 7, kind: output, shape index: {}]
  %s8 = sld [smem:[#allocation0]]
  $region46: #{forward.1} parent=0
    _
  %s10 = ssub.s32 1, %s8
  %s11 = scalar_select 0, %s10, %s8
  // Predicated region
  $region2: #{forward.1} parent=0 // pred_check
    _
  $region3: #{forward.1} parent=0 // pred_check_branch
    %13 = sbr.rel (0) target = $region5
  $region4: #{forward.1} parent=0 // pred_region
    _
  $region5: #{forward.1} parent=0 // pred_fallthru
    _
  // Predicated region
  $region6: #{forward.1} parent=0 // pred_check
    _
  $region7: #{forward.1} parent=0 // pred_check_branch
    %15 = sbr.rel (0) target = $region9
  $region8: #{forward.1} parent=0 // pred_region
    _
  $region9: #{forward.1} parent=0 // pred_fallthru
    _
  // Predicated region
  $region10: #{forward.1} parent=0 // pred_check
    _
  $region11: #{forward.1} parent=0 // pred_check_branch
    %17 = sbr.rel (0) target = $region13
  $region12: #{forward.1} parent=0 // pred_region
    _
  $region13: #{forward.1} parent=0 // pred_fallthru
    _
  // Predicated region
  $region14: #{forward.1} parent=0 // pred_check
    _
  $region15: #{forward.1} parent=0 // pred_check_branch
    %19 = sbr.rel (0) target = $region17
  $region16: #{forward.1} parent=0 // pred_region
    _
  $region17: #{forward.1} parent=0 // pred_fallthru
    _
  // Predicated region
  $region18: #{forward.1} parent=0 // pred_check
    _
  $region19: #{forward.1} parent=0 // pred_check_branch
    %21 = sbr.rel (0) target = $region21
  $region20: #{forward.1} parent=0 // pred_region
    _
  $region21: #{forward.1} parent=0 // pred_fallthru
    _
  // Predicated region
  $region22: #{forward.1} parent=0 // pred_check
    _
  $region23: #{forward.1} parent=0 // pred_check_branch
    %23 = sbr.rel (0) target = $region25
  $region24: #{forward.1} parent=0 // pred_region
    _
  $region25: #{forward.1} parent=0 // pred_fallthru
    _
  // Predicated region
  $region26: #{forward.1} parent=0 // pred_check
    _
  $region27: #{forward.1} parent=0 // pred_check_branch
    %25 = sbr.rel (0) target = $region29
  $region28: #{forward.1} parent=0 // pred_region
    _
  $region29: #{forward.1} parent=0 // pred_fallthru
    _
  %p27 = scmp.eq.s32.totalorder 0, 0
  // Predicated region
  $region30: #{forward.1} parent=0 // pred_check
    %p28 = pneg %p27
  $region31: #{forward.1} parent=0 // pred_check_branch
    %30 = sbr.rel (%p28) target = $region33
  $region32: #{forward.1} parent=0 // pred_region
    %31 = vst [vmem:[#allocation2] sm:$0xff] 0.0
    %32 = vst [vmem:[#allocation2 + $0x8] sm:$0xff] 0.0
    %33 = vst [vmem:[#allocation2 + $0x10] sm:$0xff] 0.0
    %34 = vst [vmem:[#allocation2 + $0x18] sm:$0xff] 0.0
    %35 = vst [vmem:[#allocation2 + $0x20] sm:$0xff] 0.0
    %36 = vst [vmem:[#allocation2 + $0x28] sm:$0xff] 0.0
    %37 = vst [vmem:[#allocation2 + $0x30] sm:$0xff] 0.0
    %38 = vst [vmem:[#allocation2 + $0x38] sm:$0xff] 0.0
  $region33: #{forward.1} parent=0 // pred_fallthru
    _
  %v39 = vld [vmem:[#allocation2] sm:$0xff]
  %v40 = vld [vmem:[#allocation2 + $0x8] sm:$0xff]
  %v41 = vld [vmem:[#allocation2 + $0x10] sm:$0xff]
  %v42 = vld [vmem:[#allocation2 + $0x18] sm:$0xff]
  %v43 = vld [vmem:[#allocation2 + $0x20] sm:$0xff]
  %v44 = vld [vmem:[#allocation2 + $0x28] sm:$0xff]
  %v45 = vld [vmem:[#allocation2 + $0x30] sm:$0xff]
  %v46 = vld [vmem:[#allocation2 + $0x38] sm:$0xff]
  %v47 = vld [vmem:[%s0] sm:$0xff]
  %v48 = vld [vmem:[%s0 + $0x8] sm:$0xff]
  %v49 = vld [vmem:[%s0 + $0x10] sm:$0xff]
  %v50 = vld [vmem:[%s0 + $0x18] sm:$0xff]
  %v51 = vld [vmem:[%s0 + $0x20] sm:$0xff]
  %v52 = vld [vmem:[%s0 + $0x28] sm:$0xff]
  %v53 = vld [vmem:[%s0 + $0x30] sm:$0xff]
  %v54 = vld [vmem:[%s0 + $0x38] sm:$0xff]
  %v55 = vld [vmem:[%s1] sm:$0xff]
  %v56 = vld [vmem:[%s1 + $0x8] sm:$0xff]
  %v57 = vld [vmem:[%s1 + $0x10] sm:$0xff]
  %v58 = vld [vmem:[%s1 + $0x18] sm:$0xff]
  %v59 = vld [vmem:[%s1 + $0x20] sm:$0xff]
  %v60 = vld [vmem:[%s1 + $0x28] sm:$0xff]
  %v61 = vld [vmem:[%s1 + $0x30] sm:$0xff]
  %v62 = vld [vmem:[%s1 + $0x38] sm:$0xff]
  %v63 = vld [vmem:[%s1 + $0x40] sm:$0xff]
  %v64 = vld [vmem:[%s1 + $0x48] sm:$0xff]
  %v65 = vld [vmem:[%s1 + $0x50] sm:$0xff]
  %v66 = vld [vmem:[%s1 + $0x58] sm:$0xff]
  %v67 = vld [vmem:[%s1 + $0x60] sm:$0xff]
  %v68 = vld [vmem:[%s1 + $0x68] sm:$0xff]
  %v69 = vld [vmem:[%s1 + $0x70] sm:$0xff]
  %v70 = vld [vmem:[%s1 + $0x78] sm:$0xff]
  %v71 = vld [vmem:[%s1 + $0x80] sm:$0xff]
  %v72 = vld [vmem:[%s1 + $0x88] sm:$0xff]
  %v73 = vld [vmem:[%s1 + $0x90] sm:$0xff]
  %v74 = vld [vmem:[%s1 + $0x98] sm:$0xff]
  %v75 = vld [vmem:[%s1 + $0xa0] sm:$0xff]
  %v76 = vld [vmem:[%s1 + $0xa8] sm:$0xff]
  %v77 = vld [vmem:[%s1 + $0xb0] sm:$0xff]
  %v78 = vld [vmem:[%s1 + $0xb8] sm:$0xff]
  %v79 = vld [vmem:[%s1 + $0xc0] sm:$0xff]
  %v80 = vld [vmem:[%s1 + $0xc8] sm:$0xff]
  %v81 = vld [vmem:[%s1 + $0xd0] sm:$0xff]
  %v82 = vld [vmem:[%s1 + $0xd8] sm:$0xff]
  %v83 = vld [vmem:[%s1 + $0xe0] sm:$0xff]
  %v84 = vld [vmem:[%s1 + $0xe8] sm:$0xff]
  %v85 = vld [vmem:[%s1 + $0xf0] sm:$0xff]
  %v86 = vld [vmem:[%s1 + $0xf8] sm:$0xff]
  %v87 = vld [vmem:[%s1 + $0x100] sm:$0xff]
  %v88 = vld [vmem:[%s1 + $0x108] sm:$0xff]
  %v89 = vld [vmem:[%s1 + $0x110] sm:$0xff]
  %v90 = vld [vmem:[%s1 + $0x118] sm:$0xff]
  %v91 = vld [vmem:[%s1 + $0x120] sm:$0xff]
  %v92 = vld [vmem:[%s1 + $0x128] sm:$0xff]
  %v93 = vld [vmem:[%s1 + $0x130] sm:$0xff]
  %v94 = vld [vmem:[%s1 + $0x138] sm:$0xff]
  %v95 = vld [vmem:[%s1 + $0x140] sm:$0xff]
  %v96 = vld [vmem:[%s1 + $0x148] sm:$0xff]
  %v97 = vld [vmem:[%s1 + $0x150] sm:$0xff]
  %v98 = vld [vmem:[%s1 + $0x158] sm:$0xff]
  %v99 = vld [vmem:[%s1 + $0x160] sm:$0xff]
  %v100 = vld [vmem:[%s1 + $0x168] sm:$0xff]
  %v101 = vld [vmem:[%s1 + $0x170] sm:$0xff]
  %v102 = vld [vmem:[%s1 + $0x178] sm:$0xff]
  %v103 = vld [vmem:[%s1 + $0x180] sm:$0xff]
  %v104 = vld [vmem:[%s1 + $0x188] sm:$0xff]
  %v105 = vld [vmem:[%s1 + $0x190] sm:$0xff]
  %v106 = vld [vmem:[%s1 + $0x198] sm:$0xff]
  %v107 = vld [vmem:[%s1 + $0x1a0] sm:$0xff]
  %v108 = vld [vmem:[%s1 + $0x1a8] sm:$0xff]
  %v109 = vld [vmem:[%s1 + $0x1b0] sm:$0xff]
  %v110 = vld [vmem:[%s1 + $0x1b8] sm:$0xff]
  %v111 = vld [vmem:[%s1 + $0x1c0] sm:$0xff]
  %v112 = vld [vmem:[%s1 + $0x1c8] sm:$0xff]
  %v113 = vld [vmem:[%s1 + $0x1d0] sm:$0xff]
  %v114 = vld [vmem:[%s1 + $0x1d8] sm:$0xff]
  %v115 = vld [vmem:[%s1 + $0x1e0] sm:$0xff]
  %v116 = vld [vmem:[%s1 + $0x1e8] sm:$0xff]
  %v117 = vld [vmem:[%s1 + $0x1f0] sm:$0xff]
  %v118 = vld [vmem:[%s1 + $0x1f8] sm:$0xff]
  %v119 = vld [vmem:[%s1 + $0x200] sm:$0xff]
  %v120 = vld [vmem:[%s1 + $0x208] sm:$0xff]
  %v121 = vld [vmem:[%s1 + $0x210] sm:$0xff]
  %v122 = vld [vmem:[%s1 + $0x218] sm:$0xff]
  %v123 = vld [vmem:[%s1 + $0x220] sm:$0xff]
  %v124 = vld [vmem:[%s1 + $0x228] sm:$0xff]
  %v125 = vld [vmem:[%s1 + $0x230] sm:$0xff]
  %v126 = vld [vmem:[%s1 + $0x238] sm:$0xff]
  %v127 = vld [vmem:[%s1 + $0x240] sm:$0xff]
  %v128 = vld [vmem:[%s1 + $0x248] sm:$0xff]
  %v129 = vld [vmem:[%s1 + $0x250] sm:$0xff]
  %v130 = vld [vmem:[%s1 + $0x258] sm:$0xff]
  %v131 = vld [vmem:[%s1 + $0x260] sm:$0xff]
  %v132 = vld [vmem:[%s1 + $0x268] sm:$0xff]
  %v133 = vld [vmem:[%s1 + $0x270] sm:$0xff]
  %v134 = vld [vmem:[%s1 + $0x278] sm:$0xff]
  %v135 = vld [vmem:[%s1 + $0x280] sm:$0xff]
  %v136 = vld [vmem:[%s1 + $0x288] sm:$0xff]
  %v137 = vld [vmem:[%s1 + $0x290] sm:$0xff]
  %v138 = vld [vmem:[%s1 + $0x298] sm:$0xff]
  %v139 = vld [vmem:[%s1 + $0x2a0] sm:$0xff]
  %v140 = vld [vmem:[%s1 + $0x2a8] sm:$0xff]
  %v141 = vld [vmem:[%s1 + $0x2b0] sm:$0xff]
  %v142 = vld [vmem:[%s1 + $0x2b8] sm:$0xff]
  %v143 = vld [vmem:[%s1 + $0x2c0] sm:$0xff]
  %v144 = vld [vmem:[%s1 + $0x2c8] sm:$0xff]
  %v145 = vld [vmem:[%s1 + $0x2d0] sm:$0xff]
  %v146 = vld [vmem:[%s1 + $0x2d8] sm:$0xff]
  %v147 = vld [vmem:[%s1 + $0x2e0] sm:$0xff]
  %v148 = vld [vmem:[%s1 + $0x2e8] sm:$0xff]
  %v149 = vld [vmem:[%s1 + $0x2f0] sm:$0xff]
  %v150 = vld [vmem:[%s1 + $0x2f8] sm:$0xff]
  %v151 = vld [vmem:[%s1 + $0x300] sm:$0xff]
  %v152 = vld [vmem:[%s1 + $0x308] sm:$0xff]
  %v153 = vld [vmem:[%s1 + $0x310] sm:$0xff]
  %v154 = vld [vmem:[%s1 + $0x318] sm:$0xff]
  %v155 = vld [vmem:[%s1 + $0x320] sm:$0xff]
  %v156 = vld [vmem:[%s1 + $0x328] sm:$0xff]
  %v157 = vld [vmem:[%s1 + $0x330] sm:$0xff]
  %v158 = vld [vmem:[%s1 + $0x338] sm:$0xff]
  %v159 = vld [vmem:[%s1 + $0x340] sm:$0xff]
  %v160 = vld [vmem:[%s1 + $0x348] sm:$0xff]
  %v161 = vld [vmem:[%s1 + $0x350] sm:$0xff]
  %v162 = vld [vmem:[%s1 + $0x358] sm:$0xff]
  %v163 = vld [vmem:[%s1 + $0x360] sm:$0xff]
  %v164 = vld [vmem:[%s1 + $0x368] sm:$0xff]
  %v165 = vld [vmem:[%s1 + $0x370] sm:$0xff]
  %v166 = vld [vmem:[%s1 + $0x378] sm:$0xff]
  %v167 = vld [vmem:[%s1 + $0x380] sm:$0xff]
  %v168 = vld [vmem:[%s1 + $0x388] sm:$0xff]
  %v169 = vld [vmem:[%s1 + $0x390] sm:$0xff]
  %v170 = vld [vmem:[%s1 + $0x398] sm:$0xff]
  %v171 = vld [vmem:[%s1 + $0x3a0] sm:$0xff]
  %v172 = vld [vmem:[%s1 + $0x3a8] sm:$0xff]
  %v173 = vld [vmem:[%s1 + $0x3b0] sm:$0xff]
  %v174 = vld [vmem:[%s1 + $0x3b8] sm:$0xff]
  %v175 = vld [vmem:[%s1 + $0x3c0] sm:$0xff]
  %v176 = vld [vmem:[%s1 + $0x3c8] sm:$0xff]
  %v177 = vld [vmem:[%s1 + $0x3d0] sm:$0xff]
  %v178 = vld [vmem:[%s1 + $0x3d8] sm:$0xff]
  %v179 = vld [vmem:[%s1 + $0x3e0] sm:$0xff]
  %v180 = vld [vmem:[%s1 + $0x3e8] sm:$0xff]
  %v181 = vld [vmem:[%s1 + $0x3f0] sm:$0xff]
  %v182 = vld [vmem:[%s1 + $0x3f8] sm:$0xff]
  %v183 = vld [vmem:[%s1 + $0x400] sm:$0xff]
  %v184 = vld [vmem:[%s1 + $0x408] sm:$0xff]
  %v185 = vld [vmem:[%s1 + $0x410] sm:$0xff]
  %v186 = vld [vmem:[%s1 + $0x418] sm:$0xff]
  %v187 = vld [vmem:[%s1 + $0x420] sm:$0xff]
  %v188 = vld [vmem:[%s1 + $0x428] sm:$0xff]
  %v189 = vld [vmem:[%s1 + $0x430] sm:$0xff]
  %v190 = vld [vmem:[%s1 + $0x438] sm:$0xff]
  %v191 = vld [vmem:[%s1 + $0x440] sm:$0xff]
  %v192 = vld [vmem:[%s1 + $0x448] sm:$0xff]
  %v193 = vld [vmem:[%s1 + $0x450] sm:$0xff]
  %v194 = vld [vmem:[%s1 + $0x458] sm:$0xff]
  %v195 = vld [vmem:[%s1 + $0x460] sm:$0xff]
  %v196 = vld [vmem:[%s1 + $0x468] sm:$0xff]
  %v197 = vld [vmem:[%s1 + $0x470] sm:$0xff]
  %v198 = vld [vmem:[%s1 + $0x478] sm:$0xff]
  %v199 = vld [vmem:[%s1 + $0x480] sm:$0xff]
  %v200 = vld [vmem:[%s1 + $0x488] sm:$0xff]
  %v201 = vld [vmem:[%s1 + $0x490] sm:$0xff]
  %v202 = vld [vmem:[%s1 + $0x498] sm:$0xff]
  %v203 = vld [vmem:[%s1 + $0x4a0] sm:$0xff]
  %v204 = vld [vmem:[%s1 + $0x4a8] sm:$0xff]
  %v205 = vld [vmem:[%s1 + $0x4b0] sm:$0xff]
  %v206 = vld [vmem:[%s1 + $0x4b8] sm:$0xff]
  %v207 = vld [vmem:[%s1 + $0x4c0] sm:$0xff]
  %v208 = vld [vmem:[%s1 + $0x4c8] sm:$0xff]
  %v209 = vld [vmem:[%s1 + $0x4d0] sm:$0xff]
  %v210 = vld [vmem:[%s1 + $0x4d8] sm:$0xff]
  %v211 = vld [vmem:[%s1 + $0x4e0] sm:$0xff]
  %v212 = vld [vmem:[%s1 + $0x4e8] sm:$0xff]
  %v213 = vld [vmem:[%s1 + $0x4f0] sm:$0xff]
  %v214 = vld [vmem:[%s1 + $0x4f8] sm:$0xff]
  %v215 = vld [vmem:[%s1 + $0x500] sm:$0xff]
  %v216 = vld [vmem:[%s1 + $0x508] sm:$0xff]
  %v217 = vld [vmem:[%s1 + $0x510] sm:$0xff]
  %v218 = vld [vmem:[%s1 + $0x518] sm:$0xff]
  %v219 = vld [vmem:[%s1 + $0x520] sm:$0xff]
  %v220 = vld [vmem:[%s1 + $0x528] sm:$0xff]
  %v221 = vld [vmem:[%s1 + $0x530] sm:$0xff]
  %v222 = vld [vmem:[%s1 + $0x538] sm:$0xff]
  %v223 = vld [vmem:[%s1 + $0x540] sm:$0xff]
  %v224 = vld [vmem:[%s1 + $0x548] sm:$0xff]
  %v225 = vld [vmem:[%s1 + $0x550] sm:$0xff]
  %v226 = vld [vmem:[%s1 + $0x558] sm:$0xff]
  %v227 = vld [vmem:[%s1 + $0x560] sm:$0xff]
  %v228 = vld [vmem:[%s1 + $0x568] sm:$0xff]
  %v229 = vld [vmem:[%s1 + $0x570] sm:$0xff]
  %v230 = vld [vmem:[%s1 + $0x578] sm:$0xff]
  %v231 = vld [vmem:[%s1 + $0x580] sm:$0xff]
  %v232 = vld [vmem:[%s1 + $0x588] sm:$0xff]
  %v233 = vld [vmem:[%s1 + $0x590] sm:$0xff]
  %v234 = vld [vmem:[%s1 + $0x598] sm:$0xff]
  %v235 = vld [vmem:[%s1 + $0x5a0] sm:$0xff]
  %v236 = vld [vmem:[%s1 + $0x5a8] sm:$0xff]
  %v237 = vld [vmem:[%s1 + $0x5b0] sm:$0xff]
  %v238 = vld [vmem:[%s1 + $0x5b8] sm:$0xff]
  %v239 = vld [vmem:[%s1 + $0x5c0] sm:$0xff]
  %v240 = vld [vmem:[%s1 + $0x5c8] sm:$0xff]
  %v241 = vld [vmem:[%s1 + $0x5d0] sm:$0xff]
  %v242 = vld [vmem:[%s1 + $0x5d8] sm:$0xff]
  %v243 = vld [vmem:[%s1 + $0x5e0] sm:$0xff]
  %v244 = vld [vmem:[%s1 + $0x5e8] sm:$0xff]
  %v245 = vld [vmem:[%s1 + $0x5f0] sm:$0xff]
  %v246 = vld [vmem:[%s1 + $0x5f8] sm:$0xff]
  %v247 = vld [vmem:[%s1 + $0x600] sm:$0xff]
  %v248 = vld [vmem:[%s1 + $0x608] sm:$0xff]
  %v249 = vld [vmem:[%s1 + $0x610] sm:$0xff]
  %v250 = vld [vmem:[%s1 + $0x618] sm:$0xff]
  %v251 = vld [vmem:[%s1 + $0x620] sm:$0xff]
  %v252 = vld [vmem:[%s1 + $0x628] sm:$0xff]
  %v253 = vld [vmem:[%s1 + $0x630] sm:$0xff]
  %v254 = vld [vmem:[%s1 + $0x638] sm:$0xff]
  %v255 = vld [vmem:[%s1 + $0x640] sm:$0xff]
  %v256 = vld [vmem:[%s1 + $0x648] sm:$0xff]
  %v257 = vld [vmem:[%s1 + $0x650] sm:$0xff]
  %v258 = vld [vmem:[%s1 + $0x658] sm:$0xff]
  %v259 = vld [vmem:[%s1 + $0x660] sm:$0xff]
  %v260 = vld [vmem:[%s1 + $0x668] sm:$0xff]
  %v261 = vld [vmem:[%s1 + $0x670] sm:$0xff]
  %v262 = vld [vmem:[%s1 + $0x678] sm:$0xff]
  %v263 = vld [vmem:[%s1 + $0x680] sm:$0xff]
  %v264 = vld [vmem:[%s1 + $0x688] sm:$0xff]
  %v265 = vld [vmem:[%s1 + $0x690] sm:$0xff]
  %v266 = vld [vmem:[%s1 + $0x698] sm:$0xff]
  %v267 = vld [vmem:[%s1 + $0x6a0] sm:$0xff]
  %v268 = vld [vmem:[%s1 + $0x6a8] sm:$0xff]
  %v269 = vld [vmem:[%s1 + $0x6b0] sm:$0xff]
  %v270 = vld [vmem:[%s1 + $0x6b8] sm:$0xff]
  %v271 = vld [vmem:[%s1 + $0x6c0] sm:$0xff]
  %v272 = vld [vmem:[%s1 + $0x6c8] sm:$0xff]
  %v273 = vld [vmem:[%s1 + $0x6d0] sm:$0xff]
  %v274 = vld [vmem:[%s1 + $0x6d8] sm:$0xff]
  %v275 = vld [vmem:[%s1 + $0x6e0] sm:$0xff]
  %v276 = vld [vmem:[%s1 + $0x6e8] sm:$0xff]
  %v277 = vld [vmem:[%s1 + $0x6f0] sm:$0xff]
  %v278 = vld [vmem:[%s1 + $0x6f8] sm:$0xff]
  %v279 = vld [vmem:[%s1 + $0x700] sm:$0xff]
  %v280 = vld [vmem:[%s1 + $0x708] sm:$0xff]
  %v281 = vld [vmem:[%s1 + $0x710] sm:$0xff]
  %v282 = vld [vmem:[%s1 + $0x718] sm:$0xff]
  %v283 = vld [vmem:[%s1 + $0x720] sm:$0xff]
  %v284 = vld [vmem:[%s1 + $0x728] sm:$0xff]
  %v285 = vld [vmem:[%s1 + $0x730] sm:$0xff]
  %v286 = vld [vmem:[%s1 + $0x738] sm:$0xff]
  %v287 = vld [vmem:[%s1 + $0x740] sm:$0xff]
  %v288 = vld [vmem:[%s1 + $0x748] sm:$0xff]
  %v289 = vld [vmem:[%s1 + $0x750] sm:$0xff]
  %v290 = vld [vmem:[%s1 + $0x758] sm:$0xff]
  %v291 = vld [vmem:[%s1 + $0x760] sm:$0xff]
  %v292 = vld [vmem:[%s1 + $0x768] sm:$0xff]
  %v293 = vld [vmem:[%s1 + $0x770] sm:$0xff]
  %v294 = vld [vmem:[%s1 + $0x778] sm:$0xff]
  %v295 = vld [vmem:[%s1 + $0x780] sm:$0xff]
  %v296 = vld [vmem:[%s1 + $0x788] sm:$0xff]
  %v297 = vld [vmem:[%s1 + $0x790] sm:$0xff]
  %v298 = vld [vmem:[%s1 + $0x798] sm:$0xff]
  %v299 = vld [vmem:[%s1 + $0x7a0] sm:$0xff]
  %v300 = vld [vmem:[%s1 + $0x7a8] sm:$0xff]
  %v301 = vld [vmem:[%s1 + $0x7b0] sm:$0xff]
  %v302 = vld [vmem:[%s1 + $0x7b8] sm:$0xff]
  %v303 = vld [vmem:[%s1 + $0x7c0] sm:$0xff]
  %v304 = vld [vmem:[%s1 + $0x7c8] sm:$0xff]
  %v305 = vld [vmem:[%s1 + $0x7d0] sm:$0xff]
  %v306 = vld [vmem:[%s1 + $0x7d8] sm:$0xff]
  %v307 = vld [vmem:[%s1 + $0x7e0] sm:$0xff]
  %v308 = vld [vmem:[%s1 + $0x7e8] sm:$0xff]
  %v309 = vld [vmem:[%s1 + $0x7f0] sm:$0xff]
  %v310 = vld [vmem:[%s1 + $0x7f8] sm:$0xff]
  %v319 = vunpack.c.l.b16 %v47
  %v320 = vunpack.c.h.b16 %v47
  %v321 = vunpack.c.l.b16 %v48
  %v322 = vunpack.c.h.b16 %v48
  %v323 = vunpack.c.l.b16 %v49
  %v324 = vunpack.c.h.b16 %v49
  %v325 = vunpack.c.l.b16 %v50
  %v326 = vunpack.c.h.b16 %v50
  %v327 = vunpack.c.l.b16 %v51
  %v328 = vunpack.c.h.b16 %v51
  %v329 = vunpack.c.l.b16 %v52
  %v330 = vunpack.c.h.b16 %v52
  %v331 = vunpack.c.l.b16 %v53
  %v332 = vunpack.c.h.b16 %v53
  %v333 = vunpack.c.l.b16 %v54
  %v334 = vunpack.c.h.b16 %v54
  %v335 = vpack.c.b16 %v327, %v319
  %v336 = vpack.c.b16 %v328, %v320
  %v337 = vpack.c.b16 %v329, %v321
  %v338 = vpack.c.b16 %v330, %v322
  %v339 = vpack.c.b16 %v331, %v323
  %v340 = vpack.c.b16 %v332, %v324
  %v341 = vpack.c.b16 %v333, %v325
  %v342 = vpack.c.b16 %v334, %v326
  %v607 = vunpack.c.l.b16 %v55
  %v608 = vunpack.c.h.b16 %v55
  %v609 = vunpack.c.l.b16 %v56
  %v610 = vunpack.c.h.b16 %v56
  %v611 = vunpack.c.l.b16 %v57
  %v612 = vunpack.c.h.b16 %v57
  %v613 = vunpack.c.l.b16 %v58
  %v614 = vunpack.c.h.b16 %v58
  %v615 = vunpack.c.l.b16 %v59
  %v616 = vunpack.c.h.b16 %v59
  %v617 = vunpack.c.l.b16 %v60
  %v618 = vunpack.c.h.b16 %v60
  %v619 = vunpack.c.l.b16 %v61
  %v620 = vunpack.c.h.b16 %v61
  %v621 = vunpack.c.l.b16 %v62
  %v622 = vunpack.c.h.b16 %v62
  %v623 = vunpack.c.l.b16 %v63
  %v624 = vunpack.c.h.b16 %v63
  %v625 = vunpack.c.l.b16 %v64
  %v626 = vunpack.c.h.b16 %v64
  %v627 = vunpack.c.l.b16 %v65
  %v628 = vunpack.c.h.b16 %v65
  %v629 = vunpack.c.l.b16 %v66
  %v630 = vunpack.c.h.b16 %v66
  %v631 = vunpack.c.l.b16 %v67
  %v632 = vunpack.c.h.b16 %v67
  %v633 = vunpack.c.l.b16 %v68
  %v634 = vunpack.c.h.b16 %v68
  %v635 = vunpack.c.l.b16 %v69
  %v636 = vunpack.c.h.b16 %v69
  %v637 = vunpack.c.l.b16 %v70
  %v638 = vunpack.c.h.b16 %v70
  %v639 = vunpack.c.l.b16 %v71
  %v640 = vunpack.c.h.b16 %v71
  %v641 = vunpack.c.l.b16 %v72
  %v642 = vunpack.c.h.b16 %v72
  %v643 = vunpack.c.l.b16 %v73
  %v644 = vunpack.c.h.b16 %v73
  %v645 = vunpack.c.l.b16 %v74
  %v646 = vunpack.c.h.b16 %v74
  %v647 = vunpack.c.l.b16 %v75
  %v648 = vunpack.c.h.b16 %v75
  %v649 = vunpack.c.l.b16 %v76
  %v650 = vunpack.c.h.b16 %v76
  %v651 = vunpack.c.l.b16 %v77
  %v652 = vunpack.c.h.b16 %v77
  %v653 = vunpack.c.l.b16 %v78
  %v654 = vunpack.c.h.b16 %v78
  %v655 = vunpack.c.l.b16 %v79
  %v656 = vunpack.c.h.b16 %v79
  %v657 = vunpack.c.l.b16 %v80
  %v658 = vunpack.c.h.b16 %v80
  %v659 = vunpack.c.l.b16 %v81
  %v660 = vunpack.c.h.b16 %v81
  %v661 = vunpack.c.l.b16 %v82
  %v662 = vunpack.c.h.b16 %v82
  %v663 = vunpack.c.l.b16 %v83
  %v664 = vunpack.c.h.b16 %v83
  %v665 = vunpack.c.l.b16 %v84
  %v666 = vunpack.c.h.b16 %v84
  %v667 = vunpack.c.l.b16 %v85
  %v668 = vunpack.c.h.b16 %v85
  %v669 = vunpack.c.l.b16 %v86
  %v670 = vunpack.c.h.b16 %v86
  %v671 = vunpack.c.l.b16 %v87
  %v672 = vunpack.c.h.b16 %v87
  %v673 = vunpack.c.l.b16 %v88
  %v674 = vunpack.c.h.b16 %v88
  %v675 = vunpack.c.l.b16 %v89
  %v676 = vunpack.c.h.b16 %v89
  %v677 = vunpack.c.l.b16 %v90
  %v678 = vunpack.c.h.b16 %v90
  %v679 = vunpack.c.l.b16 %v91
  %v680 = vunpack.c.h.b16 %v91
  %v681 = vunpack.c.l.b16 %v92
  %v682 = vunpack.c.h.b16 %v92
  %v683 = vunpack.c.l.b16 %v93
  %v684 = vunpack.c.h.b16 %v93
  %v685 = vunpack.c.l.b16 %v94
  %v686 = vunpack.c.h.b16 %v94
  %v687 = vunpack.c.l.b16 %v95
  %v688 = vunpack.c.h.b16 %v95
  %v689 = vunpack.c.l.b16 %v96
  %v690 = vunpack.c.h.b16 %v96
  %v691 = vunpack.c.l.b16 %v97
  %v692 = vunpack.c.h.b16 %v97
  %v693 = vunpack.c.l.b16 %v98
  %v694 = vunpack.c.h.b16 %v98
  %v695 = vunpack.c.l.b16 %v99
  %v696 = vunpack.c.h.b16 %v99
  %v697 = vunpack.c.l.b16 %v100
  %v698 = vunpack.c.h.b16 %v100
  %v699 = vunpack.c.l.b16 %v101
  %v700 = vunpack.c.h.b16 %v101
  %v701 = vunpack.c.l.b16 %v102
  %v702 = vunpack.c.h.b16 %v102
  %v703 = vunpack.c.l.b16 %v103
  %v704 = vunpack.c.h.b16 %v103
  %v705 = vunpack.c.l.b16 %v104
  %v706 = vunpack.c.h.b16 %v104
  %v707 = vunpack.c.l.b16 %v105
  %v708 = vunpack.c.h.b16 %v105
  %v709 = vunpack.c.l.b16 %v106
  %v710 = vunpack.c.h.b16 %v106
  %v711 = vunpack.c.l.b16 %v107
  %v712 = vunpack.c.h.b16 %v107
  %v713 = vunpack.c.l.b16 %v108
  %v714 = vunpack.c.h.b16 %v108
  %v715 = vunpack.c.l.b16 %v109
  %v716 = vunpack.c.h.b16 %v109
  %v717 = vunpack.c.l.b16 %v110
  %v718 = vunpack.c.h.b16 %v110
  %v719 = vunpack.c.l.b16 %v111
  %v720 = vunpack.c.h.b16 %v111
  %v721 = vunpack.c.l.b16 %v112
  %v722 = vunpack.c.h.b16 %v112
  %v723 = vunpack.c.l.b16 %v113
  %v724 = vunpack.c.h.b16 %v113
  %v725 = vunpack.c.l.b16 %v114
  %v726 = vunpack.c.h.b16 %v114
  %v727 = vunpack.c.l.b16 %v115
  %v728 = vunpack.c.h.b16 %v115
  %v729 = vunpack.c.l.b16 %v116
  %v730 = vunpack.c.h.b16 %v116
  %v731 = vunpack.c.l.b16 %v117
  %v732 = vunpack.c.h.b16 %v117
  %v733 = vunpack.c.l.b16 %v118
  %v734 = vunpack.c.h.b16 %v118
  %v735 = vunpack.c.l.b16 %v119
  %v736 = vunpack.c.h.b16 %v119
  %v737 = vunpack.c.l.b16 %v120
  %v738 = vunpack.c.h.b16 %v120
  %v739 = vunpack.c.l.b16 %v121
  %v740 = vunpack.c.h.b16 %v121
  %v741 = vunpack.c.l.b16 %v122
  %v742 = vunpack.c.h.b16 %v122
  %v743 = vunpack.c.l.b16 %v123
  %v744 = vunpack.c.h.b16 %v123
  %v745 = vunpack.c.l.b16 %v124
  %v746 = vunpack.c.h.b16 %v124
  %v747 = vunpack.c.l.b16 %v125
  %v748 = vunpack.c.h.b16 %v125
  %v749 = vunpack.c.l.b16 %v126
  %v750 = vunpack.c.h.b16 %v126
  %v751 = vunpack.c.l.b16 %v127
  %v752 = vunpack.c.h.b16 %v127
  %v753 = vunpack.c.l.b16 %v128
  %v754 = vunpack.c.h.b16 %v128
  %v755 = vunpack.c.l.b16 %v129
  %v756 = vunpack.c.h.b16 %v129
  %v757 = vunpack.c.l.b16 %v130
  %v758 = vunpack.c.h.b16 %v130
  %v759 = vunpack.c.l.b16 %v131
  %v760 = vunpack.c.h.b16 %v131
  %v761 = vunpack.c.l.b16 %v132
  %v762 = vunpack.c.h.b16 %v132
  %v763 = vunpack.c.l.b16 %v133
  %v764 = vunpack.c.h.b16 %v133
  %v765 = vunpack.c.l.b16 %v134
  %v766 = vunpack.c.h.b16 %v134
  %v767 = vunpack.c.l.b16 %v135
  %v768 = vunpack.c.h.b16 %v135
  %v769 = vunpack.c.l.b16 %v136
  %v770 = vunpack.c.h.b16 %v136
  %v771 = vunpack.c.l.b16 %v137
  %v772 = vunpack.c.h.b16 %v137
  %v773 = vunpack.c.l.b16 %v138
  %v774 = vunpack.c.h.b16 %v138
  %v775 = vunpack.c.l.b16 %v139
  %v776 = vunpack.c.h.b16 %v139
  %v777 = vunpack.c.l.b16 %v140
  %v778 = vunpack.c.h.b16 %v140
  %v779 = vunpack.c.l.b16 %v141
  %v780 = vunpack.c.h.b16 %v141
  %v781 = vunpack.c.l.b16 %v142
  %v782 = vunpack.c.h.b16 %v142
  %v783 = vunpack.c.l.b16 %v143
  %v784 = vunpack.c.h.b16 %v143
  %v785 = vunpack.c.l.b16 %v144
  %v786 = vunpack.c.h.b16 %v144
  %v787 = vunpack.c.l.b16 %v145
  %v788 = vunpack.c.h.b16 %v145
  %v789 = vunpack.c.l.b16 %v146
  %v790 = vunpack.c.h.b16 %v146
  %v791 = vunpack.c.l.b16 %v147
  %v792 = vunpack.c.h.b16 %v147
  %v793 = vunpack.c.l.b16 %v148
  %v794 = vunpack.c.h.b16 %v148
  %v795 = vunpack.c.l.b16 %v149
  %v796 = vunpack.c.h.b16 %v149
  %v797 = vunpack.c.l.b16 %v150
  %v798 = vunpack.c.h.b16 %v150
  %v799 = vunpack.c.l.b16 %v151
  %v800 = vunpack.c.h.b16 %v151
  %v801 = vunpack.c.l.b16 %v152
  %v802 = vunpack.c.h.b16 %v152
  %v803 = vunpack.c.l.b16 %v153
  %v804 = vunpack.c.h.b16 %v153
  %v805 = vunpack.c.l.b16 %v154
  %v806 = vunpack.c.h.b16 %v154
  %v807 = vunpack.c.l.b16 %v155
  %v808 = vunpack.c.h.b16 %v155
  %v809 = vunpack.c.l.b16 %v156
  %v810 = vunpack.c.h.b16 %v156
  %v811 = vunpack.c.l.b16 %v157
  %v812 = vunpack.c.h.b16 %v157
  %v813 = vunpack.c.l.b16 %v158
  %v814 = vunpack.c.h.b16 %v158
  %v815 = vunpack.c.l.b16 %v159
  %v816 = vunpack.c.h.b16 %v159
  %v817 = vunpack.c.l.b16 %v160
  %v818 = vunpack.c.h.b16 %v160
  %v819 = vunpack.c.l.b16 %v161
  %v820 = vunpack.c.h.b16 %v161
  %v821 = vunpack.c.l.b16 %v162
  %v822 = vunpack.c.h.b16 %v162
  %v823 = vunpack.c.l.b16 %v163
  %v824 = vunpack.c.h.b16 %v163
  %v825 = vunpack.c.l.b16 %v164
  %v826 = vunpack.c.h.b16 %v164
  %v827 = vunpack.c.l.b16 %v165
  %v828 = vunpack.c.h.b16 %v165
  %v829 = vunpack.c.l.b16 %v166
  %v830 = vunpack.c.h.b16 %v166
  %v831 = vunpack.c.l.b16 %v167
  %v832 = vunpack.c.h.b16 %v167
  %v833 = vunpack.c.l.b16 %v168
  %v834 = vunpack.c.h.b16 %v168
  %v835 = vunpack.c.l.b16 %v169
  %v836 = vunpack.c.h.b16 %v169
  %v837 = vunpack.c.l.b16 %v170
  %v838 = vunpack.c.h.b16 %v170
  %v839 = vunpack.c.l.b16 %v171
  %v840 = vunpack.c.h.b16 %v171
  %v841 = vunpack.c.l.b16 %v172
  %v842 = vunpack.c.h.b16 %v172
  %v843 = vunpack.c.l.b16 %v173
  %v844 = vunpack.c.h.b16 %v173
  %v845 = vunpack.c.l.b16 %v174
  %v846 = vunpack.c.h.b16 %v174
  %v847 = vunpack.c.l.b16 %v175
  %v848 = vunpack.c.h.b16 %v175
  %v849 = vunpack.c.l.b16 %v176
  %v850 = vunpack.c.h.b16 %v176
  %v851 = vunpack.c.l.b16 %v177
  %v852 = vunpack.c.h.b16 %v177
  %v853 = vunpack.c.l.b16 %v178
  %v854 = vunpack.c.h.b16 %v178
  %v855 = vunpack.c.l.b16 %v179
  %v856 = vunpack.c.h.b16 %v179
  %v857 = vunpack.c.l.b16 %v180
  %v858 = vunpack.c.h.b16 %v180
  %v859 = vunpack.c.l.b16 %v181
  %v860 = vunpack.c.h.b16 %v181
  %v861 = vunpack.c.l.b16 %v182
  %v862 = vunpack.c.h.b16 %v182
  %v863 = vunpack.c.l.b16 %v183
  %v864 = vunpack.c.h.b16 %v183
  %v865 = vunpack.c.l.b16 %v184
  %v866 = vunpack.c.h.b16 %v184
  %v867 = vunpack.c.l.b16 %v185
  %v868 = vunpack.c.h.b16 %v185
  %v869 = vunpack.c.l.b16 %v186
  %v870 = vunpack.c.h.b16 %v186
  %v871 = vunpack.c.l.b16 %v187
  %v872 = vunpack.c.h.b16 %v187
  %v873 = vunpack.c.l.b16 %v188
  %v874 = vunpack.c.h.b16 %v188
  %v875 = vunpack.c.l.b16 %v189
  %v876 = vunpack.c.h.b16 %v189
  %v877 = vunpack.c.l.b16 %v190
  %v878 = vunpack.c.h.b16 %v190
  %v879 = vunpack.c.l.b16 %v191
  %v880 = vunpack.c.h.b16 %v191
  %v881 = vunpack.c.l.b16 %v192
  %v882 = vunpack.c.h.b16 %v192
  %v883 = vunpack.c.l.b16 %v193
  %v884 = vunpack.c.h.b16 %v193
  %v885 = vunpack.c.l.b16 %v194
  %v886 = vunpack.c.h.b16 %v194
  %v887 = vunpack.c.l.b16 %v195
  %v888 = vunpack.c.h.b16 %v195
  %v889 = vunpack.c.l.b16 %v196
  %v890 = vunpack.c.h.b16 %v196
  %v891 = vunpack.c.l.b16 %v197
  %v892 = vunpack.c.h.b16 %v197
  %v893 = vunpack.c.l.b16 %v198
  %v894 = vunpack.c.h.b16 %v198
  %v895 = vunpack.c.l.b16 %v199
  %v896 = vunpack.c.h.b16 %v199
  %v897 = vunpack.c.l.b16 %v200
  %v898 = vunpack.c.h.b16 %v200
  %v899 = vunpack.c.l.b16 %v201
  %v900 = vunpack.c.h.b16 %v201
  %v901 = vunpack.c.l.b16 %v202
  %v902 = vunpack.c.h.b16 %v202
  %v903 = vunpack.c.l.b16 %v203
  %v904 = vunpack.c.h.b16 %v203
  %v905 = vunpack.c.l.b16 %v204
  %v906 = vunpack.c.h.b16 %v204
  %v907 = vunpack.c.l.b16 %v205
  %v908 = vunpack.c.h.b16 %v205
  %v909 = vunpack.c.l.b16 %v206
  %v910 = vunpack.c.h.b16 %v206
  %v911 = vunpack.c.l.b16 %v207
  %v912 = vunpack.c.h.b16 %v207
  %v913 = vunpack.c.l.b16 %v208
  %v914 = vunpack.c.h.b16 %v208
  %v915 = vunpack.c.l.b16 %v209
  %v916 = vunpack.c.h.b16 %v209
  %v917 = vunpack.c.l.b16 %v210
  %v918 = vunpack.c.h.b16 %v210
  %v919 = vunpack.c.l.b16 %v211
  %v920 = vunpack.c.h.b16 %v211
  %v921 = vunpack.c.l.b16 %v212
  %v922 = vunpack.c.h.b16 %v212
  %v923 = vunpack.c.l.b16 %v213
  %v924 = vunpack.c.h.b16 %v213
  %v925 = vunpack.c.l.b16 %v214
  %v926 = vunpack.c.h.b16 %v214
  %v927 = vunpack.c.l.b16 %v215
  %v928 = vunpack.c.h.b16 %v215
  %v929 = vunpack.c.l.b16 %v216
  %v930 = vunpack.c.h.b16 %v216
  %v931 = vunpack.c.l.b16 %v217
  %v932 = vunpack.c.h.b16 %v217
  %v933 = vunpack.c.l.b16 %v218
  %v934 = vunpack.c.h.b16 %v218
  %v935 = vunpack.c.l.b16 %v219
  %v936 = vunpack.c.h.b16 %v219
  %v937 = vunpack.c.l.b16 %v220
  %v938 = vunpack.c.h.b16 %v220
  %v939 = vunpack.c.l.b16 %v221
  %v940 = vunpack.c.h.b16 %v221
  %v941 = vunpack.c.l.b16 %v222
  %v942 = vunpack.c.h.b16 %v222
  %v943 = vunpack.c.l.b16 %v223
  %v944 = vunpack.c.h.b16 %v223
  %v945 = vunpack.c.l.b16 %v224
  %v946 = vunpack.c.h.b16 %v224
  %v947 = vunpack.c.l.b16 %v225
  %v948 = vunpack.c.h.b16 %v225
  %v949 = vunpack.c.l.b16 %v226
  %v950 = vunpack.c.h.b16 %v226
  %v951 = vunpack.c.l.b16 %v227
  %v952 = vunpack.c.h.b16 %v227
  %v953 = vunpack.c.l.b16 %v228
  %v954 = vunpack.c.h.b16 %v228
  %v955 = vunpack.c.l.b16 %v229
  %v956 = vunpack.c.h.b16 %v229
  %v957 = vunpack.c.l.b16 %v230
  %v958 = vunpack.c.h.b16 %v230
  %v959 = vunpack.c.l.b16 %v231
  %v960 = vunpack.c.h.b16 %v231
  %v961 = vunpack.c.l.b16 %v232
  %v962 = vunpack.c.h.b16 %v232
  %v963 = vunpack.c.l.b16 %v233
  %v964 = vunpack.c.h.b16 %v233
  %v965 = vunpack.c.l.b16 %v234
  %v966 = vunpack.c.h.b16 %v234
  %v967 = vunpack.c.l.b16 %v235
  %v968 = vunpack.c.h.b16 %v235
  %v969 = vunpack.c.l.b16 %v236
  %v970 = vunpack.c.h.b16 %v236
  %v971 = vunpack.c.l.b16 %v237
  %v972 = vunpack.c.h.b16 %v237
  %v973 = vunpack.c.l.b16 %v238
  %v974 = vunpack.c.h.b16 %v238
  %v975 = vunpack.c.l.b16 %v239
  %v976 = vunpack.c.h.b16 %v239
  %v977 = vunpack.c.l.b16 %v240
  %v978 = vunpack.c.h.b16 %v240
  %v979 = vunpack.c.l.b16 %v241
  %v980 = vunpack.c.h.b16 %v241
  %v981 = vunpack.c.l.b16 %v242
  %v982 = vunpack.c.h.b16 %v242
  %v983 = vunpack.c.l.b16 %v243
  %v984 = vunpack.c.h.b16 %v243
  %v985 = vunpack.c.l.b16 %v244
  %v986 = vunpack.c.h.b16 %v244
  %v987 = vunpack.c.l.b16 %v245
  %v988 = vunpack.c.h.b16 %v245
  %v989 = vunpack.c.l.b16 %v246
  %v990 = vunpack.c.h.b16 %v246
  %v991 = vunpack.c.l.b16 %v247
  %v992 = vunpack.c.h.b16 %v247
  %v993 = vunpack.c.l.b16 %v248
  %v994 = vunpack.c.h.b16 %v248
  %v995 = vunpack.c.l.b16 %v249
  %v996 = vunpack.c.h.b16 %v249
  %v997 = vunpack.c.l.b16 %v250
  %v998 = vunpack.c.h.b16 %v250
  %v999 = vunpack.c.l.b16 %v251
  %v1000 = vunpack.c.h.b16 %v251
  %v1001 = vunpack.c.l.b16 %v252
  %v1002 = vunpack.c.h.b16 %v252
  %v1003 = vunpack.c.l.b16 %v253
  %v1004 = vunpack.c.h.b16 %v253
  %v1005 = vunpack.c.l.b16 %v254
  %v1006 = vunpack.c.h.b16 %v254
  %v1007 = vunpack.c.l.b16 %v255
  %v1008 = vunpack.c.h.b16 %v255
  %v1009 = vunpack.c.l.b16 %v256
  %v1010 = vunpack.c.h.b16 %v256
  %v1011 = vunpack.c.l.b16 %v257
  %v1012 = vunpack.c.h.b16 %v257
  %v1013 = vunpack.c.l.b16 %v258
  %v1014 = vunpack.c.h.b16 %v258
  %v1015 = vunpack.c.l.b16 %v259
  %v1016 = vunpack.c.h.b16 %v259
  %v1017 = vunpack.c.l.b16 %v260
  %v1018 = vunpack.c.h.b16 %v260
  %v1019 = vunpack.c.l.b16 %v261
  %v1020 = vunpack.c.h.b16 %v261
  %v1021 = vunpack.c.l.b16 %v262
  %v1022 = vunpack.c.h.b16 %v262
  %v1023 = vunpack.c.l.b16 %v263
  %v1024 = vunpack.c.h.b16 %v263
  %v1025 = vunpack.c.l.b16 %v264
  %v1026 = vunpack.c.h.b16 %v264
  %v1027 = vunpack.c.l.b16 %v265
  %v1028 = vunpack.c.h.b16 %v265
  %v1029 = vunpack.c.l.b16 %v266
  %v1030 = vunpack.c.h.b16 %v266
  %v1031 = vunpack.c.l.b16 %v267
  %v1032 = vunpack.c.h.b16 %v267
  %v1033 = vunpack.c.l.b16 %v268
  %v1034 = vunpack.c.h.b16 %v268
  %v1035 = vunpack.c.l.b16 %v269
  %v1036 = vunpack.c.h.b16 %v269
  %v1037 = vunpack.c.l.b16 %v270
  %v1038 = vunpack.c.h.b16 %v270
  %v1039 = vunpack.c.l.b16 %v271
  %v1040 = vunpack.c.h.b16 %v271
  %v1041 = vunpack.c.l.b16 %v272
  %v1042 = vunpack.c.h.b16 %v272
  %v1043 = vunpack.c.l.b16 %v273
  %v1044 = vunpack.c.h.b16 %v273
  %v1045 = vunpack.c.l.b16 %v274
  %v1046 = vunpack.c.h.b16 %v274
  %v1047 = vunpack.c.l.b16 %v275
  %v1048 = vunpack.c.h.b16 %v275
  %v1049 = vunpack.c.l.b16 %v276
  %v1050 = vunpack.c.h.b16 %v276
  %v1051 = vunpack.c.l.b16 %v277
  %v1052 = vunpack.c.h.b16 %v277
  %v1053 = vunpack.c.l.b16 %v278
  %v1054 = vunpack.c.h.b16 %v278
  %v1055 = vunpack.c.l.b16 %v279
  %v1056 = vunpack.c.h.b16 %v279
  %v1057 = vunpack.c.l.b16 %v280
  %v1058 = vunpack.c.h.b16 %v280
  %v1059 = vunpack.c.l.b16 %v281
  %v1060 = vunpack.c.h.b16 %v281
  %v1061 = vunpack.c.l.b16 %v282
  %v1062 = vunpack.c.h.b16 %v282
  %v1063 = vunpack.c.l.b16 %v283
  %v1064 = vunpack.c.h.b16 %v283
  %v1065 = vunpack.c.l.b16 %v284
  %v1066 = vunpack.c.h.b16 %v284
  %v1067 = vunpack.c.l.b16 %v285
  %v1068 = vunpack.c.h.b16 %v285
  %v1069 = vunpack.c.l.b16 %v286
  %v1070 = vunpack.c.h.b16 %v286
  %v1071 = vunpack.c.l.b16 %v287
  %v1072 = vunpack.c.h.b16 %v287
  %v1073 = vunpack.c.l.b16 %v288
  %v1074 = vunpack.c.h.b16 %v288
  %v1075 = vunpack.c.l.b16 %v289
  %v1076 = vunpack.c.h.b16 %v289
  %v1077 = vunpack.c.l.b16 %v290
  %v1078 = vunpack.c.h.b16 %v290
  %v1079 = vunpack.c.l.b16 %v291
  %v1080 = vunpack.c.h.b16 %v291
  %v1081 = vunpack.c.l.b16 %v292
  %v1082 = vunpack.c.h.b16 %v292
  %v1083 = vunpack.c.l.b16 %v293
  %v1084 = vunpack.c.h.b16 %v293
  %v1085 = vunpack.c.l.b16 %v294
  %v1086 = vunpack.c.h.b16 %v294
  %v1087 = vunpack.c.l.b16 %v295
  %v1088 = vunpack.c.h.b16 %v295
  %v1089 = vunpack.c.l.b16 %v296
  %v1090 = vunpack.c.h.b16 %v296
  %v1091 = vunpack.c.l.b16 %v297
  %v1092 = vunpack.c.h.b16 %v297
  %v1093 = vunpack.c.l.b16 %v298
  %v1094 = vunpack.c.h.b16 %v298
  %v1095 = vunpack.c.l.b16 %v299
  %v1096 = vunpack.c.h.b16 %v299
  %v1097 = vunpack.c.l.b16 %v300
  %v1098 = vunpack.c.h.b16 %v300
  %v1099 = vunpack.c.l.b16 %v301
  %v1100 = vunpack.c.h.b16 %v301
  %v1101 = vunpack.c.l.b16 %v302
  %v1102 = vunpack.c.h.b16 %v302
  %v1103 = vunpack.c.l.b16 %v303
  %v1104 = vunpack.c.h.b16 %v303
  %v1105 = vunpack.c.l.b16 %v304
  %v1106 = vunpack.c.h.b16 %v304
  %v1107 = vunpack.c.l.b16 %v305
  %v1108 = vunpack.c.h.b16 %v305
  %v1109 = vunpack.c.l.b16 %v306
  %v1110 = vunpack.c.h.b16 %v306
  %v1111 = vunpack.c.l.b16 %v307
  %v1112 = vunpack.c.h.b16 %v307
  %v1113 = vunpack.c.l.b16 %v308
  %v1114 = vunpack.c.h.b16 %v308
  %v1115 = vunpack.c.l.b16 %v309
  %v1116 = vunpack.c.h.b16 %v309
  %v1117 = vunpack.c.l.b16 %v310
  %v1118 = vunpack.c.h.b16 %v310
  %v1119 = vpack.c.b16 %v611, %v607
  %v1120 = vpack.c.b16 %v612, %v608
  %v1121 = vpack.c.b16 %v613, %v609
  %v1122 = vpack.c.b16 %v614, %v610
  %v1123 = vpack.c.b16 %v619, %v615
  %v1124 = vpack.c.b16 %v620, %v616
  %v1125 = vpack.c.b16 %v621, %v617
  %v1126 = vpack.c.b16 %v622, %v618
  %v1127 = vpack.c.b16 %v627, %v623
  %v1128 = vpack.c.b16 %v628, %v624
  %v1129 = vpack.c.b16 %v629, %v625
  %v1130 = vpack.c.b16 %v630, %v626
  %v1131 = vpack.c.b16 %v635, %v631
  %v1132 = vpack.c.b16 %v636, %v632
  %v1133 = vpack.c.b16 %v637, %v633
  %v1134 = vpack.c.b16 %v638, %v634
  %v1135 = vpack.c.b16 %v643, %v639
  %v1136 = vpack.c.b16 %v644, %v640
  %v1137 = vpack.c.b16 %v645, %v641
  %v1138 = vpack.c.b16 %v646, %v642
  %v1139 = vpack.c.b16 %v651, %v647
  %v1140 = vpack.c.b16 %v652, %v648
  %v1141 = vpack.c.b16 %v653, %v649
  %v1142 = vpack.c.b16 %v654, %v650
  %v1143 = vpack.c.b16 %v659, %v655
  %v1144 = vpack.c.b16 %v660, %v656
  %v1145 = vpack.c.b16 %v661, %v657
  %v1146 = vpack.c.b16 %v662, %v658
  %v1147 = vpack.c.b16 %v667, %v663
  %v1148 = vpack.c.b16 %v668, %v664
  %v1149 = vpack.c.b16 %v669, %v665
  %v1150 = vpack.c.b16 %v670, %v666
  %v1151 = vpack.c.b16 %v675, %v671
  %v1152 = vpack.c.b16 %v676, %v672
  %v1153 = vpack.c.b16 %v677, %v673
  %v1154 = vpack.c.b16 %v678, %v674
  %v1155 = vpack.c.b16 %v683, %v679
  %v1156 = vpack.c.b16 %v684, %v680
  %v1157 = vpack.c.b16 %v685, %v681
  %v1158 = vpack.c.b16 %v686, %v682
  %v1159 = vpack.c.b16 %v691, %v687
  %v1160 = vpack.c.b16 %v692, %v688
  %v1161 = vpack.c.b16 %v693, %v689
  %v1162 = vpack.c.b16 %v694, %v690
  %v1163 = vpack.c.b16 %v699, %v695
  %v1164 = vpack.c.b16 %v700, %v696
  %v1165 = vpack.c.b16 %v701, %v697
  %v1166 = vpack.c.b16 %v702, %v698
  %v1167 = vpack.c.b16 %v707, %v703
  %v1168 = vpack.c.b16 %v708, %v704
  %v1169 = vpack.c.b16 %v709, %v705
  %v1170 = vpack.c.b16 %v710, %v706
  %v1171 = vpack.c.b16 %v715, %v711
  %v1172 = vpack.c.b16 %v716, %v712
  %v1173 = vpack.c.b16 %v717, %v713
  %v1174 = vpack.c.b16 %v718, %v714
  %v1175 = vpack.c.b16 %v723, %v719
  %v1176 = vpack.c.b16 %v724, %v720
  %v1177 = vpack.c.b16 %v725, %v721
  %v1178 = vpack.c.b16 %v726, %v722
  %v1179 = vpack.c.b16 %v731, %v727
  %v1180 = vpack.c.b16 %v732, %v728
  %v1181 = vpack.c.b16 %v733, %v729
  %v1182 = vpack.c.b16 %v734, %v730
  %v1183 = vpack.c.b16 %v739, %v735
  %v1184 = vpack.c.b16 %v740, %v736
  %v1185 = vpack.c.b16 %v741, %v737
  %v1186 = vpack.c.b16 %v742, %v738
  %v1187 = vpack.c.b16 %v747, %v743
  %v1188 = vpack.c.b16 %v748, %v744
  %v1189 = vpack.c.b16 %v749, %v745
  %v1190 = vpack.c.b16 %v750, %v746
  %v1191 = vpack.c.b16 %v755, %v751
  %v1192 = vpack.c.b16 %v756, %v752
  %v1193 = vpack.c.b16 %v757, %v753
  %v1194 = vpack.c.b16 %v758, %v754
  %v1195 = vpack.c.b16 %v763, %v759
  %v1196 = vpack.c.b16 %v764, %v760
  %v1197 = vpack.c.b16 %v765, %v761
  %v1198 = vpack.c.b16 %v766, %v762
  %v1199 = vpack.c.b16 %v771, %v767
  %v1200 = vpack.c.b16 %v772, %v768
  %v1201 = vpack.c.b16 %v773, %v769
  %v1202 = vpack.c.b16 %v774, %v770
  %v1203 = vpack.c.b16 %v779, %v775
  %v1204 = vpack.c.b16 %v780, %v776
  %v1205 = vpack.c.b16 %v781, %v777
  %v1206 = vpack.c.b16 %v782, %v778
  %v1207 = vpack.c.b16 %v787, %v783
  %v1208 = vpack.c.b16 %v788, %v784
  %v1209 = vpack.c.b16 %v789, %v785
  %v1210 = vpack.c.b16 %v790, %v786
  %v1211 = vpack.c.b16 %v795, %v791
  %v1212 = vpack.c.b16 %v796, %v792
  %v1213 = vpack.c.b16 %v797, %v793
  %v1214 = vpack.c.b16 %v798, %v794
  %v1215 = vpack.c.b16 %v803, %v799
  %v1216 = vpack.c.b16 %v804, %v800
  %v1217 = vpack.c.b16 %v805, %v801
  %v1218 = vpack.c.b16 %v806, %v802
  %v1219 = vpack.c.b16 %v811, %v807
  %v1220 = vpack.c.b16 %v812, %v808
  %v1221 = vpack.c.b16 %v813, %v809
  %v1222 = vpack.c.b16 %v814, %v810
  %v1223 = vpack.c.b16 %v819, %v815
  %v1224 = vpack.c.b16 %v820, %v816
  %v1225 = vpack.c.b16 %v821, %v817
  %v1226 = vpack.c.b16 %v822, %v818
  %v1227 = vpack.c.b16 %v827, %v823
  %v1228 = vpack.c.b16 %v828, %v824
  %v1229 = vpack.c.b16 %v829, %v825
  %v1230 = vpack.c.b16 %v830, %v826
  %v1231 = vpack.c.b16 %v835, %v831
  %v1232 = vpack.c.b16 %v836, %v832
  %v1233 = vpack.c.b16 %v837, %v833
  %v1234 = vpack.c.b16 %v838, %v834
  %v1235 = vpack.c.b16 %v843, %v839
  %v1236 = vpack.c.b16 %v844, %v840
  %v1237 = vpack.c.b16 %v845, %v841
  %v1238 = vpack.c.b16 %v846, %v842
  %v1239 = vpack.c.b16 %v851, %v847
  %v1240 = vpack.c.b16 %v852, %v848
  %v1241 = vpack.c.b16 %v853, %v849
  %v1242 = vpack.c.b16 %v854, %v850
  %v1243 = vpack.c.b16 %v859, %v855
  %v1244 = vpack.c.b16 %v860, %v856
  %v1245 = vpack.c.b16 %v861, %v857
  %v1246 = vpack.c.b16 %v862, %v858
  %v1247 = vpack.c.b16 %v867, %v863
  %v1248 = vpack.c.b16 %v868, %v864
  %v1249 = vpack.c.b16 %v869, %v865
  %v1250 = vpack.c.b16 %v870, %v866
  %v1251 = vpack.c.b16 %v875, %v871
  %v1252 = vpack.c.b16 %v876, %v872
  %v1253 = vpack.c.b16 %v877, %v873
  %v1254 = vpack.c.b16 %v878, %v874
  %v1255 = vpack.c.b16 %v883, %v879
  %v1256 = vpack.c.b16 %v884, %v880
  %v1257 = vpack.c.b16 %v885, %v881
  %v1258 = vpack.c.b16 %v886, %v882
  %v1259 = vpack.c.b16 %v891, %v887
  %v1260 = vpack.c.b16 %v892, %v888
  %v1261 = vpack.c.b16 %v893, %v889
  %v1262 = vpack.c.b16 %v894, %v890
  %v1263 = vpack.c.b16 %v899, %v895
  %v1264 = vpack.c.b16 %v900, %v896
  %v1265 = vpack.c.b16 %v901, %v897
  %v1266 = vpack.c.b16 %v902, %v898
  %v1267 = vpack.c.b16 %v907, %v903
  %v1268 = vpack.c.b16 %v908, %v904
  %v1269 = vpack.c.b16 %v909, %v905
  %v1270 = vpack.c.b16 %v910, %v906
  %v1271 = vpack.c.b16 %v915, %v911
  %v1272 = vpack.c.b16 %v916, %v912
  %v1273 = vpack.c.b16 %v917, %v913
  %v1274 = vpack.c.b16 %v918, %v914
  %v1275 = vpack.c.b16 %v923, %v919
  %v1276 = vpack.c.b16 %v924, %v920
  %v1277 = vpack.c.b16 %v925, %v921
  %v1278 = vpack.c.b16 %v926, %v922
  %v1279 = vpack.c.b16 %v931, %v927
  %v1280 = vpack.c.b16 %v932, %v928
  %v1281 = vpack.c.b16 %v933, %v929
  %v1282 = vpack.c.b16 %v934, %v930
  %v1283 = vpack.c.b16 %v939, %v935
  %v1284 = vpack.c.b16 %v940, %v936
  %v1285 = vpack.c.b16 %v941, %v937
  %v1286 = vpack.c.b16 %v942, %v938
  %v1287 = vpack.c.b16 %v947, %v943
  %v1288 = vpack.c.b16 %v948, %v944
  %v1289 = vpack.c.b16 %v949, %v945
  %v1290 = vpack.c.b16 %v950, %v946
  %v1291 = vpack.c.b16 %v955, %v951
  %v1292 = vpack.c.b16 %v956, %v952
  %v1293 = vpack.c.b16 %v957, %v953
  %v1294 = vpack.c.b16 %v958, %v954
  %v1295 = vpack.c.b16 %v963, %v959
  %v1296 = vpack.c.b16 %v964, %v960
  %v1297 = vpack.c.b16 %v965, %v961
  %v1298 = vpack.c.b16 %v966, %v962
  %v1299 = vpack.c.b16 %v971, %v967
  %v1300 = vpack.c.b16 %v972, %v968
  %v1301 = vpack.c.b16 %v973, %v969
  %v1302 = vpack.c.b16 %v974, %v970
  %v1303 = vpack.c.b16 %v979, %v975
  %v1304 = vpack.c.b16 %v980, %v976
  %v1305 = vpack.c.b16 %v981, %v977
  %v1306 = vpack.c.b16 %v982, %v978
  %v1307 = vpack.c.b16 %v987, %v983
  %v1308 = vpack.c.b16 %v988, %v984
  %v1309 = vpack.c.b16 %v989, %v985
  %v1310 = vpack.c.b16 %v990, %v986
  %v1311 = vpack.c.b16 %v995, %v991
  %v1312 = vpack.c.b16 %v996, %v992
  %v1313 = vpack.c.b16 %v997, %v993
  %v1314 = vpack.c.b16 %v998, %v994
  %v1315 = vpack.c.b16 %v1003, %v999
  %v1316 = vpack.c.b16 %v1004, %v1000
  %v1317 = vpack.c.b16 %v1005, %v1001
  %v1318 = vpack.c.b16 %v1006, %v1002
  %v1319 = vpack.c.b16 %v1011, %v1007
  %v1320 = vpack.c.b16 %v1012, %v1008
  %v1321 = vpack.c.b16 %v1013, %v1009
  %v1322 = vpack.c.b16 %v1014, %v1010
  %v1323 = vpack.c.b16 %v1019, %v1015
  %v1324 = vpack.c.b16 %v1020, %v1016
  %v1325 = vpack.c.b16 %v1021, %v1017
  %v1326 = vpack.c.b16 %v1022, %v1018
  %v1327 = vpack.c.b16 %v1027, %v1023
  %v1328 = vpack.c.b16 %v1028, %v1024
  %v1329 = vpack.c.b16 %v1029, %v1025
  %v1330 = vpack.c.b16 %v1030, %v1026
  %v1331 = vpack.c.b16 %v1035, %v1031
  %v1332 = vpack.c.b16 %v1036, %v1032
  %v1333 = vpack.c.b16 %v1037, %v1033
  %v1334 = vpack.c.b16 %v1038, %v1034
  %v1335 = vpack.c.b16 %v1043, %v1039
  %v1336 = vpack.c.b16 %v1044, %v1040
  %v1337 = vpack.c.b16 %v1045, %v1041
  %v1338 = vpack.c.b16 %v1046, %v1042
  %v1339 = vpack.c.b16 %v1051, %v1047
  %v1340 = vpack.c.b16 %v1052, %v1048
  %v1341 = vpack.c.b16 %v1053, %v1049
  %v1342 = vpack.c.b16 %v1054, %v1050
  %v1343 = vpack.c.b16 %v1059, %v1055
  %v1344 = vpack.c.b16 %v1060, %v1056
  %v1345 = vpack.c.b16 %v1061, %v1057
  %v1346 = vpack.c.b16 %v1062, %v1058
  %v1347 = vpack.c.b16 %v1067, %v1063
  %v1348 = vpack.c.b16 %v1068, %v1064
  %v1349 = vpack.c.b16 %v1069, %v1065
  %v1350 = vpack.c.b16 %v1070, %v1066
  %v1351 = vpack.c.b16 %v1075, %v1071
  %v1352 = vpack.c.b16 %v1076, %v1072
  %v1353 = vpack.c.b16 %v1077, %v1073
  %v1354 = vpack.c.b16 %v1078, %v1074
  %v1355 = vpack.c.b16 %v1083, %v1079
  %v1356 = vpack.c.b16 %v1084, %v1080
  %v1357 = vpack.c.b16 %v1085, %v1081
  %v1358 = vpack.c.b16 %v1086, %v1082
  %v1359 = vpack.c.b16 %v1091, %v1087
  %v1360 = vpack.c.b16 %v1092, %v1088
  %v1361 = vpack.c.b16 %v1093, %v1089
  %v1362 = vpack.c.b16 %v1094, %v1090
  %v1363 = vpack.c.b16 %v1099, %v1095
  %v1364 = vpack.c.b16 %v1100, %v1096
  %v1365 = vpack.c.b16 %v1101, %v1097
  %v1366 = vpack.c.b16 %v1102, %v1098
  %v1367 = vpack.c.b16 %v1107, %v1103
  %v1368 = vpack.c.b16 %v1108, %v1104
  %v1369 = vpack.c.b16 %v1109, %v1105
  %v1370 = vpack.c.b16 %v1110, %v1106
  %v1371 = vpack.c.b16 %v1115, %v1111
  %v1372 = vpack.c.b16 %v1116, %v1112
  %v1373 = vpack.c.b16 %v1117, %v1113
  %v1374 = vpack.c.b16 %v1118, %v1114
  %1631 = vmatprep.subr.bf16.mxu0 %v1120
  %1632 = vmatpush1.bf16.msra.mxu0 %v1119
  %1633 = vmatprep.subr.bf16.mxu0 %v1124
  %1634 = vmatpush1.bf16.msra.mxu0 %v1123
  %1635 = vmatprep.subr.bf16.mxu0 %v1128
  %1636 = vmatpush1.bf16.msra.mxu0 %v1127
  %1637 = vmatprep.subr.bf16.mxu0 %v1132
  %1638 = vmatpush1.bf16.msra.mxu0 %v1131
  %1639 = vmatprep.subr.bf16.mxu0 %v1136
  %1640 = vmatpush1.bf16.msra.mxu0 %v1135
  %1641 = vmatprep.subr.bf16.mxu0 %v1140
  %1642 = vmatpush1.bf16.msra.mxu0 %v1139
  %1643 = vmatprep.subr.bf16.mxu0 %v1144
  %1644 = vmatpush1.bf16.msra.mxu0 %v1143
  %1645 = vmatprep.subr.bf16.mxu0 %v1148
  %1646 = vmatpush1.bf16.msra.mxu0 %v1147
  %1647 = vmatprep.subr.bf16.mxu0 %v1152
  %1648 = vmatpush1.bf16.msra.mxu0 %v1151
  %1649 = vmatprep.subr.bf16.mxu0 %v1156
  %1650 = vmatpush1.bf16.msra.mxu0 %v1155
  %1651 = vmatprep.subr.bf16.mxu0 %v1160
  %1652 = vmatpush1.bf16.msra.mxu0 %v1159
  %1653 = vmatprep.subr.bf16.mxu0 %v1164
  %1654 = vmatpush1.bf16.msra.mxu0 %v1163
  %1655 = vmatprep.subr.bf16.mxu0 %v1168
  %1656 = vmatpush1.bf16.msra.mxu0 %v1167
  %1657 = vmatprep.subr.bf16.mxu0 %v1172
  %1658 = vmatpush1.bf16.msra.mxu0 %v1171
  %1659 = vmatprep.subr.bf16.mxu0 %v1176
  %1660 = vmatpush1.bf16.msra.mxu0 %v1175
  %1661 = vmatprep.subr.bf16.mxu0 %v1180
  %1662 = vmatpush1.bf16.msra.mxu0 %v1179
  %1663 = vmatprep.mubr.bf16.mxu0 %v336
  %1664 = vmatmul.mubr.bf16.gmra.mrb[0].mxu0 %v335
  %v1665 = vpop.f32.mrb[0].mxu0
  %v1666 = vadd.f32 0.0, %v1665
  %v1667 = vpop.f32.mrb[0].mxu0
  %v1668 = vadd.f32 0.0, %v1667
  %v1669 = vpop.f32.mrb[0].mxu0
  %v1670 = vadd.f32 0.0, %v1669
  %v1671 = vpop.f32.mrb[0].mxu0
  %v1672 = vadd.f32 0.0, %v1671
  %1673 = vdwg.mxu0
  %1674 = vmatprep.subr.bf16.mxu0 %v1184
  %1675 = vmatpush1.bf16.msra.mxu0 %v1183
  %1676 = vmatprep.subr.bf16.mxu0 %v1188
  %1677 = vmatpush1.bf16.msra.mxu0 %v1187
  %1678 = vmatprep.subr.bf16.mxu0 %v1192
  %1679 = vmatpush1.bf16.msra.mxu0 %v1191
  %1680 = vmatprep.subr.bf16.mxu0 %v1196
  %1681 = vmatpush1.bf16.msra.mxu0 %v1195
  %1682 = vmatprep.subr.bf16.mxu0 %v1200
  %1683 = vmatpush1.bf16.msra.mxu0 %v1199
  %1684 = vmatprep.subr.bf16.mxu0 %v1204
  %1685 = vmatpush1.bf16.msra.mxu0 %v1203
  %1686 = vmatprep.subr.bf16.mxu0 %v1208
  %1687 = vmatpush1.bf16.msra.mxu0 %v1207
  %1688 = vmatprep.subr.bf16.mxu0 %v1212
  %1689 = vmatpush1.bf16.msra.mxu0 %v1211
  %1690 = vmatprep.subr.bf16.mxu0 %v1216
  %1691 = vmatpush1.bf16.msra.mxu0 %v1215
  %1692 = vmatprep.subr.bf16.mxu0 %v1220
  %1693 = vmatpush1.bf16.msra.mxu0 %v1219
  %1694 = vmatprep.subr.bf16.mxu0 %v1224
  %1695 = vmatpush1.bf16.msra.mxu0 %v1223
  %1696 = vmatprep.subr.bf16.mxu0 %v1228
  %1697 = vmatpush1.bf16.msra.mxu0 %v1227
  %1698 = vmatprep.subr.bf16.mxu0 %v1232
  %1699 = vmatpush1.bf16.msra.mxu0 %v1231
  %1700 = vmatprep.subr.bf16.mxu0 %v1236
  %1701 = vmatpush1.bf16.msra.mxu0 %v1235
  %1702 = vmatprep.subr.bf16.mxu0 %v1240
  %1703 = vmatpush1.bf16.msra.mxu0 %v1239
  %1704 = vmatprep.subr.bf16.mxu0 %v1244
  %1705 = vmatpush1.bf16.msra.mxu0 %v1243
  %1706 = vmatprep.mubr.bf16.mxu0 %v338
  %1707 = vmatmul.mubr.bf16.gmra.mrb[0].mxu0 %v337
  %v1708 = vpop.f32.mrb[0].mxu0
  %v1709 = vadd.f32 %v1666, %v1708
  %v1710 = vpop.f32.mrb[0].mxu0
  %v1711 = vadd.f32 %v1668, %v1710
  %v1712 = vpop.f32.mrb[0].mxu0
  %v1713 = vadd.f32 %v1670, %v1712
  %v1714 = vpop.f32.mrb[0].mxu0
  %v1715 = vadd.f32 %v1672, %v1714
  %1716 = vdwg.mxu0
  %1717 = vmatprep.subr.bf16.mxu0 %v1248
  %1718 = vmatpush1.bf16.msra.mxu0 %v1247
  %1719 = vmatprep.subr.bf16.mxu0 %v1252
  %1720 = vmatpush1.bf16.msra.mxu0 %v1251
  %1721 = vmatprep.subr.bf16.mxu0 %v1256
  %1722 = vmatpush1.bf16.msra.mxu0 %v1255
  %1723 = vmatprep.subr.bf16.mxu0 %v1260
  %1724 = vmatpush1.bf16.msra.mxu0 %v1259
  %1725 = vmatprep.subr.bf16.mxu0 %v1264
  %1726 = vmatpush1.bf16.msra.mxu0 %v1263
  %1727 = vmatprep.subr.bf16.mxu0 %v1268
  %1728 = vmatpush1.bf16.msra.mxu0 %v1267
  %1729 = vmatprep.subr.bf16.mxu0 %v1272
  %1730 = vmatpush1.bf16.msra.mxu0 %v1271
  %1731 = vmatprep.subr.bf16.mxu0 %v1276
  %1732 = vmatpush1.bf16.msra.mxu0 %v1275
  %1733 = vmatprep.subr.bf16.mxu0 %v1280
  %1734 = vmatpush1.bf16.msra.mxu0 %v1279
  %1735 = vmatprep.subr.bf16.mxu0 %v1284
  %1736 = vmatpush1.bf16.msra.mxu0 %v1283
  %1737 = vmatprep.subr.bf16.mxu0 %v1288
  %1738 = vmatpush1.bf16.msra.mxu0 %v1287
  %1739 = vmatprep.subr.bf16.mxu0 %v1292
  %1740 = vmatpush1.bf16.msra.mxu0 %v1291
  %1741 = vmatprep.subr.bf16.mxu0 %v1296
  %1742 = vmatpush1.bf16.msra.mxu0 %v1295
  %1743 = vmatprep.subr.bf16.mxu0 %v1300
  %1744 = vmatpush1.bf16.msra.mxu0 %v1299
  %1745 = vmatprep.subr.bf16.mxu0 %v1304
  %1746 = vmatpush1.bf16.msra.mxu0 %v1303
  %1747 = vmatprep.subr.bf16.mxu0 %v1308
  %1748 = vmatpush1.bf16.msra.mxu0 %v1307
  %1749 = vmatprep.mubr.bf16.mxu0 %v340
  %1750 = vmatmul.mubr.bf16.gmra.mrb[0].mxu0 %v339
  %v1751 = vpop.f32.mrb[0].mxu0
  %v1752 = vadd.f32 %v1709, %v1751
  %v1753 = vpop.f32.mrb[0].mxu0
  %v1754 = vadd.f32 %v1711, %v1753
  %v1755 = vpop.f32.mrb[0].mxu0
  %v1756 = vadd.f32 %v1713, %v1755
  %v1757 = vpop.f32.mrb[0].mxu0
  %v1758 = vadd.f32 %v1715, %v1757
  %1759 = vdwg.mxu0
  %1760 = vmatprep.subr.bf16.mxu0 %v1312
  %1761 = vmatpush1.bf16.msra.mxu0 %v1311
  %1762 = vmatprep.subr.bf16.mxu0 %v1316
  %1763 = vmatpush1.bf16.msra.mxu0 %v1315
  %1764 = vmatprep.subr.bf16.mxu0 %v1320
  %1765 = vmatpush1.bf16.msra.mxu0 %v1319
  %1766 = vmatprep.subr.bf16.mxu0 %v1324
  %1767 = vmatpush1.bf16.msra.mxu0 %v1323
  %1768 = vmatprep.subr.bf16.mxu0 %v1328
  %1769 = vmatpush1.bf16.msra.mxu0 %v1327
  %1770 = vmatprep.subr.bf16.mxu0 %v1332
  %1771 = vmatpush1.bf16.msra.mxu0 %v1331
  %1772 = vmatprep.subr.bf16.mxu0 %v1336
  %1773 = vmatpush1.bf16.msra.mxu0 %v1335
  %1774 = vmatprep.subr.bf16.mxu0 %v1340
  %1775 = vmatpush1.bf16.msra.mxu0 %v1339
  %1776 = vmatprep.subr.bf16.mxu0 %v1344
  %1777 = vmatpush1.bf16.msra.mxu0 %v1343
  %1778 = vmatprep.subr.bf16.mxu0 %v1348
  %1779 = vmatpush1.bf16.msra.mxu0 %v1347
  %1780 = vmatprep.subr.bf16.mxu0 %v1352
  %1781 = vmatpush1.bf16.msra.mxu0 %v1351
  %1782 = vmatprep.subr.bf16.mxu0 %v1356
  %1783 = vmatpush1.bf16.msra.mxu0 %v1355
  %1784 = vmatprep.subr.bf16.mxu0 %v1360
  %1785 = vmatpush1.bf16.msra.mxu0 %v1359
  %1786 = vmatprep.subr.bf16.mxu0 %v1364
  %1787 = vmatpush1.bf16.msra.mxu0 %v1363
  %1788 = vmatprep.subr.bf16.mxu0 %v1368
  %1789 = vmatpush1.bf16.msra.mxu0 %v1367
  %1790 = vmatprep.subr.bf16.mxu0 %v1372
  %1791 = vmatpush1.bf16.msra.mxu0 %v1371
  %1792 = vmatprep.mubr.bf16.mxu0 %v342
  %1793 = vmatmul.mubr.bf16.gmra.mrb[0].mxu0 %v341
  %v1794 = vpop.f32.mrb[0].mxu0
  %v1795 = vadd.f32 %v1752, %v1794
  %v1796 = vpop.f32.mrb[0].mxu0
  %v1797 = vadd.f32 %v1754, %v1796
  %v1798 = vpop.f32.mrb[0].mxu0
  %v1799 = vadd.f32 %v1756, %v1798
  %v1800 = vpop.f32.mrb[0].mxu0
  %v1801 = vadd.f32 %v1758, %v1800
  %1802 = vdwg.mxu0
  %1803 = vmatprep.subr.bf16.mxu0 %v1122
  %1804 = vmatpush1.bf16.msra.mxu0 %v1121
  %1805 = vmatprep.subr.bf16.mxu0 %v1126
  %1806 = vmatpush1.bf16.msra.mxu0 %v1125
  %1807 = vmatprep.subr.bf16.mxu0 %v1130
  %1808 = vmatpush1.bf16.msra.mxu0 %v1129
  %1809 = vmatprep.subr.bf16.mxu0 %v1134
  %1810 = vmatpush1.bf16.msra.mxu0 %v1133
  %1811 = vmatprep.subr.bf16.mxu0 %v1138
  %1812 = vmatpush1.bf16.msra.mxu0 %v1137
  %1813 = vmatprep.subr.bf16.mxu0 %v1142
  %1814 = vmatpush1.bf16.msra.mxu0 %v1141
  %1815 = vmatprep.subr.bf16.mxu0 %v1146
  %1816 = vmatpush1.bf16.msra.mxu0 %v1145
  %1817 = vmatprep.subr.bf16.mxu0 %v1150
  %1818 = vmatpush1.bf16.msra.mxu0 %v1149
  %1819 = vmatprep.subr.bf16.mxu0 %v1154
  %1820 = vmatpush1.bf16.msra.mxu0 %v1153
  %1821 = vmatprep.subr.bf16.mxu0 %v1158
  %1822 = vmatpush1.bf16.msra.mxu0 %v1157
  %1823 = vmatprep.subr.bf16.mxu0 %v1162
  %1824 = vmatpush1.bf16.msra.mxu0 %v1161
  %1825 = vmatprep.subr.bf16.mxu0 %v1166
  %1826 = vmatpush1.bf16.msra.mxu0 %v1165
  %1827 = vmatprep.subr.bf16.mxu0 %v1170
  %1828 = vmatpush1.bf16.msra.mxu0 %v1169
  %1829 = vmatprep.subr.bf16.mxu0 %v1174
  %1830 = vmatpush1.bf16.msra.mxu0 %v1173
  %1831 = vmatprep.subr.bf16.mxu0 %v1178
  %1832 = vmatpush1.bf16.msra.mxu0 %v1177
  %1833 = vmatprep.subr.bf16.mxu0 %v1182
  %1834 = vmatpush1.bf16.msra.mxu0 %v1181
  %1835 = vmatprep.mubr.bf16.mxu0 %v336
  %1836 = vmatmul.mubr.bf16.gmra.mrb[0].mxu0 %v335
  %v1837 = vpop.f32.mrb[0].mxu0
  %v1838 = vadd.f32 0.0, %v1837
  %v1839 = vpop.f32.mrb[0].mxu0
  %v1840 = vadd.f32 0.0, %v1839
  %v1841 = vpop.f32.mrb[0].mxu0
  %v1842 = vadd.f32 0.0, %v1841
  %v1843 = vpop.f32.mrb[0].mxu0
  %v1844 = vadd.f32 0.0, %v1843
  %1845 = vdwg.mxu0
  %1846 = vmatprep.subr.bf16.mxu0 %v1186
  %1847 = vmatpush1.bf16.msra.mxu0 %v1185
  %1848 = vmatprep.subr.bf16.mxu0 %v1190
  %1849 = vmatpush1.bf16.msra.mxu0 %v1189
  %1850 = vmatprep.subr.bf16.mxu0 %v1194
  %1851 = vmatpush1.bf16.msra.mxu0 %v1193
  %1852 = vmatprep.subr.bf16.mxu0 %v1198
  %1853 = vmatpush1.bf16.msra.mxu0 %v1197
  %1854 = vmatprep.subr.bf16.mxu0 %v1202
  %1855 = vmatpush1.bf16.msra.mxu0 %v1201
  %1856 = vmatprep.subr.bf16.mxu0 %v1206
  %1857 = vmatpush1.bf16.msra.mxu0 %v1205
  %1858 = vmatprep.subr.bf16.mxu0 %v1210
  %1859 = vmatpush1.bf16.msra.mxu0 %v1209
  %1860 = vmatprep.subr.bf16.mxu0 %v1214
  %1861 = vmatpush1.bf16.msra.mxu0 %v1213
  %1862 = vmatprep.subr.bf16.mxu0 %v1218
  %1863 = vmatpush1.bf16.msra.mxu0 %v1217
  %1864 = vmatprep.subr.bf16.mxu0 %v1222
  %1865 = vmatpush1.bf16.msra.mxu0 %v1221
  %1866 = vmatprep.subr.bf16.mxu0 %v1226
  %1867 = vmatpush1.bf16.msra.mxu0 %v1225
  %1868 = vmatprep.subr.bf16.mxu0 %v1230
  %1869 = vmatpush1.bf16.msra.mxu0 %v1229
  %1870 = vmatprep.subr.bf16.mxu0 %v1234
  %1871 = vmatpush1.bf16.msra.mxu0 %v1233
  %1872 = vmatprep.subr.bf16.mxu0 %v1238
  %1873 = vmatpush1.bf16.msra.mxu0 %v1237
  %1874 = vmatprep.subr.bf16.mxu0 %v1242
  %1875 = vmatpush1.bf16.msra.mxu0 %v1241
  %1876 = vmatprep.subr.bf16.mxu0 %v1246
  %1877 = vmatpush1.bf16.msra.mxu0 %v1245
  %1878 = vmatprep.mubr.bf16.mxu0 %v338
  %1879 = vmatmul.mubr.bf16.gmra.mrb[0].mxu0 %v337
  %v1880 = vpop.f32.mrb[0].mxu0
  %v1881 = vadd.f32 %v1838, %v1880
  %v1882 = vpop.f32.mrb[0].mxu0
  %v1883 = vadd.f32 %v1840, %v1882
  %v1884 = vpop.f32.mrb[0].mxu0
  %v1885 = vadd.f32 %v1842, %v1884
  %v1886 = vpop.f32.mrb[0].mxu0
  %v1887 = vadd.f32 %v1844, %v1886
  %1888 = vdwg.mxu0
  %1889 = vmatprep.subr.bf16.mxu0 %v1250
  %1890 = vmatpush1.bf16.msra.mxu0 %v1249
  %1891 = vmatprep.subr.bf16.mxu0 %v1254
  %1892 = vmatpush1.bf16.msra.mxu0 %v1253
  %1893 = vmatprep.subr.bf16.mxu0 %v1258
  %1894 = vmatpush1.bf16.msra.mxu0 %v1257
  %1895 = vmatprep.subr.bf16.mxu0 %v1262
  %1896 = vmatpush1.bf16.msra.mxu0 %v1261
  %1897 = vmatprep.subr.bf16.mxu0 %v1266
  %1898 = vmatpush1.bf16.msra.mxu0 %v1265
  %1899 = vmatprep.subr.bf16.mxu0 %v1270
  %1900 = vmatpush1.bf16.msra.mxu0 %v1269
  %1901 = vmatprep.subr.bf16.mxu0 %v1274
  %1902 = vmatpush1.bf16.msra.mxu0 %v1273
  %1903 = vmatprep.subr.bf16.mxu0 %v1278
  %1904 = vmatpush1.bf16.msra.mxu0 %v1277
  %1905 = vmatprep.subr.bf16.mxu0 %v1282
  %1906 = vmatpush1.bf16.msra.mxu0 %v1281
  %1907 = vmatprep.subr.bf16.mxu0 %v1286
  %1908 = vmatpush1.bf16.msra.mxu0 %v1285
  %1909 = vmatprep.subr.bf16.mxu0 %v1290
  %1910 = vmatpush1.bf16.msra.mxu0 %v1289
  %1911 = vmatprep.subr.bf16.mxu0 %v1294
  %1912 = vmatpush1.bf16.msra.mxu0 %v1293
  %1913 = vmatprep.subr.bf16.mxu0 %v1298
  %1914 = vmatpush1.bf16.msra.mxu0 %v1297
  %1915 = vmatprep.subr.bf16.mxu0 %v1302
  %1916 = vmatpush1.bf16.msra.mxu0 %v1301
  %1917 = vmatprep.subr.bf16.mxu0 %v1306
  %1918 = vmatpush1.bf16.msra.mxu0 %v1305
  %1919 = vmatprep.subr.bf16.mxu0 %v1310
  %1920 = vmatpush1.bf16.msra.mxu0 %v1309
  %1921 = vmatprep.mubr.bf16.mxu0 %v340
  %1922 = vmatmul.mubr.bf16.gmra.mrb[0].mxu0 %v339
  %v1923 = vpop.f32.mrb[0].mxu0
  %v1924 = vadd.f32 %v1881, %v1923
  %v1925 = vpop.f32.mrb[0].mxu0
  %v1926 = vadd.f32 %v1883, %v1925
  %v1927 = vpop.f32.mrb[0].mxu0
  %v1928 = vadd.f32 %v1885, %v1927
  %v1929 = vpop.f32.mrb[0].mxu0
  %v1930 = vadd.f32 %v1887, %v1929
  %1931 = vdwg.mxu0
  %1932 = vmatprep.subr.bf16.mxu0 %v1314
  %1933 = vmatpush1.bf16.msra.mxu0 %v1313
  %1934 = vmatprep.subr.bf16.mxu0 %v1318
  %1935 = vmatpush1.bf16.msra.mxu0 %v1317
  %1936 = vmatprep.subr.bf16.mxu0 %v1322
  %1937 = vmatpush1.bf16.msra.mxu0 %v1321
  %1938 = vmatprep.subr.bf16.mxu0 %v1326
  %1939 = vmatpush1.bf16.msra.mxu0 %v1325
  %1940 = vmatprep.subr.bf16.mxu0 %v1330
  %1941 = vmatpush1.bf16.msra.mxu0 %v1329
  %1942 = vmatprep.subr.bf16.mxu0 %v1334
  %1943 = vmatpush1.bf16.msra.mxu0 %v1333
  %1944 = vmatprep.subr.bf16.mxu0 %v1338
  %1945 = vmatpush1.bf16.msra.mxu0 %v1337
  %1946 = vmatprep.subr.bf16.mxu0 %v1342
  %1947 = vmatpush1.bf16.msra.mxu0 %v1341
  %1948 = vmatprep.subr.bf16.mxu0 %v1346
  %1949 = vmatpush1.bf16.msra.mxu0 %v1345
  %1950 = vmatprep.subr.bf16.mxu0 %v1350
  %1951 = vmatpush1.bf16.msra.mxu0 %v1349
  %1952 = vmatprep.subr.bf16.mxu0 %v1354
  %1953 = vmatpush1.bf16.msra.mxu0 %v1353
  %1954 = vmatprep.subr.bf16.mxu0 %v1358
  %1955 = vmatpush1.bf16.msra.mxu0 %v1357
  %1956 = vmatprep.subr.bf16.mxu0 %v1362
  %1957 = vmatpush1.bf16.msra.mxu0 %v1361
  %1958 = vmatprep.subr.bf16.mxu0 %v1366
  %1959 = vmatpush1.bf16.msra.mxu0 %v1365
  %1960 = vmatprep.subr.bf16.mxu0 %v1370
  %1961 = vmatpush1.bf16.msra.mxu0 %v1369
  %1962 = vmatprep.subr.bf16.mxu0 %v1374
  %1963 = vmatpush1.bf16.msra.mxu0 %v1373
  %1964 = vmatprep.mubr.bf16.mxu0 %v342
  %1965 = vmatmul.mubr.bf16.gmra.mrb[0].mxu0 %v341
  %v1966 = vpop.f32.mrb[0].mxu0
  %v1967 = vadd.f32 %v1924, %v1966
  %v1968 = vpop.f32.mrb[0].mxu0
  %v1969 = vadd.f32 %v1926, %v1968
  %v1970 = vpop.f32.mrb[0].mxu0
  %v1971 = vadd.f32 %v1928, %v1970
  %v1972 = vpop.f32.mrb[0].mxu0
  %v1973 = vadd.f32 %v1930, %v1972
  %1974 = vdwg.mxu0
  %v1975 = vadd.f32 %v39, %v1795
  %v1976 = vadd.f32 %v40, %v1797
  %v1977 = vadd.f32 %v41, %v1967
  %v1978 = vadd.f32 %v42, %v1969
  %v1979 = vadd.f32 %v43, %v1799
  %v1980 = vadd.f32 %v44, %v1801
  %v1981 = vadd.f32 %v45, %v1971
  %v1982 = vadd.f32 %v46, %v1973
  %1983 = vst [vmem:[#allocation2] sm:$0xff] %v1975
  %1984 = vst [vmem:[#allocation2 + $0x8] sm:$0xff] %v1976
  %1985 = vst [vmem:[#allocation2 + $0x10] sm:$0xff] %v1977
  %1986 = vst [vmem:[#allocation2 + $0x18] sm:$0xff] %v1978
  %1987 = vst [vmem:[#allocation2 + $0x20] sm:$0xff] %v1979
  %1988 = vst [vmem:[#allocation2 + $0x28] sm:$0xff] %v1980
  %1989 = vst [vmem:[#allocation2 + $0x30] sm:$0xff] %v1981
  %1990 = vst [vmem:[#allocation2 + $0x38] sm:$0xff] %v1982
  // Predicated region
  $region34: #{forward.1} parent=0 // pred_check
    %p1991 = pneg %p27
  $region35: #{forward.1} parent=0 // pred_check_branch
    %1993 = sbr.rel (%p1991) target = $region37
  $region36: #{forward.1} parent=0 // pred_region
    %v1994 = vld [vmem:[#allocation2] sm:$0xff]
    %v1995 = vld [vmem:[#allocation2 + $0x8] sm:$0xff]
    %v1996 = vld [vmem:[#allocation2 + $0x10] sm:$0xff]
    %v1997 = vld [vmem:[#allocation2 + $0x18] sm:$0xff]
    %v1998 = vld [vmem:[#allocation2 + $0x20] sm:$0xff]
    %v1999 = vld [vmem:[#allocation2 + $0x28] sm:$0xff]
    %v2000 = vld [vmem:[#allocation2 + $0x30] sm:$0xff]
    %v2001 = vld [vmem:[#allocation2 + $0x38] sm:$0xff]
    %v2002 = vld [vmem:[%s2] sm:$0xf]
    %v2004 = vlaneseq
    %v2005 = vshrl.u32 %v2004, 7
    %v2006 = vsub.s32 0, %v2005
    %v2007 = vrot.slane %v2002, %v2006
    %v2008 = vlaneseq
    %v2009 = vshrl.u32 %v2008, 7
    %v2010 = vsub.s32 1, %v2009
    %v2011 = vrot.slane %v2002, %v2010
    %v2012 = vlaneseq
    %v2013 = vshrl.u32 %v2012, 7
    %v2014 = vsub.s32 2, %v2013
    %v2015 = vrot.slane %v2002, %v2014
    %v2016 = vlaneseq
    %v2017 = vshrl.u32 %v2016, 7
    %v2018 = vsub.s32 3, %v2017
    %v2019 = vrot.slane %v2002, %v2018
    %v2024 = vadd.f32 %v1994, %v2007
    %v2025 = vadd.f32 %v1995, %v2011
    %v2026 = vadd.f32 %v1996, %v2015
    %v2027 = vadd.f32 %v1997, %v2019
    %v2028 = vadd.f32 %v1998, %v2007
    %v2029 = vadd.f32 %v1999, %v2011
    %v2030 = vadd.f32 %v2000, %v2015
    %v2031 = vadd.f32 %v2001, %v2019
    %v2032 = vmul.f32 %v2024, %v2024
    %v2033 = vmul.f32 %v2025, %v2025
    %v2034 = vmul.f32 %v2026, %v2026
    %v2035 = vmul.f32 %v2027, %v2027
    %v2036 = vmul.f32 %v2028, %v2028
    %v2037 = vmul.f32 %v2029, %v2029
    %v2038 = vmul.f32 %v2030, %v2030
    %v2039 = vmul.f32 %v2031, %v2031
    %v2040 = vadd.f32 %v2032, %v2033
    %v2041 = vadd.f32 %v2040, %v2034
    %v2042 = vadd.f32 %v2041, %v2035
    %2043 = vadd.xlane.f32.xlu0 %v2042
    %v2044 = vpop.xlane.xlu0 %2043
    %v2045 = vadd.f32 %v2036, %v2037
    %v2046 = vadd.f32 %v2045, %v2038
    %v2047 = vadd.f32 %v2046, %v2039
    %2048 = vadd.xlane.f32.xlu0 %v2047
    %v2049 = vpop.xlane.xlu0 %2048
    %v2050 = vmax.f32 %v2044, 1e-24
    %v2051 = vmax.f32 %v2049, 1e-24
    %v2052 = vrsqrt.pop %v2050
    %v2053 = vrsqrt.pop %v2051
    %v2054 = vmul.f32 %v2024, %v2052
    %v2055 = vmul.f32 %v2025, %v2052
    %v2056 = vmul.f32 %v2026, %v2052
    %v2057 = vmul.f32 %v2027, %v2052
    %v2058 = vmul.f32 %v2028, %v2053
    %v2059 = vmul.f32 %v2029, %v2053
    %v2060 = vmul.f32 %v2030, %v2053
    %v2061 = vmul.f32 %v2031, %v2053
    %v2062 = vpack.c.bf16 %v2058, %v2054
    %v2063 = vpack.c.bf16 %v2059, %v2055
    %v2064 = vpack.c.bf16 %v2060, %v2056
    %v2065 = vpack.c.bf16 %v2061, %v2057
    %v2066 = vld [vmem:[%s3] sm:$0xff]
    %v2067 = vld [vmem:[%s3 + $0x8] sm:$0xff]
    %v2068 = vld [vmem:[%s3 + $0x10] sm:$0xff]
    %v2069 = vld [vmem:[%s3 + $0x18] sm:$0xff]
    %v2070 = vld [vmem:[%s3 + $0x20] sm:$0xff]
    %v2071 = vld [vmem:[%s3 + $0x28] sm:$0xff]
    %v2072 = vld [vmem:[%s3 + $0x30] sm:$0xff]
    %v2073 = vld [vmem:[%s3 + $0x38] sm:$0xff]
    %v2074 = vld [vmem:[%s3 + $0x40] sm:$0xff]
    %v2075 = vld [vmem:[%s3 + $0x48] sm:$0xff]
    %v2076 = vld [vmem:[%s3 + $0x50] sm:$0xff]
    %v2077 = vld [vmem:[%s3 + $0x58] sm:$0xff]
    %v2078 = vld [vmem:[%s3 + $0x60] sm:$0xff]
    %v2079 = vld [vmem:[%s3 + $0x68] sm:$0xff]
    %v2080 = vld [vmem:[%s3 + $0x70] sm:$0xff]
    %v2081 = vld [vmem:[%s3 + $0x78] sm:$0xff]
    %v2082 = vld [vmem:[%s3 + $0x80] sm:$0xff]
    %v2083 = vld [vmem:[%s3 + $0x88] sm:$0xff]
    %v2084 = vld [vmem:[%s3 + $0x90] sm:$0xff]
    %v2085 = vld [vmem:[%s3 + $0x98] sm:$0xff]
    %v2086 = vld [vmem:[%s3 + $0xa0] sm:$0xff]
    %v2087 = vld [vmem:[%s3 + $0xa8] sm:$0xff]
    %v2088 = vld [vmem:[%s3 + $0xb0] sm:$0xff]
    %v2089 = vld [vmem:[%s3 + $0xb8] sm:$0xff]
    %v2090 = vld [vmem:[%s3 + $0xc0] sm:$0xff]
    %v2091 = vld [vmem:[%s3 + $0xc8] sm:$0xff]
    %v2092 = vld [vmem:[%s3 + $0xd0] sm:$0xff]
    %v2093 = vld [vmem:[%s3 + $0xd8] sm:$0xff]
    %v2094 = vld [vmem:[%s3 + $0xe0] sm:$0xff]
    %v2095 = vld [vmem:[%s3 + $0xe8] sm:$0xff]
    %v2096 = vld [vmem:[%s3 + $0xf0] sm:$0xff]
    %v2097 = vld [vmem:[%s3 + $0xf8] sm:$0xff]
    %v2098 = vld [vmem:[%s3 + $0x100] sm:$0xff]
    %v2099 = vld [vmem:[%s3 + $0x108] sm:$0xff]
    %v2100 = vld [vmem:[%s3 + $0x110] sm:$0xff]
    %v2101 = vld [vmem:[%s3 + $0x118] sm:$0xff]
    %v2102 = vld [vmem:[%s3 + $0x120] sm:$0xff]
    %v2103 = vld [vmem:[%s3 + $0x128] sm:$0xff]
    %v2104 = vld [vmem:[%s3 + $0x130] sm:$0xff]
    %v2105 = vld [vmem:[%s3 + $0x138] sm:$0xff]
    %v2106 = vld [vmem:[%s3 + $0x140] sm:$0xff]
    %v2107 = vld [vmem:[%s3 + $0x148] sm:$0xff]
    %v2108 = vld [vmem:[%s3 + $0x150] sm:$0xff]
    %v2109 = vld [vmem:[%s3 + $0x158] sm:$0xff]
    %v2110 = vld [vmem:[%s3 + $0x160] sm:$0xff]
    %v2111 = vld [vmem:[%s3 + $0x168] sm:$0xff]
    %v2112 = vld [vmem:[%s3 + $0x170] sm:$0xff]
    %v2113 = vld [vmem:[%s3 + $0x178] sm:$0xff]
    %v2114 = vld [vmem:[%s3 + $0x180] sm:$0xff]
    %v2115 = vld [vmem:[%s3 + $0x188] sm:$0xff]
    %v2116 = vld [vmem:[%s3 + $0x190] sm:$0xff]
    %v2117 = vld [vmem:[%s3 + $0x198] sm:$0xff]
    %v2118 = vld [vmem:[%s3 + $0x1a0] sm:$0xff]
    %v2119 = vld [vmem:[%s3 + $0x1a8] sm:$0xff]
    %v2120 = vld [vmem:[%s3 + $0x1b0] sm:$0xff]
    %v2121 = vld [vmem:[%s3 + $0x1b8] sm:$0xff]
    %v2122 = vld [vmem:[%s3 + $0x1c0] sm:$0xff]
    %v2123 = vld [vmem:[%s3 + $0x1c8] sm:$0xff]
    %v2124 = vld [vmem:[%s3 + $0x1d0] sm:$0xff]
    %v2125 = vld [vmem:[%s3 + $0x1d8] sm:$0xff]
    %v2126 = vld [vmem:[%s3 + $0x1e0] sm:$0xff]
    %v2127 = vld [vmem:[%s3 + $0x1e8] sm:$0xff]
    %v2128 = vld [vmem:[%s3 + $0x1f0] sm:$0xff]
    %v2129 = vld [vmem:[%s3 + $0x1f8] sm:$0xff]
    %v2130 = vld [vmem:[%s3 + $0x200] sm:$0xff]
    %v2131 = vld [vmem:[%s3 + $0x208] sm:$0xff]
    %v2132 = vld [vmem:[%s3 + $0x210] sm:$0xff]
    %v2133 = vld [vmem:[%s3 + $0x218] sm:$0xff]
    %v2134 = vld [vmem:[%s3 + $0x220] sm:$0xff]
    %v2135 = vld [vmem:[%s3 + $0x228] sm:$0xff]
    %v2136 = vld [vmem:[%s3 + $0x230] sm:$0xff]
    %v2137 = vld [vmem:[%s3 + $0x238] sm:$0xff]
    %v2138 = vld [vmem:[%s3 + $0x240] sm:$0xff]
    %v2139 = vld [vmem:[%s3 + $0x248] sm:$0xff]
    %v2140 = vld [vmem:[%s3 + $0x250] sm:$0xff]
    %v2141 = vld [vmem:[%s3 + $0x258] sm:$0xff]
    %v2142 = vld [vmem:[%s3 + $0x260] sm:$0xff]
    %v2143 = vld [vmem:[%s3 + $0x268] sm:$0xff]
    %v2144 = vld [vmem:[%s3 + $0x270] sm:$0xff]
    %v2145 = vld [vmem:[%s3 + $0x278] sm:$0xff]
    %v2146 = vld [vmem:[%s3 + $0x280] sm:$0xff]
    %v2147 = vld [vmem:[%s3 + $0x288] sm:$0xff]
    %v2148 = vld [vmem:[%s3 + $0x290] sm:$0xff]
    %v2149 = vld [vmem:[%s3 + $0x298] sm:$0xff]
    %v2150 = vld [vmem:[%s3 + $0x2a0] sm:$0xff]
    %v2151 = vld [vmem:[%s3 + $0x2a8] sm:$0xff]
    %v2152 = vld [vmem:[%s3 + $0x2b0] sm:$0xff]
    %v2153 = vld [vmem:[%s3 + $0x2b8] sm:$0xff]
    %v2154 = vld [vmem:[%s3 + $0x2c0] sm:$0xff]
    %v2155 = vld [vmem:[%s3 + $0x2c8] sm:$0xff]
    %v2156 = vld [vmem:[%s3 + $0x2d0] sm:$0xff]
    %v2157 = vld [vmem:[%s3 + $0x2d8] sm:$0xff]
    %v2158 = vld [vmem:[%s3 + $0x2e0] sm:$0xff]
    %v2159 = vld [vmem:[%s3 + $0x2e8] sm:$0xff]
    %v2160 = vld [vmem:[%s3 + $0x2f0] sm:$0xff]
    %v2161 = vld [vmem:[%s3 + $0x2f8] sm:$0xff]
    %v2162 = vld [vmem:[%s3 + $0x300] sm:$0xff]
    %v2163 = vld [vmem:[%s3 + $0x308] sm:$0xff]
    %v2164 = vld [vmem:[%s3 + $0x310] sm:$0xff]
    %v2165 = vld [vmem:[%s3 + $0x318] sm:$0xff]
    %v2166 = vld [vmem:[%s3 + $0x320] sm:$0xff]
    %v2167 = vld [vmem:[%s3 + $0x328] sm:$0xff]
    %v2168 = vld [vmem:[%s3 + $0x330] sm:$0xff]
    %v2169 = vld [vmem:[%s3 + $0x338] sm:$0xff]
    %v2170 = vld [vmem:[%s3 + $0x340] sm:$0xff]
    %v2171 = vld [vmem:[%s3 + $0x348] sm:$0xff]
    %v2172 = vld [vmem:[%s3 + $0x350] sm:$0xff]
    %v2173 = vld [vmem:[%s3 + $0x358] sm:$0xff]
    %v2174 = vld [vmem:[%s3 + $0x360] sm:$0xff]
    %v2175 = vld [vmem:[%s3 + $0x368] sm:$0xff]
    %v2176 = vld [vmem:[%s3 + $0x370] sm:$0xff]
    %v2177 = vld [vmem:[%s3 + $0x378] sm:$0xff]
    %v2178 = vld [vmem:[%s3 + $0x380] sm:$0xff]
    %v2179 = vld [vmem:[%s3 + $0x388] sm:$0xff]
    %v2180 = vld [vmem:[%s3 + $0x390] sm:$0xff]
    %v2181 = vld [vmem:[%s3 + $0x398] sm:$0xff]
    %v2182 = vld [vmem:[%s3 + $0x3a0] sm:$0xff]
    %v2183 = vld [vmem:[%s3 + $0x3a8] sm:$0xff]
    %v2184 = vld [vmem:[%s3 + $0x3b0] sm:$0xff]
    %v2185 = vld [vmem:[%s3 + $0x3b8] sm:$0xff]
    %v2186 = vld [vmem:[%s3 + $0x3c0] sm:$0xff]
    %v2187 = vld [vmem:[%s3 + $0x3c8] sm:$0xff]
    %v2188 = vld [vmem:[%s3 + $0x3d0] sm:$0xff]
    %v2189 = vld [vmem:[%s3 + $0x3d8] sm:$0xff]
    %v2190 = vld [vmem:[%s3 + $0x3e0] sm:$0xff]
    %v2191 = vld [vmem:[%s3 + $0x3e8] sm:$0xff]
    %v2192 = vld [vmem:[%s3 + $0x3f0] sm:$0xff]
    %v2193 = vld [vmem:[%s3 + $0x3f8] sm:$0xff]
    %v2194 = vld [vmem:[%s3 + $0x400] sm:$0xff]
    %v2195 = vld [vmem:[%s3 + $0x408] sm:$0xff]
    %v2196 = vld [vmem:[%s3 + $0x410] sm:$0xff]
    %v2197 = vld [vmem:[%s3 + $0x418] sm:$0xff]
    %v2198 = vld [vmem:[%s3 + $0x420] sm:$0xff]
    %v2199 = vld [vmem:[%s3 + $0x428] sm:$0xff]
    %v2200 = vld [vmem:[%s3 + $0x430] sm:$0xff]
    %v2201 = vld [vmem:[%s3 + $0x438] sm:$0xff]
    %v2202 = vld [vmem:[%s3 + $0x440] sm:$0xff]
    %v2203 = vld [vmem:[%s3 + $0x448] sm:$0xff]
    %v2204 = vld [vmem:[%s3 + $0x450] sm:$0xff]
    %v2205 = vld [vmem:[%s3 + $0x458] sm:$0xff]
    %v2206 = vld [vmem:[%s3 + $0x460] sm:$0xff]
    %v2207 = vld [vmem:[%s3 + $0x468] sm:$0xff]
    %v2208 = vld [vmem:[%s3 + $0x470] sm:$0xff]
    %v2209 = vld [vmem:[%s3 + $0x478] sm:$0xff]
    %v2210 = vld [vmem:[%s3 + $0x480] sm:$0xff]
    %v2211 = vld [vmem:[%s3 + $0x488] sm:$0xff]
    %v2212 = vld [vmem:[%s3 + $0x490] sm:$0xff]
    %v2213 = vld [vmem:[%s3 + $0x498] sm:$0xff]
    %v2214 = vld [vmem:[%s3 + $0x4a0] sm:$0xff]
    %v2215 = vld [vmem:[%s3 + $0x4a8] sm:$0xff]
    %v2216 = vld [vmem:[%s3 + $0x4b0] sm:$0xff]
    %v2217 = vld [vmem:[%s3 + $0x4b8] sm:$0xff]
    %v2218 = vld [vmem:[%s3 + $0x4c0] sm:$0xff]
    %v2219 = vld [vmem:[%s3 + $0x4c8] sm:$0xff]
    %v2220 = vld [vmem:[%s3 + $0x4d0] sm:$0xff]
    %v2221 = vld [vmem:[%s3 + $0x4d8] sm:$0xff]
    %v2222 = vld [vmem:[%s3 + $0x4e0] sm:$0xff]
    %v2223 = vld [vmem:[%s3 + $0x4e8] sm:$0xff]
    %v2224 = vld [vmem:[%s3 + $0x4f0] sm:$0xff]
    %v2225 = vld [vmem:[%s3 + $0x4f8] sm:$0xff]
    %v2226 = vld [vmem:[%s3 + $0x500] sm:$0xff]
    %v2227 = vld [vmem:[%s3 + $0x508] sm:$0xff]
    %v2228 = vld [vmem:[%s3 + $0x510] sm:$0xff]
    %v2229 = vld [vmem:[%s3 + $0x518] sm:$0xff]
    %v2230 = vld [vmem:[%s3 + $0x520] sm:$0xff]
    %v2231 = vld [vmem:[%s3 + $0x528] sm:$0xff]
    %v2232 = vld [vmem:[%s3 + $0x530] sm:$0xff]
    %v2233 = vld [vmem:[%s3 + $0x538] sm:$0xff]
    %v2234 = vld [vmem:[%s3 + $0x540] sm:$0xff]
    %v2235 = vld [vmem:[%s3 + $0x548] sm:$0xff]
    %v2236 = vld [vmem:[%s3 + $0x550] sm:$0xff]
    %v2237 = vld [vmem:[%s3 + $0x558] sm:$0xff]
    %v2238 = vld [vmem:[%s3 + $0x560] sm:$0xff]
    %v2239 = vld [vmem:[%s3 + $0x568] sm:$0xff]
    %v2240 = vld [vmem:[%s3 + $0x570] sm:$0xff]
    %v2241 = vld [vmem:[%s3 + $0x578] sm:$0xff]
    %v2242 = vld [vmem:[%s3 + $0x580] sm:$0xff]
    %v2243 = vld [vmem:[%s3 + $0x588] sm:$0xff]
    %v2244 = vld [vmem:[%s3 + $0x590] sm:$0xff]
    %v2245 = vld [vmem:[%s3 + $0x598] sm:$0xff]
    %v2246 = vld [vmem:[%s3 + $0x5a0] sm:$0xff]
    %v2247 = vld [vmem:[%s3 + $0x5a8] sm:$0xff]
    %v2248 = vld [vmem:[%s3 + $0x5b0] sm:$0xff]
    %v2249 = vld [vmem:[%s3 + $0x5b8] sm:$0xff]
    %v2250 = vld [vmem:[%s3 + $0x5c0] sm:$0xff]
    %v2251 = vld [vmem:[%s3 + $0x5c8] sm:$0xff]
    %v2252 = vld [vmem:[%s3 + $0x5d0] sm:$0xff]
    %v2253 = vld [vmem:[%s3 + $0x5d8] sm:$0xff]
    %v2254 = vld [vmem:[%s3 + $0x5e0] sm:$0xff]
    %v2255 = vld [vmem:[%s3 + $0x5e8] sm:$0xff]
    %v2256 = vld [vmem:[%s3 + $0x5f0] sm:$0xff]
    %v2257 = vld [vmem:[%s3 + $0x5f8] sm:$0xff]
    %v2258 = vld [vmem:[%s3 + $0x600] sm:$0xff]
    %v2259 = vld [vmem:[%s3 + $0x608] sm:$0xff]
    %v2260 = vld [vmem:[%s3 + $0x610] sm:$0xff]
    %v2261 = vld [vmem:[%s3 + $0x618] sm:$0xff]
    %v2262 = vld [vmem:[%s3 + $0x620] sm:$0xff]
    %v2263 = vld [vmem:[%s3 + $0x628] sm:$0xff]
    %v2264 = vld [vmem:[%s3 + $0x630] sm:$0xff]
    %v2265 = vld [vmem:[%s3 + $0x638] sm:$0xff]
    %v2266 = vld [vmem:[%s3 + $0x640] sm:$0xff]
    %v2267 = vld [vmem:[%s3 + $0x648] sm:$0xff]
    %v2268 = vld [vmem:[%s3 + $0x650] sm:$0xff]
    %v2269 = vld [vmem:[%s3 + $0x658] sm:$0xff]
    %v2270 = vld [vmem:[%s3 + $0x660] sm:$0xff]
    %v2271 = vld [vmem:[%s3 + $0x668] sm:$0xff]
    %v2272 = vld [vmem:[%s3 + $0x670] sm:$0xff]
    %v2273 = vld [vmem:[%s3 + $0x678] sm:$0xff]
    %v2274 = vld [vmem:[%s3 + $0x680] sm:$0xff]
    %v2275 = vld [vmem:[%s3 + $0x688] sm:$0xff]
    %v2276 = vld [vmem:[%s3 + $0x690] sm:$0xff]
    %v2277 = vld [vmem:[%s3 + $0x698] sm:$0xff]
    %v2278 = vld [vmem:[%s3 + $0x6a0] sm:$0xff]
    %v2279 = vld [vmem:[%s3 + $0x6a8] sm:$0xff]
    %v2280 = vld [vmem:[%s3 + $0x6b0] sm:$0xff]
    %v2281 = vld [vmem:[%s3 + $0x6b8] sm:$0xff]
    %v2282 = vld [vmem:[%s3 + $0x6c0] sm:$0xff]
    %v2283 = vld [vmem:[%s3 + $0x6c8] sm:$0xff]
    %v2284 = vld [vmem:[%s3 + $0x6d0] sm:$0xff]
    %v2285 = vld [vmem:[%s3 + $0x6d8] sm:$0xff]
    %v2286 = vld [vmem:[%s3 + $0x6e0] sm:$0xff]
    %v2287 = vld [vmem:[%s3 + $0x6e8] sm:$0xff]
    %v2288 = vld [vmem:[%s3 + $0x6f0] sm:$0xff]
    %v2289 = vld [vmem:[%s3 + $0x6f8] sm:$0xff]
    %v2290 = vld [vmem:[%s3 + $0x700] sm:$0xff]
    %v2291 = vld [vmem:[%s3 + $0x708] sm:$0xff]
    %v2292 = vld [vmem:[%s3 + $0x710] sm:$0xff]
    %v2293 = vld [vmem:[%s3 + $0x718] sm:$0xff]
    %v2294 = vld [vmem:[%s3 + $0x720] sm:$0xff]
    %v2295 = vld [vmem:[%s3 + $0x728] sm:$0xff]
    %v2296 = vld [vmem:[%s3 + $0x730] sm:$0xff]
    %v2297 = vld [vmem:[%s3 + $0x738] sm:$0xff]
    %v2298 = vld [vmem:[%s3 + $0x740] sm:$0xff]
    %v2299 = vld [vmem:[%s3 + $0x748] sm:$0xff]
    %v2300 = vld [vmem:[%s3 + $0x750] sm:$0xff]
    %v2301 = vld [vmem:[%s3 + $0x758] sm:$0xff]
    %v2302 = vld [vmem:[%s3 + $0x760] sm:$0xff]
    %v2303 = vld [vmem:[%s3 + $0x768] sm:$0xff]
    %v2304 = vld [vmem:[%s3 + $0x770] sm:$0xff]
    %v2305 = vld [vmem:[%s3 + $0x778] sm:$0xff]
    %v2306 = vld [vmem:[%s3 + $0x780] sm:$0xff]
    %v2307 = vld [vmem:[%s3 + $0x788] sm:$0xff]
    %v2308 = vld [vmem:[%s3 + $0x790] sm:$0xff]
    %v2309 = vld [vmem:[%s3 + $0x798] sm:$0xff]
    %v2310 = vld [vmem:[%s3 + $0x7a0] sm:$0xff]
    %v2311 = vld [vmem:[%s3 + $0x7a8] sm:$0xff]
    %v2312 = vld [vmem:[%s3 + $0x7b0] sm:$0xff]
    %v2313 = vld [vmem:[%s3 + $0x7b8] sm:$0xff]
    %v2314 = vld [vmem:[%s3 + $0x7c0] sm:$0xff]
    %v2315 = vld [vmem:[%s3 + $0x7c8] sm:$0xff]
    %v2316 = vld [vmem:[%s3 + $0x7d0] sm:$0xff]
    %v2317 = vld [vmem:[%s3 + $0x7d8] sm:$0xff]
    %v2318 = vld [vmem:[%s3 + $0x7e0] sm:$0xff]
    %v2319 = vld [vmem:[%s3 + $0x7e8] sm:$0xff]
    %v2320 = vld [vmem:[%s3 + $0x7f0] sm:$0xff]
    %v2321 = vld [vmem:[%s3 + $0x7f8] sm:$0xff]
    %v2322 = vld [vmem:[%s4] sm:$0xff]
    %v2324 = vlaneseq
    %v2325 = vshrl.u32 %v2324, 7
    %v2326 = vsub.s32 0, %v2325
    %v2327 = vrot.slane %v2322, %v2326
    %v2328 = vlaneseq
    %v2329 = vshrl.u32 %v2328, 7
    %v2330 = vsub.s32 1, %v2329
    %v2331 = vrot.slane %v2322, %v2330
    %v2332 = vlaneseq
    %v2333 = vshrl.u32 %v2332, 7
    %v2334 = vsub.s32 2, %v2333
    %v2335 = vrot.slane %v2322, %v2334
    %v2336 = vlaneseq
    %v2337 = vshrl.u32 %v2336, 7
    %v2338 = vsub.s32 3, %v2337
    %v2339 = vrot.slane %v2322, %v2338
    %v2340 = vlaneseq
    %v2341 = vshrl.u32 %v2340, 7
    %v2342 = vsub.s32 4, %v2341
    %v2343 = vrot.slane %v2322, %v2342
    %v2344 = vlaneseq
    %v2345 = vshrl.u32 %v2344, 7
    %v2346 = vsub.s32 5, %v2345
    %v2347 = vrot.slane %v2322, %v2346
    %v2348 = vlaneseq
    %v2349 = vshrl.u32 %v2348, 7
    %v2350 = vsub.s32 6, %v2349
    %v2351 = vrot.slane %v2322, %v2350
    %v2352 = vlaneseq
    %v2353 = vshrl.u32 %v2352, 7
    %v2354 = vsub.s32 7, %v2353
    %v2355 = vrot.slane %v2322, %v2354
    %v2620 = vunpack.c.l.b16 %v2066
    %v2621 = vunpack.c.h.b16 %v2066
    %v2622 = vunpack.c.l.b16 %v2067
    %v2623 = vunpack.c.h.b16 %v2067
    %v2624 = vunpack.c.l.b16 %v2068
    %v2625 = vunpack.c.h.b16 %v2068
    %v2626 = vunpack.c.l.b16 %v2069
    %v2627 = vunpack.c.h.b16 %v2069
    %v2628 = vunpack.c.l.b16 %v2070
    %v2629 = vunpack.c.h.b16 %v2070
    %v2630 = vunpack.c.l.b16 %v2071
    %v2631 = vunpack.c.h.b16 %v2071
    %v2632 = vunpack.c.l.b16 %v2072
    %v2633 = vunpack.c.h.b16 %v2072
    %v2634 = vunpack.c.l.b16 %v2073
    %v2635 = vunpack.c.h.b16 %v2073
    %v2636 = vunpack.c.l.b16 %v2074
    %v2637 = vunpack.c.h.b16 %v2074
    %v2638 = vunpack.c.l.b16 %v2075
    %v2639 = vunpack.c.h.b16 %v2075
    %v2640 = vunpack.c.l.b16 %v2076
    %v2641 = vunpack.c.h.b16 %v2076
    %v2642 = vunpack.c.l.b16 %v2077
    %v2643 = vunpack.c.h.b16 %v2077
    %v2644 = vunpack.c.l.b16 %v2078
    %v2645 = vunpack.c.h.b16 %v2078
    %v2646 = vunpack.c.l.b16 %v2079
    %v2647 = vunpack.c.h.b16 %v2079
    %v2648 = vunpack.c.l.b16 %v2080
    %v2649 = vunpack.c.h.b16 %v2080
    %v2650 = vunpack.c.l.b16 %v2081
    %v2651 = vunpack.c.h.b16 %v2081
    %v2652 = vunpack.c.l.b16 %v2082
    %v2653 = vunpack.c.h.b16 %v2082
    %v2654 = vunpack.c.l.b16 %v2083
    %v2655 = vunpack.c.h.b16 %v2083
    %v2656 = vunpack.c.l.b16 %v2084
    %v2657 = vunpack.c.h.b16 %v2084
    %v2658 = vunpack.c.l.b16 %v2085
    %v2659 = vunpack.c.h.b16 %v2085
    %v2660 = vunpack.c.l.b16 %v2086
    %v2661 = vunpack.c.h.b16 %v2086
    %v2662 = vunpack.c.l.b16 %v2087
    %v2663 = vunpack.c.h.b16 %v2087
    %v2664 = vunpack.c.l.b16 %v2088
    %v2665 = vunpack.c.h.b16 %v2088
    %v2666 = vunpack.c.l.b16 %v2089
    %v2667 = vunpack.c.h.b16 %v2089
    %v2668 = vunpack.c.l.b16 %v2090
    %v2669 = vunpack.c.h.b16 %v2090
    %v2670 = vunpack.c.l.b16 %v2091
    %v2671 = vunpack.c.h.b16 %v2091
    %v2672 = vunpack.c.l.b16 %v2092
    %v2673 = vunpack.c.h.b16 %v2092
    %v2674 = vunpack.c.l.b16 %v2093
    %v2675 = vunpack.c.h.b16 %v2093
    %v2676 = vunpack.c.l.b16 %v2094
    %v2677 = vunpack.c.h.b16 %v2094
    %v2678 = vunpack.c.l.b16 %v2095
    %v2679 = vunpack.c.h.b16 %v2095
    %v2680 = vunpack.c.l.b16 %v2096
    %v2681 = vunpack.c.h.b16 %v2096
    %v2682 = vunpack.c.l.b16 %v2097
    %v2683 = vunpack.c.h.b16 %v2097
    %v2684 = vunpack.c.l.b16 %v2098
    %v2685 = vunpack.c.h.b16 %v2098
    %v2686 = vunpack.c.l.b16 %v2099
    %v2687 = vunpack.c.h.b16 %v2099
    %v2688 = vunpack.c.l.b16 %v2100
    %v2689 = vunpack.c.h.b16 %v2100
    %v2690 = vunpack.c.l.b16 %v2101
    %v2691 = vunpack.c.h.b16 %v2101
    %v2692 = vunpack.c.l.b16 %v2102
    %v2693 = vunpack.c.h.b16 %v2102
    %v2694 = vunpack.c.l.b16 %v2103
    %v2695 = vunpack.c.h.b16 %v2103
    %v2696 = vunpack.c.l.b16 %v2104
    %v2697 = vunpack.c.h.b16 %v2104
    %v2698 = vunpack.c.l.b16 %v2105
    %v2699 = vunpack.c.h.b16 %v2105
    %v2700 = vunpack.c.l.b16 %v2106
    %v2701 = vunpack.c.h.b16 %v2106
    %v2702 = vunpack.c.l.b16 %v2107
    %v2703 = vunpack.c.h.b16 %v2107
    %v2704 = vunpack.c.l.b16 %v2108
    %v2705 = vunpack.c.h.b16 %v2108
    %v2706 = vunpack.c.l.b16 %v2109
    %v2707 = vunpack.c.h.b16 %v2109
    %v2708 = vunpack.c.l.b16 %v2110
    %v2709 = vunpack.c.h.b16 %v2110
    %v2710 = vunpack.c.l.b16 %v2111
    %v2711 = vunpack.c.h.b16 %v2111
    %v2712 = vunpack.c.l.b16 %v2112
    %v2713 = vunpack.c.h.b16 %v2112
    %v2714 = vunpack.c.l.b16 %v2113
    %v2715 = vunpack.c.h.b16 %v2113
    %v2716 = vunpack.c.l.b16 %v2114
    %v2717 = vunpack.c.h.b16 %v2114
    %v2718 = vunpack.c.l.b16 %v2115
    %v2719 = vunpack.c.h.b16 %v2115
    %v2720 = vunpack.c.l.b16 %v2116
    %v2721 = vunpack.c.h.b16 %v2116
    %v2722 = vunpack.c.l.b16 %v2117
    %v2723 = vunpack.c.h.b16 %v2117
    %v2724 = vunpack.c.l.b16 %v2118
    %v2725 = vunpack.c.h.b16 %v2118
    %v2726 = vunpack.c.l.b16 %v2119
    %v2727 = vunpack.c.h.b16 %v2119
    %v2728 = vunpack.c.l.b16 %v2120
    %v2729 = vunpack.c.h.b16 %v2120
    %v2730 = vunpack.c.l.b16 %v2121
    %v2731 = vunpack.c.h.b16 %v2121
    %v2732 = vunpack.c.l.b16 %v2122
    %v2733 = vunpack.c.h.b16 %v2122
    %v2734 = vunpack.c.l.b16 %v2123
    %v2735 = vunpack.c.h.b16 %v2123
    %v2736 = vunpack.c.l.b16 %v2124
    %v2737 = vunpack.c.h.b16 %v2124
    %v2738 = vunpack.c.l.b16 %v2125
    %v2739 = vunpack.c.h.b16 %v2125
    %v2740 = vunpack.c.l.b16 %v2126
    %v2741 = vunpack.c.h.b16 %v2126
    %v2742 = vunpack.c.l.b16 %v2127
    %v2743 = vunpack.c.h.b16 %v2127
    %v2744 = vunpack.c.l.b16 %v2128
    %v2745 = vunpack.c.h.b16 %v2128
    %v2746 = vunpack.c.l.b16 %v2129
    %v2747 = vunpack.c.h.b16 %v2129
    %v2748 = vunpack.c.l.b16 %v2130
    %v2749 = vunpack.c.h.b16 %v2130
    %v2750 = vunpack.c.l.b16 %v2131
    %v2751 = vunpack.c.h.b16 %v2131
    %v2752 = vunpack.c.l.b16 %v2132
    %v2753 = vunpack.c.h.b16 %v2132
    %v2754 = vunpack.c.l.b16 %v2133
    %v2755 = vunpack.c.h.b16 %v2133
    %v2756 = vunpack.c.l.b16 %v2134
    %v2757 = vunpack.c.h.b16 %v2134
    %v2758 = vunpack.c.l.b16 %v2135
    %v2759 = vunpack.c.h.b16 %v2135
    %v2760 = vunpack.c.l.b16 %v2136
    %v2761 = vunpack.c.h.b16 %v2136
    %v2762 = vunpack.c.l.b16 %v2137
    %v2763 = vunpack.c.h.b16 %v2137
    %v2764 = vunpack.c.l.b16 %v2138
    %v2765 = vunpack.c.h.b16 %v2138
    %v2766 = vunpack.c.l.b16 %v2139
    %v2767 = vunpack.c.h.b16 %v2139
    %v2768 = vunpack.c.l.b16 %v2140
    %v2769 = vunpack.c.h.b16 %v2140
    %v2770 = vunpack.c.l.b16 %v2141
    %v2771 = vunpack.c.h.b16 %v2141
    %v2772 = vunpack.c.l.b16 %v2142
    %v2773 = vunpack.c.h.b16 %v2142
    %v2774 = vunpack.c.l.b16 %v2143
    %v2775 = vunpack.c.h.b16 %v2143
    %v2776 = vunpack.c.l.b16 %v2144
    %v2777 = vunpack.c.h.b16 %v2144
    %v2778 = vunpack.c.l.b16 %v2145
    %v2779 = vunpack.c.h.b16 %v2145
    %v2780 = vunpack.c.l.b16 %v2146
    %v2781 = vunpack.c.h.b16 %v2146
    %v2782 = vunpack.c.l.b16 %v2147
    %v2783 = vunpack.c.h.b16 %v2147
    %v2784 = vunpack.c.l.b16 %v2148
    %v2785 = vunpack.c.h.b16 %v2148
    %v2786 = vunpack.c.l.b16 %v2149
    %v2787 = vunpack.c.h.b16 %v2149
    %v2788 = vunpack.c.l.b16 %v2150
    %v2789 = vunpack.c.h.b16 %v2150
    %v2790 = vunpack.c.l.b16 %v2151
    %v2791 = vunpack.c.h.b16 %v2151
    %v2792 = vunpack.c.l.b16 %v2152
    %v2793 = vunpack.c.h.b16 %v2152
    %v2794 = vunpack.c.l.b16 %v2153
    %v2795 = vunpack.c.h.b16 %v2153
    %v2796 = vunpack.c.l.b16 %v2154
    %v2797 = vunpack.c.h.b16 %v2154
    %v2798 = vunpack.c.l.b16 %v2155
    %v2799 = vunpack.c.h.b16 %v2155
    %v2800 = vunpack.c.l.b16 %v2156
    %v2801 = vunpack.c.h.b16 %v2156
    %v2802 = vunpack.c.l.b16 %v2157
    %v2803 = vunpack.c.h.b16 %v2157
    %v2804 = vunpack.c.l.b16 %v2158
    %v2805 = vunpack.c.h.b16 %v2158
    %v2806 = vunpack.c.l.b16 %v2159
    %v2807 = vunpack.c.h.b16 %v2159
    %v2808 = vunpack.c.l.b16 %v2160
    %v2809 = vunpack.c.h.b16 %v2160
    %v2810 = vunpack.c.l.b16 %v2161
    %v2811 = vunpack.c.h.b16 %v2161
    %v2812 = vunpack.c.l.b16 %v2162
    %v2813 = vunpack.c.h.b16 %v2162
    %v2814 = vunpack.c.l.b16 %v2163
    %v2815 = vunpack.c.h.b16 %v2163
    %v2816 = vunpack.c.l.b16 %v2164
    %v2817 = vunpack.c.h.b16 %v2164
    %v2818 = vunpack.c.l.b16 %v2165
    %v2819 = vunpack.c.h.b16 %v2165
    %v2820 = vunpack.c.l.b16 %v2166
    %v2821 = vunpack.c.h.b16 %v2166
    %v2822 = vunpack.c.l.b16 %v2167
    %v2823 = vunpack.c.h.b16 %v2167
    %v2824 = vunpack.c.l.b16 %v2168
    %v2825 = vunpack.c.h.b16 %v2168
    %v2826 = vunpack.c.l.b16 %v2169
    %v2827 = vunpack.c.h.b16 %v2169
    %v2828 = vunpack.c.l.b16 %v2170
    %v2829 = vunpack.c.h.b16 %v2170
    %v2830 = vunpack.c.l.b16 %v2171
    %v2831 = vunpack.c.h.b16 %v2171
    %v2832 = vunpack.c.l.b16 %v2172
    %v2833 = vunpack.c.h.b16 %v2172
    %v2834 = vunpack.c.l.b16 %v2173
    %v2835 = vunpack.c.h.b16 %v2173
    %v2836 = vunpack.c.l.b16 %v2174
    %v2837 = vunpack.c.h.b16 %v2174
    %v2838 = vunpack.c.l.b16 %v2175
    %v2839 = vunpack.c.h.b16 %v2175
    %v2840 = vunpack.c.l.b16 %v2176
    %v2841 = vunpack.c.h.b16 %v2176
    %v2842 = vunpack.c.l.b16 %v2177
    %v2843 = vunpack.c.h.b16 %v2177
    %v2844 = vunpack.c.l.b16 %v2178
    %v2845 = vunpack.c.h.b16 %v2178
    %v2846 = vunpack.c.l.b16 %v2179
    %v2847 = vunpack.c.h.b16 %v2179
    %v2848 = vunpack.c.l.b16 %v2180
    %v2849 = vunpack.c.h.b16 %v2180
    %v2850 = vunpack.c.l.b16 %v2181
    %v2851 = vunpack.c.h.b16 %v2181
    %v2852 = vunpack.c.l.b16 %v2182
    %v2853 = vunpack.c.h.b16 %v2182
    %v2854 = vunpack.c.l.b16 %v2183
    %v2855 = vunpack.c.h.b16 %v2183
    %v2856 = vunpack.c.l.b16 %v2184
    %v2857 = vunpack.c.h.b16 %v2184
    %v2858 = vunpack.c.l.b16 %v2185
    %v2859 = vunpack.c.h.b16 %v2185
    %v2860 = vunpack.c.l.b16 %v2186
    %v2861 = vunpack.c.h.b16 %v2186
    %v2862 = vunpack.c.l.b16 %v2187
    %v2863 = vunpack.c.h.b16 %v2187
    %v2864 = vunpack.c.l.b16 %v2188
    %v2865 = vunpack.c.h.b16 %v2188
    %v2866 = vunpack.c.l.b16 %v2189
    %v2867 = vunpack.c.h.b16 %v2189
    %v2868 = vunpack.c.l.b16 %v2190
    %v2869 = vunpack.c.h.b16 %v2190
    %v2870 = vunpack.c.l.b16 %v2191
    %v2871 = vunpack.c.h.b16 %v2191
    %v2872 = vunpack.c.l.b16 %v2192
    %v2873 = vunpack.c.h.b16 %v2192
    %v2874 = vunpack.c.l.b16 %v2193
    %v2875 = vunpack.c.h.b16 %v2193
    %v2876 = vunpack.c.l.b16 %v2194
    %v2877 = vunpack.c.h.b16 %v2194
    %v2878 = vunpack.c.l.b16 %v2195
    %v2879 = vunpack.c.h.b16 %v2195
    %v2880 = vunpack.c.l.b16 %v2196
    %v2881 = vunpack.c.h.b16 %v2196
    %v2882 = vunpack.c.l.b16 %v2197
    %v2883 = vunpack.c.h.b16 %v2197
    %v2884 = vunpack.c.l.b16 %v2198
    %v2885 = vunpack.c.h.b16 %v2198
    %v2886 = vunpack.c.l.b16 %v2199
    %v2887 = vunpack.c.h.b16 %v2199
    %v2888 = vunpack.c.l.b16 %v2200
    %v2889 = vunpack.c.h.b16 %v2200
    %v2890 = vunpack.c.l.b16 %v2201
    %v2891 = vunpack.c.h.b16 %v2201
    %v2892 = vunpack.c.l.b16 %v2202
    %v2893 = vunpack.c.h.b16 %v2202
    %v2894 = vunpack.c.l.b16 %v2203
    %v2895 = vunpack.c.h.b16 %v2203
    %v2896 = vunpack.c.l.b16 %v2204
    %v2897 = vunpack.c.h.b16 %v2204
    %v2898 = vunpack.c.l.b16 %v2205
    %v2899 = vunpack.c.h.b16 %v2205
    %v2900 = vunpack.c.l.b16 %v2206
    %v2901 = vunpack.c.h.b16 %v2206
    %v2902 = vunpack.c.l.b16 %v2207
    %v2903 = vunpack.c.h.b16 %v2207
    %v2904 = vunpack.c.l.b16 %v2208
    %v2905 = vunpack.c.h.b16 %v2208
    %v2906 = vunpack.c.l.b16 %v2209
    %v2907 = vunpack.c.h.b16 %v2209
    %v2908 = vunpack.c.l.b16 %v2210
    %v2909 = vunpack.c.h.b16 %v2210
    %v2910 = vunpack.c.l.b16 %v2211
    %v2911 = vunpack.c.h.b16 %v2211
    %v2912 = vunpack.c.l.b16 %v2212
    %v2913 = vunpack.c.h.b16 %v2212
    %v2914 = vunpack.c.l.b16 %v2213
    %v2915 = vunpack.c.h.b16 %v2213
    %v2916 = vunpack.c.l.b16 %v2214
    %v2917 = vunpack.c.h.b16 %v2214
    %v2918 = vunpack.c.l.b16 %v2215
    %v2919 = vunpack.c.h.b16 %v2215
    %v2920 = vunpack.c.l.b16 %v2216
    %v2921 = vunpack.c.h.b16 %v2216
    %v2922 = vunpack.c.l.b16 %v2217
    %v2923 = vunpack.c.h.b16 %v2217
    %v2924 = vunpack.c.l.b16 %v2218
    %v2925 = vunpack.c.h.b16 %v2218
    %v2926 = vunpack.c.l.b16 %v2219
    %v2927 = vunpack.c.h.b16 %v2219
    %v2928 = vunpack.c.l.b16 %v2220
    %v2929 = vunpack.c.h.b16 %v2220
    %v2930 = vunpack.c.l.b16 %v2221
    %v2931 = vunpack.c.h.b16 %v2221
    %v2932 = vunpack.c.l.b16 %v2222
    %v2933 = vunpack.c.h.b16 %v2222
    %v2934 = vunpack.c.l.b16 %v2223
    %v2935 = vunpack.c.h.b16 %v2223
    %v2936 = vunpack.c.l.b16 %v2224
    %v2937 = vunpack.c.h.b16 %v2224
    %v2938 = vunpack.c.l.b16 %v2225
    %v2939 = vunpack.c.h.b16 %v2225
    %v2940 = vunpack.c.l.b16 %v2226
    %v2941 = vunpack.c.h.b16 %v2226
    %v2942 = vunpack.c.l.b16 %v2227
    %v2943 = vunpack.c.h.b16 %v2227
    %v2944 = vunpack.c.l.b16 %v2228
    %v2945 = vunpack.c.h.b16 %v2228
    %v2946 = vunpack.c.l.b16 %v2229
    %v2947 = vunpack.c.h.b16 %v2229
    %v2948 = vunpack.c.l.b16 %v2230
    %v2949 = vunpack.c.h.b16 %v2230
    %v2950 = vunpack.c.l.b16 %v2231
    %v2951 = vunpack.c.h.b16 %v2231
    %v2952 = vunpack.c.l.b16 %v2232
    %v2953 = vunpack.c.h.b16 %v2232
    %v2954 = vunpack.c.l.b16 %v2233
    %v2955 = vunpack.c.h.b16 %v2233
    %v2956 = vunpack.c.l.b16 %v2234
    %v2957 = vunpack.c.h.b16 %v2234
    %v2958 = vunpack.c.l.b16 %v2235
    %v2959 = vunpack.c.h.b16 %v2235
    %v2960 = vunpack.c.l.b16 %v2236
    %v2961 = vunpack.c.h.b16 %v2236
    %v2962 = vunpack.c.l.b16 %v2237
    %v2963 = vunpack.c.h.b16 %v2237
    %v2964 = vunpack.c.l.b16 %v2238
    %v2965 = vunpack.c.h.b16 %v2238
    %v2966 = vunpack.c.l.b16 %v2239
    %v2967 = vunpack.c.h.b16 %v2239
    %v2968 = vunpack.c.l.b16 %v2240
    %v2969 = vunpack.c.h.b16 %v2240
    %v2970 = vunpack.c.l.b16 %v2241
    %v2971 = vunpack.c.h.b16 %v2241
    %v2972 = vunpack.c.l.b16 %v2242
    %v2973 = vunpack.c.h.b16 %v2242
    %v2974 = vunpack.c.l.b16 %v2243
    %v2975 = vunpack.c.h.b16 %v2243
    %v2976 = vunpack.c.l.b16 %v2244
    %v2977 = vunpack.c.h.b16 %v2244
    %v2978 = vunpack.c.l.b16 %v2245
    %v2979 = vunpack.c.h.b16 %v2245
    %v2980 = vunpack.c.l.b16 %v2246
    %v2981 = vunpack.c.h.b16 %v2246
    %v2982 = vunpack.c.l.b16 %v2247
    %v2983 = vunpack.c.h.b16 %v2247
    %v2984 = vunpack.c.l.b16 %v2248
    %v2985 = vunpack.c.h.b16 %v2248
    %v2986 = vunpack.c.l.b16 %v2249
    %v2987 = vunpack.c.h.b16 %v2249
    %v2988 = vunpack.c.l.b16 %v2250
    %v2989 = vunpack.c.h.b16 %v2250
    %v2990 = vunpack.c.l.b16 %v2251
    %v2991 = vunpack.c.h.b16 %v2251
    %v2992 = vunpack.c.l.b16 %v2252
    %v2993 = vunpack.c.h.b16 %v2252
    %v2994 = vunpack.c.l.b16 %v2253
    %v2995 = vunpack.c.h.b16 %v2253
    %v2996 = vunpack.c.l.b16 %v2254
    %v2997 = vunpack.c.h.b16 %v2254
    %v2998 = vunpack.c.l.b16 %v2255
    %v2999 = vunpack.c.h.b16 %v2255
    %v3000 = vunpack.c.l.b16 %v2256
    %v3001 = vunpack.c.h.b16 %v2256
    %v3002 = vunpack.c.l.b16 %v2257
    %v3003 = vunpack.c.h.b16 %v2257
    %v3004 = vunpack.c.l.b16 %v2258
    %v3005 = vunpack.c.h.b16 %v2258
    %v3006 = vunpack.c.l.b16 %v2259
    %v3007 = vunpack.c.h.b16 %v2259
    %v3008 = vunpack.c.l.b16 %v2260
    %v3009 = vunpack.c.h.b16 %v2260
    %v3010 = vunpack.c.l.b16 %v2261
    %v3011 = vunpack.c.h.b16 %v2261
    %v3012 = vunpack.c.l.b16 %v2262
    %v3013 = vunpack.c.h.b16 %v2262
    %v3014 = vunpack.c.l.b16 %v2263
    %v3015 = vunpack.c.h.b16 %v2263
    %v3016 = vunpack.c.l.b16 %v2264
    %v3017 = vunpack.c.h.b16 %v2264
    %v3018 = vunpack.c.l.b16 %v2265
    %v3019 = vunpack.c.h.b16 %v2265
    %v3020 = vunpack.c.l.b16 %v2266
    %v3021 = vunpack.c.h.b16 %v2266
    %v3022 = vunpack.c.l.b16 %v2267
    %v3023 = vunpack.c.h.b16 %v2267
    %v3024 = vunpack.c.l.b16 %v2268
    %v3025 = vunpack.c.h.b16 %v2268
    %v3026 = vunpack.c.l.b16 %v2269
    %v3027 = vunpack.c.h.b16 %v2269
    %v3028 = vunpack.c.l.b16 %v2270
    %v3029 = vunpack.c.h.b16 %v2270
    %v3030 = vunpack.c.l.b16 %v2271
    %v3031 = vunpack.c.h.b16 %v2271
    %v3032 = vunpack.c.l.b16 %v2272
    %v3033 = vunpack.c.h.b16 %v2272
    %v3034 = vunpack.c.l.b16 %v2273
    %v3035 = vunpack.c.h.b16 %v2273
    %v3036 = vunpack.c.l.b16 %v2274
    %v3037 = vunpack.c.h.b16 %v2274
    %v3038 = vunpack.c.l.b16 %v2275
    %v3039 = vunpack.c.h.b16 %v2275
    %v3040 = vunpack.c.l.b16 %v2276
    %v3041 = vunpack.c.h.b16 %v2276
    %v3042 = vunpack.c.l.b16 %v2277
    %v3043 = vunpack.c.h.b16 %v2277
    %v3044 = vunpack.c.l.b16 %v2278
    %v3045 = vunpack.c.h.b16 %v2278
    %v3046 = vunpack.c.l.b16 %v2279
    %v3047 = vunpack.c.h.b16 %v2279
    %v3048 = vunpack.c.l.b16 %v2280
    %v3049 = vunpack.c.h.b16 %v2280
    %v3050 = vunpack.c.l.b16 %v2281
    %v3051 = vunpack.c.h.b16 %v2281
    %v3052 = vunpack.c.l.b16 %v2282
    %v3053 = vunpack.c.h.b16 %v2282
    %v3054 = vunpack.c.l.b16 %v2283
    %v3055 = vunpack.c.h.b16 %v2283
    %v3056 = vunpack.c.l.b16 %v2284
    %v3057 = vunpack.c.h.b16 %v2284
    %v3058 = vunpack.c.l.b16 %v2285
    %v3059 = vunpack.c.h.b16 %v2285
    %v3060 = vunpack.c.l.b16 %v2286
    %v3061 = vunpack.c.h.b16 %v2286
    %v3062 = vunpack.c.l.b16 %v2287
    %v3063 = vunpack.c.h.b16 %v2287
    %v3064 = vunpack.c.l.b16 %v2288
    %v3065 = vunpack.c.h.b16 %v2288
    %v3066 = vunpack.c.l.b16 %v2289
    %v3067 = vunpack.c.h.b16 %v2289
    %v3068 = vunpack.c.l.b16 %v2290
    %v3069 = vunpack.c.h.b16 %v2290
    %v3070 = vunpack.c.l.b16 %v2291
    %v3071 = vunpack.c.h.b16 %v2291
    %v3072 = vunpack.c.l.b16 %v2292
    %v3073 = vunpack.c.h.b16 %v2292
    %v3074 = vunpack.c.l.b16 %v2293
    %v3075 = vunpack.c.h.b16 %v2293
    %v3076 = vunpack.c.l.b16 %v2294
    %v3077 = vunpack.c.h.b16 %v2294
    %v3078 = vunpack.c.l.b16 %v2295
    %v3079 = vunpack.c.h.b16 %v2295
    %v3080 = vunpack.c.l.b16 %v2296
    %v3081 = vunpack.c.h.b16 %v2296
    %v3082 = vunpack.c.l.b16 %v2297
    %v3083 = vunpack.c.h.b16 %v2297
    %v3084 = vunpack.c.l.b16 %v2298
    %v3085 = vunpack.c.h.b16 %v2298
    %v3086 = vunpack.c.l.b16 %v2299
    %v3087 = vunpack.c.h.b16 %v2299
    %v3088 = vunpack.c.l.b16 %v2300
    %v3089 = vunpack.c.h.b16 %v2300
    %v3090 = vunpack.c.l.b16 %v2301
    %v3091 = vunpack.c.h.b16 %v2301
    %v3092 = vunpack.c.l.b16 %v2302
    %v3093 = vunpack.c.h.b16 %v2302
    %v3094 = vunpack.c.l.b16 %v2303
    %v3095 = vunpack.c.h.b16 %v2303
    %v3096 = vunpack.c.l.b16 %v2304
    %v3097 = vunpack.c.h.b16 %v2304
    %v3098 = vunpack.c.l.b16 %v2305
    %v3099 = vunpack.c.h.b16 %v2305
    %v3100 = vunpack.c.l.b16 %v2306
    %v3101 = vunpack.c.h.b16 %v2306
    %v3102 = vunpack.c.l.b16 %v2307
    %v3103 = vunpack.c.h.b16 %v2307
    %v3104 = vunpack.c.l.b16 %v2308
    %v3105 = vunpack.c.h.b16 %v2308
    %v3106 = vunpack.c.l.b16 %v2309
    %v3107 = vunpack.c.h.b16 %v2309
    %v3108 = vunpack.c.l.b16 %v2310
    %v3109 = vunpack.c.h.b16 %v2310
    %v3110 = vunpack.c.l.b16 %v2311
    %v3111 = vunpack.c.h.b16 %v2311
    %v3112 = vunpack.c.l.b16 %v2312
    %v3113 = vunpack.c.h.b16 %v2312
    %v3114 = vunpack.c.l.b16 %v2313
    %v3115 = vunpack.c.h.b16 %v2313
    %v3116 = vunpack.c.l.b16 %v2314
    %v3117 = vunpack.c.h.b16 %v2314
    %v3118 = vunpack.c.l.b16 %v2315
    %v3119 = vunpack.c.h.b16 %v2315
    %v3120 = vunpack.c.l.b16 %v2316
    %v3121 = vunpack.c.h.b16 %v2316
    %v3122 = vunpack.c.l.b16 %v2317
    %v3123 = vunpack.c.h.b16 %v2317
    %v3124 = vunpack.c.l.b16 %v2318
    %v3125 = vunpack.c.h.b16 %v2318
    %v3126 = vunpack.c.l.b16 %v2319
    %v3127 = vunpack.c.h.b16 %v2319
    %v3128 = vunpack.c.l.b16 %v2320
    %v3129 = vunpack.c.h.b16 %v2320
    %v3130 = vunpack.c.l.b16 %v2321
    %v3131 = vunpack.c.h.b16 %v2321
    %v3132 = vpack.c.b16 %v2628, %v2620
    %v3133 = vpack.c.b16 %v2629, %v2621
    %v3134 = vpack.c.b16 %v2630, %v2622
    %v3135 = vpack.c.b16 %v2631, %v2623
    %v3136 = vpack.c.b16 %v2632, %v2624
    %v3137 = vpack.c.b16 %v2633, %v2625
    %v3138 = vpack.c.b16 %v2634, %v2626
    %v3139 = vpack.c.b16 %v2635, %v2627
    %v3140 = vpack.c.b16 %v2644, %v2636
    %v3141 = vpack.c.b16 %v2645, %v2637
    %v3142 = vpack.c.b16 %v2646, %v2638
    %v3143 = vpack.c.b16 %v2647, %v2639
    %v3144 = vpack.c.b16 %v2648, %v2640
    %v3145 = vpack.c.b16 %v2649, %v2641
    %v3146 = vpack.c.b16 %v2650, %v2642
    %v3147 = vpack.c.b16 %v2651, %v2643
    %v3148 = vpack.c.b16 %v2660, %v2652
    %v3149 = vpack.c.b16 %v2661, %v2653
    %v3150 = vpack.c.b16 %v2662, %v2654
    %v3151 = vpack.c.b16 %v2663, %v2655
    %v3152 = vpack.c.b16 %v2664, %v2656
    %v3153 = vpack.c.b16 %v2665, %v2657
    %v3154 = vpack.c.b16 %v2666, %v2658
    %v3155 = vpack.c.b16 %v2667, %v2659
    %v3156 = vpack.c.b16 %v2676, %v2668
    %v3157 = vpack.c.b16 %v2677, %v2669
    %v3158 = vpack.c.b16 %v2678, %v2670
    %v3159 = vpack.c.b16 %v2679, %v2671
    %v3160 = vpack.c.b16 %v2680, %v2672
    %v3161 = vpack.c.b16 %v2681, %v2673
    %v3162 = vpack.c.b16 %v2682, %v2674
    %v3163 = vpack.c.b16 %v2683, %v2675
    %v3164 = vpack.c.b16 %v2692, %v2684
    %v3165 = vpack.c.b16 %v2693, %v2685
    %v3166 = vpack.c.b16 %v2694, %v2686
    %v3167 = vpack.c.b16 %v2695, %v2687
    %v3168 = vpack.c.b16 %v2696, %v2688
    %v3169 = vpack.c.b16 %v2697, %v2689
    %v3170 = vpack.c.b16 %v2698, %v2690
    %v3171 = vpack.c.b16 %v2699, %v2691
    %v3172 = vpack.c.b16 %v2708, %v2700
    %v3173 = vpack.c.b16 %v2709, %v2701
    %v3174 = vpack.c.b16 %v2710, %v2702
    %v3175 = vpack.c.b16 %v2711, %v2703
    %v3176 = vpack.c.b16 %v2712, %v2704
    %v3177 = vpack.c.b16 %v2713, %v2705
    %v3178 = vpack.c.b16 %v2714, %v2706
    %v3179 = vpack.c.b16 %v2715, %v2707
    %v3180 = vpack.c.b16 %v2724, %v2716
    %v3181 = vpack.c.b16 %v2725, %v2717
    %v3182 = vpack.c.b16 %v2726, %v2718
    %v3183 = vpack.c.b16 %v2727, %v2719
    %v3184 = vpack.c.b16 %v2728, %v2720
    %v3185 = vpack.c.b16 %v2729, %v2721
    %v3186 = vpack.c.b16 %v2730, %v2722
    %v3187 = vpack.c.b16 %v2731, %v2723
    %v3188 = vpack.c.b16 %v2740, %v2732
    %v3189 = vpack.c.b16 %v2741, %v2733
    %v3190 = vpack.c.b16 %v2742, %v2734
    %v3191 = vpack.c.b16 %v2743, %v2735
    %v3192 = vpack.c.b16 %v2744, %v2736
    %v3193 = vpack.c.b16 %v2745, %v2737
    %v3194 = vpack.c.b16 %v2746, %v2738
    %v3195 = vpack.c.b16 %v2747, %v2739
    %v3196 = vpack.c.b16 %v2756, %v2748
    %v3197 = vpack.c.b16 %v2757, %v2749
    %v3198 = vpack.c.b16 %v2758, %v2750
    %v3199 = vpack.c.b16 %v2759, %v2751
    %v3200 = vpack.c.b16 %v2760, %v2752
    %v3201 = vpack.c.b16 %v2761, %v2753
    %v3202 = vpack.c.b16 %v2762, %v2754
    %v3203 = vpack.c.b16 %v2763, %v2755
    %v3204 = vpack.c.b16 %v2772, %v2764
    %v3205 = vpack.c.b16 %v2773, %v2765
    %v3206 = vpack.c.b16 %v2774, %v2766
    %v3207 = vpack.c.b16 %v2775, %v2767
    %v3208 = vpack.c.b16 %v2776, %v2768
    %v3209 = vpack.c.b16 %v2777, %v2769
    %v3210 = vpack.c.b16 %v2778, %v2770
    %v3211 = vpack.c.b16 %v2779, %v2771
    %v3212 = vpack.c.b16 %v2788, %v2780
    %v3213 = vpack.c.b16 %v2789, %v2781
    %v3214 = vpack.c.b16 %v2790, %v2782
    %v3215 = vpack.c.b16 %v2791, %v2783
    %v3216 = vpack.c.b16 %v2792, %v2784
    %v3217 = vpack.c.b16 %v2793, %v2785
    %v3218 = vpack.c.b16 %v2794, %v2786
    %v3219 = vpack.c.b16 %v2795, %v2787
    %v3220 = vpack.c.b16 %v2804, %v2796
    %v3221 = vpack.c.b16 %v2805, %v2797
    %v3222 = vpack.c.b16 %v2806, %v2798
    %v3223 = vpack.c.b16 %v2807, %v2799
    %v3224 = vpack.c.b16 %v2808, %v2800
    %v3225 = vpack.c.b16 %v2809, %v2801
    %v3226 = vpack.c.b16 %v2810, %v2802
    %v3227 = vpack.c.b16 %v2811, %v2803
    %v3228 = vpack.c.b16 %v2820, %v2812
    %v3229 = vpack.c.b16 %v2821, %v2813
    %v3230 = vpack.c.b16 %v2822, %v2814
    %v3231 = vpack.c.b16 %v2823, %v2815
    %v3232 = vpack.c.b16 %v2824, %v2816
    %v3233 = vpack.c.b16 %v2825, %v2817
    %v3234 = vpack.c.b16 %v2826, %v2818
    %v3235 = vpack.c.b16 %v2827, %v2819
    %v3236 = vpack.c.b16 %v2836, %v2828
    %v3237 = vpack.c.b16 %v2837, %v2829
    %v3238 = vpack.c.b16 %v2838, %v2830
    %v3239 = vpack.c.b16 %v2839, %v2831
    %v3240 = vpack.c.b16 %v2840, %v2832
    %v3241 = vpack.c.b16 %v2841, %v2833
    %v3242 = vpack.c.b16 %v2842, %v2834
    %v3243 = vpack.c.b16 %v2843, %v2835
    %v3244 = vpack.c.b16 %v2852, %v2844
    %v3245 = vpack.c.b16 %v2853, %v2845
    %v3246 = vpack.c.b16 %v2854, %v2846
    %v3247 = vpack.c.b16 %v2855, %v2847
    %v3248 = vpack.c.b16 %v2856, %v2848
    %v3249 = vpack.c.b16 %v2857, %v2849
    %v3250 = vpack.c.b16 %v2858, %v2850
    %v3251 = vpack.c.b16 %v2859, %v2851
    %v3252 = vpack.c.b16 %v2868, %v2860
    %v3253 = vpack.c.b16 %v2869, %v2861
    %v3254 = vpack.c.b16 %v2870, %v2862
    %v3255 = vpack.c.b16 %v2871, %v2863
    %v3256 = vpack.c.b16 %v2872, %v2864
    %v3257 = vpack.c.b16 %v2873, %v2865
    %v3258 = vpack.c.b16 %v2874, %v2866
    %v3259 = vpack.c.b16 %v2875, %v2867
    %v3260 = vpack.c.b16 %v2884, %v2876
    %v3261 = vpack.c.b16 %v2885, %v2877
    %v3262 = vpack.c.b16 %v2886, %v2878
    %v3263 = vpack.c.b16 %v2887, %v2879
    %v3264 = vpack.c.b16 %v2888, %v2880
    %v3265 = vpack.c.b16 %v2889, %v2881
    %v3266 = vpack.c.b16 %v2890, %v2882
    %v3267 = vpack.c.b16 %v2891, %v2883
    %v3268 = vpack.c.b16 %v2900, %v2892
    %v3269 = vpack.c.b16 %v2901, %v2893
    %v3270 = vpack.c.b16 %v2902, %v2894
    %v3271 = vpack.c.b16 %v2903, %v2895
    %v3272 = vpack.c.b16 %v2904, %v2896
    %v3273 = vpack.c.b16 %v2905, %v2897
    %v3274 = vpack.c.b16 %v2906, %v2898
    %v3275 = vpack.c.b16 %v2907, %v2899
    %v3276 = vpack.c.b16 %v2916, %v2908
    %v3277 = vpack.c.b16 %v2917, %v2909
    %v3278 = vpack.c.b16 %v2918, %v2910
    %v3279 = vpack.c.b16 %v2919, %v2911
    %v3280 = vpack.c.b16 %v2920, %v2912
    %v3281 = vpack.c.b16 %v2921, %v2913
    %v3282 = vpack.c.b16 %v2922, %v2914
    %v3283 = vpack.c.b16 %v2923, %v2915
    %v3284 = vpack.c.b16 %v2932, %v2924
    %v3285 = vpack.c.b16 %v2933, %v2925
    %v3286 = vpack.c.b16 %v2934, %v2926
    %v3287 = vpack.c.b16 %v2935, %v2927
    %v3288 = vpack.c.b16 %v2936, %v2928
    %v3289 = vpack.c.b16 %v2937, %v2929
    %v3290 = vpack.c.b16 %v2938, %v2930
    %v3291 = vpack.c.b16 %v2939, %v2931
    %v3292 = vpack.c.b16 %v2948, %v2940
    %v3293 = vpack.c.b16 %v2949, %v2941
    %v3294 = vpack.c.b16 %v2950, %v2942
    %v3295 = vpack.c.b16 %v2951, %v2943
    %v3296 = vpack.c.b16 %v2952, %v2944
    %v3297 = vpack.c.b16 %v2953, %v2945
    %v3298 = vpack.c.b16 %v2954, %v2946
    %v3299 = vpack.c.b16 %v2955, %v2947
    %v3300 = vpack.c.b16 %v2964, %v2956
    %v3301 = vpack.c.b16 %v2965, %v2957
    %v3302 = vpack.c.b16 %v2966, %v2958
    %v3303 = vpack.c.b16 %v2967, %v2959
    %v3304 = vpack.c.b16 %v2968, %v2960
    %v3305 = vpack.c.b16 %v2969, %v2961
    %v3306 = vpack.c.b16 %v2970, %v2962
    %v3307 = vpack.c.b16 %v2971, %v2963
    %v3308 = vpack.c.b16 %v2980, %v2972
    %v3309 = vpack.c.b16 %v2981, %v2973
    %v3310 = vpack.c.b16 %v2982, %v2974
    %v3311 = vpack.c.b16 %v2983, %v2975
    %v3312 = vpack.c.b16 %v2984, %v2976
    %v3313 = vpack.c.b16 %v2985, %v2977
    %v3314 = vpack.c.b16 %v2986, %v2978
    %v3315 = vpack.c.b16 %v2987, %v2979
    %v3316 = vpack.c.b16 %v2996, %v2988
    %v3317 = vpack.c.b16 %v2997, %v2989
    %v3318 = vpack.c.b16 %v2998, %v2990
    %v3319 = vpack.c.b16 %v2999, %v2991
    %v3320 = vpack.c.b16 %v3000, %v2992
    %v3321 = vpack.c.b16 %v3001, %v2993
    %v3322 = vpack.c.b16 %v3002, %v2994
    %v3323 = vpack.c.b16 %v3003, %v2995
    %v3324 = vpack.c.b16 %v3012, %v3004
    %v3325 = vpack.c.b16 %v3013, %v3005
    %v3326 = vpack.c.b16 %v3014, %v3006
    %v3327 = vpack.c.b16 %v3015, %v3007
    %v3328 = vpack.c.b16 %v3016, %v3008
    %v3329 = vpack.c.b16 %v3017, %v3009
    %v3330 = vpack.c.b16 %v3018, %v3010
    %v3331 = vpack.c.b16 %v3019, %v3011
    %v3332 = vpack.c.b16 %v3028, %v3020
    %v3333 = vpack.c.b16 %v3029, %v3021
    %v3334 = vpack.c.b16 %v3030, %v3022
    %v3335 = vpack.c.b16 %v3031, %v3023
    %v3336 = vpack.c.b16 %v3032, %v3024
    %v3337 = vpack.c.b16 %v3033, %v3025
    %v3338 = vpack.c.b16 %v3034, %v3026
    %v3339 = vpack.c.b16 %v3035, %v3027
    %v3340 = vpack.c.b16 %v3044, %v3036
    %v3341 = vpack.c.b16 %v3045, %v3037
    %v3342 = vpack.c.b16 %v3046, %v3038
    %v3343 = vpack.c.b16 %v3047, %v3039
    %v3344 = vpack.c.b16 %v3048, %v3040
    %v3345 = vpack.c.b16 %v3049, %v3041
    %v3346 = vpack.c.b16 %v3050, %v3042
    %v3347 = vpack.c.b16 %v3051, %v3043
    %v3348 = vpack.c.b16 %v3060, %v3052
    %v3349 = vpack.c.b16 %v3061, %v3053
    %v3350 = vpack.c.b16 %v3062, %v3054
    %v3351 = vpack.c.b16 %v3063, %v3055
    %v3352 = vpack.c.b16 %v3064, %v3056
    %v3353 = vpack.c.b16 %v3065, %v3057
    %v3354 = vpack.c.b16 %v3066, %v3058
    %v3355 = vpack.c.b16 %v3067, %v3059
    %v3356 = vpack.c.b16 %v3076, %v3068
    %v3357 = vpack.c.b16 %v3077, %v3069
    %v3358 = vpack.c.b16 %v3078, %v3070
    %v3359 = vpack.c.b16 %v3079, %v3071
    %v3360 = vpack.c.b16 %v3080, %v3072
    %v3361 = vpack.c.b16 %v3081, %v3073
    %v3362 = vpack.c.b16 %v3082, %v3074
    %v3363 = vpack.c.b16 %v3083, %v3075
    %v3364 = vpack.c.b16 %v3092, %v3084
    %v3365 = vpack.c.b16 %v3093, %v3085
    %v3366 = vpack.c.b16 %v3094, %v3086
    %v3367 = vpack.c.b16 %v3095, %v3087
    %v3368 = vpack.c.b16 %v3096, %v3088
    %v3369 = vpack.c.b16 %v3097, %v3089
    %v3370 = vpack.c.b16 %v3098, %v3090
    %v3371 = vpack.c.b16 %v3099, %v3091
    %v3372 = vpack.c.b16 %v3108, %v3100
    %v3373 = vpack.c.b16 %v3109, %v3101
    %v3374 = vpack.c.b16 %v3110, %v3102
    %v3375 = vpack.c.b16 %v3111, %v3103
    %v3376 = vpack.c.b16 %v3112, %v3104
    %v3377 = vpack.c.b16 %v3113, %v3105
    %v3378 = vpack.c.b16 %v3114, %v3106
    %v3379 = vpack.c.b16 %v3115, %v3107
    %v3380 = vpack.c.b16 %v3124, %v3116
    %v3381 = vpack.c.b16 %v3125, %v3117
    %v3382 = vpack.c.b16 %v3126, %v3118
    %v3383 = vpack.c.b16 %v3127, %v3119
    %v3384 = vpack.c.b16 %v3128, %v3120
    %v3385 = vpack.c.b16 %v3129, %v3121
    %v3386 = vpack.c.b16 %v3130, %v3122
    %v3387 = vpack.c.b16 %v3131, %v3123
    %3644 = vmatprep.subr.bf16.mxu0 %v3133
    %3645 = vmatpush1.bf16.msra.mxu0 %v3132
    %3646 = vmatprep.subr.bf16.mxu0 %v3141
    %3647 = vmatpush1.bf16.msra.mxu0 %v3140
    %3648 = vmatprep.subr.bf16.mxu0 %v3149
    %3649 = vmatpush1.bf16.msra.mxu0 %v3148
    %3650 = vmatprep.subr.bf16.mxu0 %v3157
    %3651 = vmatpush1.bf16.msra.mxu0 %v3156
    %3652 = vmatprep.subr.bf16.mxu0 %v3165
    %3653 = vmatpush1.bf16.msra.mxu0 %v3164
    %3654 = vmatprep.subr.bf16.mxu0 %v3173
    %3655 = vmatpush1.bf16.msra.mxu0 %v3172
    %3656 = vmatprep.subr.bf16.mxu0 %v3181
    %3657 = vmatpush1.bf16.msra.mxu0 %v3180
    %3658 = vmatprep.subr.bf16.mxu0 %v3189
    %3659 = vmatpush1.bf16.msra.mxu0 %v3188
    %3660 = vmatprep.subr.bf16.mxu0 %v3197
    %3661 = vmatpush1.bf16.msra.mxu0 %v3196
    %3662 = vmatprep.subr.bf16.mxu0 %v3205
    %3663 = vmatpush1.bf16.msra.mxu0 %v3204
    %3664 = vmatprep.subr.bf16.mxu0 %v3213
    %3665 = vmatpush1.bf16.msra.mxu0 %v3212
    %3666 = vmatprep.subr.bf16.mxu0 %v3221
    %3667 = vmatpush1.bf16.msra.mxu0 %v3220
    %3668 = vmatprep.subr.bf16.mxu0 %v3229
    %3669 = vmatpush1.bf16.msra.mxu0 %v3228
    %3670 = vmatprep.subr.bf16.mxu0 %v3237
    %3671 = vmatpush1.bf16.msra.mxu0 %v3236
    %3672 = vmatprep.subr.bf16.mxu0 %v3245
    %3673 = vmatpush1.bf16.msra.mxu0 %v3244
    %3674 = vmatprep.subr.bf16.mxu0 %v3253
    %3675 = vmatpush1.bf16.msra.mxu0 %v3252
    %3676 = vmatprep.mubr.bf16.mxu0 %v2063
    %3677 = vmatmul.mubr.bf16.gmra.mrb[0].mxu0 %v2062
    %v3678 = vpop.f32.mrb[0].mxu0
    %v3679 = vadd.f32 %v2327, %v3678
    %v3680 = vpop.f32.mrb[0].mxu0
    %v3681 = vadd.f32 %v2331, %v3680
    %v3682 = vpop.f32.mrb[0].mxu0
    %v3683 = vadd.f32 %v2327, %v3682
    %v3684 = vpop.f32.mrb[0].mxu0
    %v3685 = vadd.f32 %v2331, %v3684
    %3686 = vdwg.mxu0
    %3687 = vmatprep.subr.bf16.mxu0 %v3261
    %3688 = vmatpush1.bf16.msra.mxu0 %v3260
    %3689 = vmatprep.subr.bf16.mxu0 %v3269
    %3690 = vmatpush1.bf16.msra.mxu0 %v3268
    %3691 = vmatprep.subr.bf16.mxu0 %v3277
    %3692 = vmatpush1.bf16.msra.mxu0 %v3276
    %3693 = vmatprep.subr.bf16.mxu0 %v3285
    %3694 = vmatpush1.bf16.msra.mxu0 %v3284
    %3695 = vmatprep.subr.bf16.mxu0 %v3293
    %3696 = vmatpush1.bf16.msra.mxu0 %v3292
    %3697 = vmatprep.subr.bf16.mxu0 %v3301
    %3698 = vmatpush1.bf16.msra.mxu0 %v3300
    %3699 = vmatprep.subr.bf16.mxu0 %v3309
    %3700 = vmatpush1.bf16.msra.mxu0 %v3308
    %3701 = vmatprep.subr.bf16.mxu0 %v3317
    %3702 = vmatpush1.bf16.msra.mxu0 %v3316
    %3703 = vmatprep.subr.bf16.mxu0 %v3325
    %3704 = vmatpush1.bf16.msra.mxu0 %v3324
    %3705 = vmatprep.subr.bf16.mxu0 %v3333
    %3706 = vmatpush1.bf16.msra.mxu0 %v3332
    %3707 = vmatprep.subr.bf16.mxu0 %v3341
    %3708 = vmatpush1.bf16.msra.mxu0 %v3340
    %3709 = vmatprep.subr.bf16.mxu0 %v3349
    %3710 = vmatpush1.bf16.msra.mxu0 %v3348
    %3711 = vmatprep.subr.bf16.mxu0 %v3357
    %3712 = vmatpush1.bf16.msra.mxu0 %v3356
    %3713 = vmatprep.subr.bf16.mxu0 %v3365
    %3714 = vmatpush1.bf16.msra.mxu0 %v3364
    %3715 = vmatprep.subr.bf16.mxu0 %v3373
    %3716 = vmatpush1.bf16.msra.mxu0 %v3372
    %3717 = vmatprep.subr.bf16.mxu0 %v3381
    %3718 = vmatpush1.bf16.msra.mxu0 %v3380
    %3719 = vmatprep.mubr.bf16.mxu0 %v2065
    %3720 = vmatmul.mubr.bf16.gmra.mrb[0].mxu0 %v2064
    %v3721 = vpop.f32.mrb[0].mxu0
    %v3722 = vadd.f32 %v3679, %v3721
    %v3723 = vpop.f32.mrb[0].mxu0
    %v3724 = vadd.f32 %v3681, %v3723
    %v3725 = vpop.f32.mrb[0].mxu0
    %v3726 = vadd.f32 %v3683, %v3725
    %v3727 = vpop.f32.mrb[0].mxu0
    %v3728 = vadd.f32 %v3685, %v3727
    %3729 = vdwg.mxu0
    %3730 = vmatprep.subr.bf16.mxu0 %v3135
    %3731 = vmatpush1.bf16.msra.mxu0 %v3134
    %3732 = vmatprep.subr.bf16.mxu0 %v3143
    %3733 = vmatpush1.bf16.msra.mxu0 %v3142
    %3734 = vmatprep.subr.bf16.mxu0 %v3151
    %3735 = vmatpush1.bf16.msra.mxu0 %v3150
    %3736 = vmatprep.subr.bf16.mxu0 %v3159
    %3737 = vmatpush1.bf16.msra.mxu0 %v3158
    %3738 = vmatprep.subr.bf16.mxu0 %v3167
    %3739 = vmatpush1.bf16.msra.mxu0 %v3166
    %3740 = vmatprep.subr.bf16.mxu0 %v3175
    %3741 = vmatpush1.bf16.msra.mxu0 %v3174
    %3742 = vmatprep.subr.bf16.mxu0 %v3183
    %3743 = vmatpush1.bf16.msra.mxu0 %v3182
    %3744 = vmatprep.subr.bf16.mxu0 %v3191
    %3745 = vmatpush1.bf16.msra.mxu0 %v3190
    %3746 = vmatprep.subr.bf16.mxu0 %v3199
    %3747 = vmatpush1.bf16.msra.mxu0 %v3198
    %3748 = vmatprep.subr.bf16.mxu0 %v3207
    %3749 = vmatpush1.bf16.msra.mxu0 %v3206
    %3750 = vmatprep.subr.bf16.mxu0 %v3215
    %3751 = vmatpush1.bf16.msra.mxu0 %v3214
    %3752 = vmatprep.subr.bf16.mxu0 %v3223
    %3753 = vmatpush1.bf16.msra.mxu0 %v3222
    %3754 = vmatprep.subr.bf16.mxu0 %v3231
    %3755 = vmatpush1.bf16.msra.mxu0 %v3230
    %3756 = vmatprep.subr.bf16.mxu0 %v3239
    %3757 = vmatpush1.bf16.msra.mxu0 %v3238
    %3758 = vmatprep.subr.bf16.mxu0 %v3247
    %3759 = vmatpush1.bf16.msra.mxu0 %v3246
    %3760 = vmatprep.subr.bf16.mxu0 %v3255
    %3761 = vmatpush1.bf16.msra.mxu0 %v3254
    %3762 = vmatprep.mubr.bf16.mxu0 %v2063
    %3763 = vmatmul.mubr.bf16.gmra.mrb[0].mxu0 %v2062
    %v3764 = vpop.f32.mrb[0].mxu0
    %v3765 = vadd.f32 %v2335, %v3764
    %v3766 = vpop.f32.mrb[0].mxu0
    %v3767 = vadd.f32 %v2339, %v3766
    %v3768 = vpop.f32.mrb[0].mxu0
    %v3769 = vadd.f32 %v2335, %v3768
    %v3770 = vpop.f32.mrb[0].mxu0
    %v3771 = vadd.f32 %v2339, %v3770
    %3772 = vdwg.mxu0
    %3773 = vmatprep.subr.bf16.mxu0 %v3263
    %3774 = vmatpush1.bf16.msra.mxu0 %v3262
    %3775 = vmatprep.subr.bf16.mxu0 %v3271
    %3776 = vmatpush1.bf16.msra.mxu0 %v3270
    %3777 = vmatprep.subr.bf16.mxu0 %v3279
    %3778 = vmatpush1.bf16.msra.mxu0 %v3278
    %3779 = vmatprep.subr.bf16.mxu0 %v3287
    %3780 = vmatpush1.bf16.msra.mxu0 %v3286
    %3781 = vmatprep.subr.bf16.mxu0 %v3295
    %3782 = vmatpush1.bf16.msra.mxu0 %v3294
    %3783 = vmatprep.subr.bf16.mxu0 %v3303
    %3784 = vmatpush1.bf16.msra.mxu0 %v3302
    %3785 = vmatprep.subr.bf16.mxu0 %v3311
    %3786 = vmatpush1.bf16.msra.mxu0 %v3310
    %3787 = vmatprep.subr.bf16.mxu0 %v3319
    %3788 = vmatpush1.bf16.msra.mxu0 %v3318
    %3789 = vmatprep.subr.bf16.mxu0 %v3327
    %3790 = vmatpush1.bf16.msra.mxu0 %v3326
    %3791 = vmatprep.subr.bf16.mxu0 %v3335
    %3792 = vmatpush1.bf16.msra.mxu0 %v3334
    %3793 = vmatprep.subr.bf16.mxu0 %v3343
    %3794 = vmatpush1.bf16.msra.mxu0 %v3342
    %3795 = vmatprep.subr.bf16.mxu0 %v3351
    %3796 = vmatpush1.bf16.msra.mxu0 %v3350
    %3797 = vmatprep.subr.bf16.mxu0 %v3359
    %3798 = vmatpush1.bf16.msra.mxu0 %v3358
    %3799 = vmatprep.subr.bf16.mxu0 %v3367
    %3800 = vmatpush1.bf16.msra.mxu0 %v3366
    %3801 = vmatprep.subr.bf16.mxu0 %v3375
    %3802 = vmatpush1.bf16.msra.mxu0 %v3374
    %3803 = vmatprep.subr.bf16.mxu0 %v3383
    %3804 = vmatpush1.bf16.msra.mxu0 %v3382
    %3805 = vmatprep.mubr.bf16.mxu0 %v2065
    %3806 = vmatmul.mubr.bf16.gmra.mrb[0].mxu0 %v2064
    %v3807 = vpop.f32.mrb[0].mxu0
    %v3808 = vadd.f32 %v3765, %v3807
    %v3809 = vpop.f32.mrb[0].mxu0
    %v3810 = vadd.f32 %v3767, %v3809
    %v3811 = vpop.f32.mrb[0].mxu0
    %v3812 = vadd.f32 %v3769, %v3811
    %v3813 = vpop.f32.mrb[0].mxu0
    %v3814 = vadd.f32 %v3771, %v3813
    %3815 = vdwg.mxu0
    %3816 = vmatprep.subr.bf16.mxu0 %v3137
    %3817 = vmatpush1.bf16.msra.mxu0 %v3136
    %3818 = vmatprep.subr.bf16.mxu0 %v3145
    %3819 = vmatpush1.bf16.msra.mxu0 %v3144
    %3820 = vmatprep.subr.bf16.mxu0 %v3153
    %3821 = vmatpush1.bf16.msra.mxu0 %v3152
    %3822 = vmatprep.subr.bf16.mxu0 %v3161
    %3823 = vmatpush1.bf16.msra.mxu0 %v3160
    %3824 = vmatprep.subr.bf16.mxu0 %v3169
    %3825 = vmatpush1.bf16.msra.mxu0 %v3168
    %3826 = vmatprep.subr.bf16.mxu0 %v3177
    %3827 = vmatpush1.bf16.msra.mxu0 %v3176
    %3828 = vmatprep.subr.bf16.mxu0 %v3185
    %3829 = vmatpush1.bf16.msra.mxu0 %v3184
    %3830 = vmatprep.subr.bf16.mxu0 %v3193
    %3831 = vmatpush1.bf16.msra.mxu0 %v3192
    %3832 = vmatprep.subr.bf16.mxu0 %v3201
    %3833 = vmatpush1.bf16.msra.mxu0 %v3200
    %3834 = vmatprep.subr.bf16.mxu0 %v3209
    %3835 = vmatpush1.bf16.msra.mxu0 %v3208
    %3836 = vmatprep.subr.bf16.mxu0 %v3217
    %3837 = vmatpush1.bf16.msra.mxu0 %v3216
    %3838 = vmatprep.subr.bf16.mxu0 %v3225
    %3839 = vmatpush1.bf16.msra.mxu0 %v3224
    %3840 = vmatprep.subr.bf16.mxu0 %v3233
    %3841 = vmatpush1.bf16.msra.mxu0 %v3232
    %3842 = vmatprep.subr.bf16.mxu0 %v3241
    %3843 = vmatpush1.bf16.msra.mxu0 %v3240
    %3844 = vmatprep.subr.bf16.mxu0 %v3249
    %3845 = vmatpush1.bf16.msra.mxu0 %v3248
    %3846 = vmatprep.subr.bf16.mxu0 %v3257
    %3847 = vmatpush1.bf16.msra.mxu0 %v3256
    %3848 = vmatprep.mubr.bf16.mxu0 %v2063
    %3849 = vmatmul.mubr.bf16.gmra.mrb[0].mxu0 %v2062
    %v3850 = vpop.f32.mrb[0].mxu0
    %v3851 = vadd.f32 %v2343, %v3850
    %v3852 = vpop.f32.mrb[0].mxu0
    %v3853 = vadd.f32 %v2347, %v3852
    %v3854 = vpop.f32.mrb[0].mxu0
    %v3855 = vadd.f32 %v2343, %v3854
    %v3856 = vpop.f32.mrb[0].mxu0
    %v3857 = vadd.f32 %v2347, %v3856
    %3858 = vdwg.mxu0
    %3859 = vmatprep.subr.bf16.mxu0 %v3265
    %3860 = vmatpush1.bf16.msra.mxu0 %v3264
    %3861 = vmatprep.subr.bf16.mxu0 %v3273
    %3862 = vmatpush1.bf16.msra.mxu0 %v3272
    %3863 = vmatprep.subr.bf16.mxu0 %v3281
    %3864 = vmatpush1.bf16.msra.mxu0 %v3280
    %3865 = vmatprep.subr.bf16.mxu0 %v3289
    %3866 = vmatpush1.bf16.msra.mxu0 %v3288
    %3867 = vmatprep.subr.bf16.mxu0 %v3297
    %3868 = vmatpush1.bf16.msra.mxu0 %v3296
    %3869 = vmatprep.subr.bf16.mxu0 %v3305
    %3870 = vmatpush1.bf16.msra.mxu0 %v3304
    %3871 = vmatprep.subr.bf16.mxu0 %v3313
    %3872 = vmatpush1.bf16.msra.mxu0 %v3312
    %3873 = vmatprep.subr.bf16.mxu0 %v3321
    %3874 = vmatpush1.bf16.msra.mxu0 %v3320
    %3875 = vmatprep.subr.bf16.mxu0 %v3329
    %3876 = vmatpush1.bf16.msra.mxu0 %v3328
    %3877 = vmatprep.subr.bf16.mxu0 %v3337
    %3878 = vmatpush1.bf16.msra.mxu0 %v3336
    %3879 = vmatprep.subr.bf16.mxu0 %v3345
    %3880 = vmatpush1.bf16.msra.mxu0 %v3344
    %3881 = vmatprep.subr.bf16.mxu0 %v3353
    %3882 = vmatpush1.bf16.msra.mxu0 %v3352
    %3883 = vmatprep.subr.bf16.mxu0 %v3361
    %3884 = vmatpush1.bf16.msra.mxu0 %v3360
    %3885 = vmatprep.subr.bf16.mxu0 %v3369
    %3886 = vmatpush1.bf16.msra.mxu0 %v3368
    %3887 = vmatprep.subr.bf16.mxu0 %v3377
    %3888 = vmatpush1.bf16.msra.mxu0 %v3376
    %3889 = vmatprep.subr.bf16.mxu0 %v3385
    %3890 = vmatpush1.bf16.msra.mxu0 %v3384
    %3891 = vmatprep.mubr.bf16.mxu0 %v2065
    %3892 = vmatmul.mubr.bf16.gmra.mrb[0].mxu0 %v2064
    %v3893 = vpop.f32.mrb[0].mxu0
    %v3894 = vadd.f32 %v3851, %v3893
    %v3895 = vpop.f32.mrb[0].mxu0
    %v3896 = vadd.f32 %v3853, %v3895
    %v3897 = vpop.f32.mrb[0].mxu0
    %v3898 = vadd.f32 %v3855, %v3897
    %v3899 = vpop.f32.mrb[0].mxu0
    %v3900 = vadd.f32 %v3857, %v3899
    %3901 = vdwg.mxu0
    %3902 = vmatprep.subr.bf16.mxu0 %v3139
    %3903 = vmatpush1.bf16.msra.mxu0 %v3138
    %3904 = vmatprep.subr.bf16.mxu0 %v3147
    %3905 = vmatpush1.bf16.msra.mxu0 %v3146
    %3906 = vmatprep.subr.bf16.mxu0 %v3155
    %3907 = vmatpush1.bf16.msra.mxu0 %v3154
    %3908 = vmatprep.subr.bf16.mxu0 %v3163
    %3909 = vmatpush1.bf16.msra.mxu0 %v3162
    %3910 = vmatprep.subr.bf16.mxu0 %v3171
    %3911 = vmatpush1.bf16.msra.mxu0 %v3170
    %3912 = vmatprep.subr.bf16.mxu0 %v3179
    %3913 = vmatpush1.bf16.msra.mxu0 %v3178
    %3914 = vmatprep.subr.bf16.mxu0 %v3187
    %3915 = vmatpush1.bf16.msra.mxu0 %v3186
    %3916 = vmatprep.subr.bf16.mxu0 %v3195
    %3917 = vmatpush1.bf16.msra.mxu0 %v3194
    %3918 = vmatprep.subr.bf16.mxu0 %v3203
    %3919 = vmatpush1.bf16.msra.mxu0 %v3202
    %3920 = vmatprep.subr.bf16.mxu0 %v3211
    %3921 = vmatpush1.bf16.msra.mxu0 %v3210
    %3922 = vmatprep.subr.bf16.mxu0 %v3219
    %3923 = vmatpush1.bf16.msra.mxu0 %v3218
    %3924 = vmatprep.subr.bf16.mxu0 %v3227
    %3925 = vmatpush1.bf16.msra.mxu0 %v3226
    %3926 = vmatprep.subr.bf16.mxu0 %v3235
    %3927 = vmatpush1.bf16.msra.mxu0 %v3234
    %3928 = vmatprep.subr.bf16.mxu0 %v3243
    %3929 = vmatpush1.bf16.msra.mxu0 %v3242
    %3930 = vmatprep.subr.bf16.mxu0 %v3251
    %3931 = vmatpush1.bf16.msra.mxu0 %v3250
    %3932 = vmatprep.subr.bf16.mxu0 %v3259
    %3933 = vmatpush1.bf16.msra.mxu0 %v3258
    %3934 = vmatprep.mubr.bf16.mxu0 %v2063
    %3935 = vmatmul.mubr.bf16.gmra.mrb[0].mxu0 %v2062
    %v3936 = vpop.f32.mrb[0].mxu0
    %v3937 = vadd.f32 %v2351, %v3936
    %v3938 = vpop.f32.mrb[0].mxu0
    %v3939 = vadd.f32 %v2355, %v3938
    %v3940 = vpop.f32.mrb[0].mxu0
    %v3941 = vadd.f32 %v2351, %v3940
    %v3942 = vpop.f32.mrb[0].mxu0
    %v3943 = vadd.f32 %v2355, %v3942
    %3944 = vdwg.mxu0
    %3945 = vmatprep.subr.bf16.mxu0 %v3267
    %3946 = vmatpush1.bf16.msra.mxu0 %v3266
    %3947 = vmatprep.subr.bf16.mxu0 %v3275
    %3948 = vmatpush1.bf16.msra.mxu0 %v3274
    %3949 = vmatprep.subr.bf16.mxu0 %v3283
    %3950 = vmatpush1.bf16.msra.mxu0 %v3282
    %3951 = vmatprep.subr.bf16.mxu0 %v3291
    %3952 = vmatpush1.bf16.msra.mxu0 %v3290
    %3953 = vmatprep.subr.bf16.mxu0 %v3299
    %3954 = vmatpush1.bf16.msra.mxu0 %v3298
    %3955 = vmatprep.subr.bf16.mxu0 %v3307
    %3956 = vmatpush1.bf16.msra.mxu0 %v3306
    %3957 = vmatprep.subr.bf16.mxu0 %v3315
    %3958 = vmatpush1.bf16.msra.mxu0 %v3314
    %3959 = vmatprep.subr.bf16.mxu0 %v3323
    %3960 = vmatpush1.bf16.msra.mxu0 %v3322
    %3961 = vmatprep.subr.bf16.mxu0 %v3331
    %3962 = vmatpush1.bf16.msra.mxu0 %v3330
    %3963 = vmatprep.subr.bf16.mxu0 %v3339
    %3964 = vmatpush1.bf16.msra.mxu0 %v3338
    %3965 = vmatprep.subr.bf16.mxu0 %v3347
    %3966 = vmatpush1.bf16.msra.mxu0 %v3346
    %3967 = vmatprep.subr.bf16.mxu0 %v3355
    %3968 = vmatpush1.bf16.msra.mxu0 %v3354
    %3969 = vmatprep.subr.bf16.mxu0 %v3363
    %3970 = vmatpush1.bf16.msra.mxu0 %v3362
    %3971 = vmatprep.subr.bf16.mxu0 %v3371
    %3972 = vmatpush1.bf16.msra.mxu0 %v3370
    %3973 = vmatprep.subr.bf16.mxu0 %v3379
    %3974 = vmatpush1.bf16.msra.mxu0 %v3378
    %3975 = vmatprep.subr.bf16.mxu0 %v3387
    %3976 = vmatpush1.bf16.msra.mxu0 %v3386
    %3977 = vmatprep.mubr.bf16.mxu0 %v2065
    %3978 = vmatmul.mubr.bf16.gmra.mrb[0].mxu0 %v2064
    %v3979 = vpop.f32.mrb[0].mxu0
    %v3980 = vadd.f32 %v3937, %v3979
    %v3981 = vpop.f32.mrb[0].mxu0
    %v3982 = vadd.f32 %v3939, %v3981
    %v3983 = vpop.f32.mrb[0].mxu0
    %v3984 = vadd.f32 %v3941, %v3983
    %v3985 = vpop.f32.mrb[0].mxu0
    %v3986 = vadd.f32 %v3943, %v3985
    %3987 = vdwg.mxu0
    %v3988 = vpack.c.bf16 %v3726, %v3722
    %v3989 = vpack.c.bf16 %v3728, %v3724
    %v3990 = vpack.c.bf16 %v3812, %v3808
    %v3991 = vpack.c.bf16 %v3814, %v3810
    %v3992 = vpack.c.bf16 %v3898, %v3894
    %v3993 = vpack.c.bf16 %v3900, %v3896
    %v3994 = vpack.c.bf16 %v3984, %v3980
    %v3995 = vpack.c.bf16 %v3986, %v3982
    %v3996 = vld [vmem:[%s5] sm:$0xf]
    %v3997 = vld [vmem:[%s5 + $0x4] sm:$0xf]
    %v3998 = vld [vmem:[%s5 + $0x8] sm:$0xf]
    %v3999 = vld [vmem:[%s5 + $0xc] sm:$0xf]
    %v4000 = vld [vmem:[%s5 + $0x10] sm:$0xf]
    %v4001 = vld [vmem:[%s5 + $0x14] sm:$0xf]
    %v4002 = vld [vmem:[%s5 + $0x18] sm:$0xf]
    %v4003 = vld [vmem:[%s5 + $0x1c] sm:$0xf]
    %v4004 = vld [vmem:[%s5 + $0x20] sm:$0xf]
    %v4005 = vld [vmem:[%s5 + $0x24] sm:$0xf]
    %v4006 = vld [vmem:[%s5 + $0x28] sm:$0xf]
    %v4007 = vld [vmem:[%s5 + $0x2c] sm:$0xf]
    %v4008 = vld [vmem:[%s5 + $0x30] sm:$0xf]
    %v4009 = vld [vmem:[%s5 + $0x34] sm:$0xf]
    %v4010 = vld [vmem:[%s5 + $0x38] sm:$0xf]
    %v4011 = vld [vmem:[%s5 + $0x3c] sm:$0xf]
    %v4012 = vld [vmem:[%s5 + $0x40] sm:$0xf]
    %v4013 = vld [vmem:[%s5 + $0x44] sm:$0xf]
    %v4014 = vld [vmem:[%s5 + $0x48] sm:$0xf]
    %v4015 = vld [vmem:[%s5 + $0x4c] sm:$0xf]
    %v4016 = vld [vmem:[%s5 + $0x50] sm:$0xf]
    %v4017 = vld [vmem:[%s5 + $0x54] sm:$0xf]
    %v4018 = vld [vmem:[%s5 + $0x58] sm:$0xf]
    %v4019 = vld [vmem:[%s5 + $0x5c] sm:$0xf]
    %v4020 = vld [vmem:[%s5 + $0x60] sm:$0xf]
    %v4021 = vld [vmem:[%s5 + $0x64] sm:$0xf]
    %v4022 = vld [vmem:[%s5 + $0x68] sm:$0xf]
    %v4023 = vld [vmem:[%s5 + $0x6c] sm:$0xf]
    %v4024 = vld [vmem:[%s5 + $0x70] sm:$0xf]
    %v4025 = vld [vmem:[%s5 + $0x74] sm:$0xf]
    %v4026 = vld [vmem:[%s5 + $0x78] sm:$0xf]
    %v4027 = vld [vmem:[%s5 + $0x7c] sm:$0xf]
    %v4028 = vld [vmem:[%s5 + $0x80] sm:$0xf]
    %v4029 = vld [vmem:[%s5 + $0x84] sm:$0xf]
    %v4030 = vld [vmem:[%s5 + $0x88] sm:$0xf]
    %v4031 = vld [vmem:[%s5 + $0x8c] sm:$0xf]
    %v4032 = vld [vmem:[%s5 + $0x90] sm:$0xf]
    %v4033 = vld [vmem:[%s5 + $0x94] sm:$0xf]
    %v4034 = vld [vmem:[%s5 + $0x98] sm:$0xf]
    %v4035 = vld [vmem:[%s5 + $0x9c] sm:$0xf]
    %v4036 = vld [vmem:[%s5 + $0xa0] sm:$0xf]
    %v4037 = vld [vmem:[%s5 + $0xa4] sm:$0xf]
    %v4038 = vld [vmem:[%s5 + $0xa8] sm:$0xf]
    %v4039 = vld [vmem:[%s5 + $0xac] sm:$0xf]
    %v4040 = vld [vmem:[%s5 + $0xb0] sm:$0xf]
    %v4041 = vld [vmem:[%s5 + $0xb4] sm:$0xf]
    %v4042 = vld [vmem:[%s5 + $0xb8] sm:$0xf]
    %v4043 = vld [vmem:[%s5 + $0xbc] sm:$0xf]
    %v4044 = vld [vmem:[%s5 + $0xc0] sm:$0xf]
    %v4045 = vld [vmem:[%s5 + $0xc4] sm:$0xf]
    %v4046 = vld [vmem:[%s5 + $0xc8] sm:$0xf]
    %v4047 = vld [vmem:[%s5 + $0xcc] sm:$0xf]
    %v4048 = vld [vmem:[%s5 + $0xd0] sm:$0xf]
    %v4049 = vld [vmem:[%s5 + $0xd4] sm:$0xf]
    %v4050 = vld [vmem:[%s5 + $0xd8] sm:$0xf]
    %v4051 = vld [vmem:[%s5 + $0xdc] sm:$0xf]
    %v4052 = vld [vmem:[%s5 + $0xe0] sm:$0xf]
    %v4053 = vld [vmem:[%s5 + $0xe4] sm:$0xf]
    %v4054 = vld [vmem:[%s5 + $0xe8] sm:$0xf]
    %v4055 = vld [vmem:[%s5 + $0xec] sm:$0xf]
    %v4056 = vld [vmem:[%s5 + $0xf0] sm:$0xf]
    %v4057 = vld [vmem:[%s5 + $0xf4] sm:$0xf]
    %v4058 = vld [vmem:[%s5 + $0xf8] sm:$0xf]
    %v4059 = vld [vmem:[%s5 + $0xfc] sm:$0xf]
    %v4060 = vld [vmem:[%s5 + $0x100] sm:$0xf]
    %v4061 = vld [vmem:[%s5 + $0x104] sm:$0xf]
    %v4062 = vld [vmem:[%s5 + $0x108] sm:$0xf]
    %v4063 = vld [vmem:[%s5 + $0x10c] sm:$0xf]
    %v4064 = vld [vmem:[%s5 + $0x110] sm:$0xf]
    %v4065 = vld [vmem:[%s5 + $0x114] sm:$0xf]
    %v4066 = vld [vmem:[%s5 + $0x118] sm:$0xf]
    %v4067 = vld [vmem:[%s5 + $0x11c] sm:$0xf]
    %v4068 = vld [vmem:[%s5 + $0x120] sm:$0xf]
    %v4069 = vld [vmem:[%s5 + $0x124] sm:$0xf]
    %v4070 = vld [vmem:[%s5 + $0x128] sm:$0xf]
    %v4071 = vld [vmem:[%s5 + $0x12c] sm:$0xf]
    %v4072 = vld [vmem:[%s5 + $0x130] sm:$0xf]
    %v4073 = vld [vmem:[%s5 + $0x134] sm:$0xf]
    %v4074 = vld [vmem:[%s5 + $0x138] sm:$0xf]
    %v4075 = vld [vmem:[%s5 + $0x13c] sm:$0xf]
    %v4076 = vld [vmem:[%s5 + $0x140] sm:$0xf]
    %v4077 = vld [vmem:[%s5 + $0x144] sm:$0xf]
    %v4078 = vld [vmem:[%s5 + $0x148] sm:$0xf]
    %v4079 = vld [vmem:[%s5 + $0x14c] sm:$0xf]
    %v4080 = vld [vmem:[%s5 + $0x150] sm:$0xf]
    %v4081 = vld [vmem:[%s5 + $0x154] sm:$0xf]
    %v4082 = vld [vmem:[%s5 + $0x158] sm:$0xf]
    %v4083 = vld [vmem:[%s5 + $0x15c] sm:$0xf]
    %v4084 = vld [vmem:[%s5 + $0x160] sm:$0xf]
    %v4085 = vld [vmem:[%s5 + $0x164] sm:$0xf]
    %v4086 = vld [vmem:[%s5 + $0x168] sm:$0xf]
    %v4087 = vld [vmem:[%s5 + $0x16c] sm:$0xf]
    %v4088 = vld [vmem:[%s5 + $0x170] sm:$0xf]
    %v4089 = vld [vmem:[%s5 + $0x174] sm:$0xf]
    %v4090 = vld [vmem:[%s5 + $0x178] sm:$0xf]
    %v4091 = vld [vmem:[%s5 + $0x17c] sm:$0xf]
    %v4092 = vld [vmem:[%s5 + $0x180] sm:$0xf]
    %v4093 = vld [vmem:[%s5 + $0x184] sm:$0xf]
    %v4094 = vld [vmem:[%s5 + $0x188] sm:$0xf]
    %v4095 = vld [vmem:[%s5 + $0x18c] sm:$0xf]
    %v4096 = vld [vmem:[%s5 + $0x190] sm:$0xf]
    %v4097 = vld [vmem:[%s5 + $0x194] sm:$0xf]
    %v4098 = vld [vmem:[%s5 + $0x198] sm:$0xf]
    %v4099 = vld [vmem:[%s5 + $0x19c] sm:$0xf]
    %v4100 = vld [vmem:[%s5 + $0x1a0] sm:$0xf]
    %v4101 = vld [vmem:[%s5 + $0x1a4] sm:$0xf]
    %v4102 = vld [vmem:[%s5 + $0x1a8] sm:$0xf]
    %v4103 = vld [vmem:[%s5 + $0x1ac] sm:$0xf]
    %v4104 = vld [vmem:[%s5 + $0x1b0] sm:$0xf]
    %v4105 = vld [vmem:[%s5 + $0x1b4] sm:$0xf]
    %v4106 = vld [vmem:[%s5 + $0x1b8] sm:$0xf]
    %v4107 = vld [vmem:[%s5 + $0x1bc] sm:$0xf]
    %v4108 = vld [vmem:[%s5 + $0x1c0] sm:$0xf]
    %v4109 = vld [vmem:[%s5 + $0x1c4] sm:$0xf]
    %v4110 = vld [vmem:[%s5 + $0x1c8] sm:$0xf]
    %v4111 = vld [vmem:[%s5 + $0x1cc] sm:$0xf]
    %v4112 = vld [vmem:[%s5 + $0x1d0] sm:$0xf]
    %v4113 = vld [vmem:[%s5 + $0x1d4] sm:$0xf]
    %v4114 = vld [vmem:[%s5 + $0x1d8] sm:$0xf]
    %v4115 = vld [vmem:[%s5 + $0x1dc] sm:$0xf]
    %v4116 = vld [vmem:[%s5 + $0x1e0] sm:$0xf]
    %v4117 = vld [vmem:[%s5 + $0x1e4] sm:$0xf]
    %v4118 = vld [vmem:[%s5 + $0x1e8] sm:$0xf]
    %v4119 = vld [vmem:[%s5 + $0x1ec] sm:$0xf]
    %v4120 = vld [vmem:[%s5 + $0x1f0] sm:$0xf]
    %v4121 = vld [vmem:[%s5 + $0x1f4] sm:$0xf]
    %v4122 = vld [vmem:[%s5 + $0x1f8] sm:$0xf]
    %v4123 = vld [vmem:[%s5 + $0x1fc] sm:$0xf]
    %v4124 = vld [vmem:[%s6] sm:$0x1]
    %v4126 = vlaneseq
    %v4127 = vshrl.u32 %v4126, 7
    %v4128 = vsub.s32 0, %v4127
    %v4129 = vrot.slane %v4124, %v4128
    %v4259 = vunpack.c.l.b16 %v3996
    %v4260 = vunpack.c.l.b16 %v3997
    %v4261 = vunpack.c.l.b16 %v3998
    %v4262 = vunpack.c.l.b16 %v3999
    %v4263 = vunpack.c.l.b16 %v4000
    %v4264 = vunpack.c.l.b16 %v4001
    %v4265 = vunpack.c.l.b16 %v4002
    %v4266 = vunpack.c.l.b16 %v4003
    %v4267 = vunpack.c.l.b16 %v4004
    %v4268 = vunpack.c.l.b16 %v4005
    %v4269 = vunpack.c.l.b16 %v4006
    %v4270 = vunpack.c.l.b16 %v4007
    %v4271 = vunpack.c.l.b16 %v4008
    %v4272 = vunpack.c.l.b16 %v4009
    %v4273 = vunpack.c.l.b16 %v4010
    %v4274 = vunpack.c.l.b16 %v4011
    %v4275 = vunpack.c.l.b16 %v4012
    %v4276 = vunpack.c.l.b16 %v4013
    %v4277 = vunpack.c.l.b16 %v4014
    %v4278 = vunpack.c.l.b16 %v4015
    %v4279 = vunpack.c.l.b16 %v4016
    %v4280 = vunpack.c.l.b16 %v4017
    %v4281 = vunpack.c.l.b16 %v4018
    %v4282 = vunpack.c.l.b16 %v4019
    %v4283 = vunpack.c.l.b16 %v4020
    %v4284 = vunpack.c.l.b16 %v4021
    %v4285 = vunpack.c.l.b16 %v4022
    %v4286 = vunpack.c.l.b16 %v4023
    %v4287 = vunpack.c.l.b16 %v4024
    %v4288 = vunpack.c.l.b16 %v4025
    %v4289 = vunpack.c.l.b16 %v4026
    %v4290 = vunpack.c.l.b16 %v4027
    %v4291 = vunpack.c.l.b16 %v4028
    %v4292 = vunpack.c.l.b16 %v4029
    %v4293 = vunpack.c.l.b16 %v4030
    %v4294 = vunpack.c.l.b16 %v4031
    %v4295 = vunpack.c.l.b16 %v4032
    %v4296 = vunpack.c.l.b16 %v4033
    %v4297 = vunpack.c.l.b16 %v4034
    %v4298 = vunpack.c.l.b16 %v4035
    %v4299 = vunpack.c.l.b16 %v4036
    %v4300 = vunpack.c.l.b16 %v4037
    %v4301 = vunpack.c.l.b16 %v4038
    %v4302 = vunpack.c.l.b16 %v4039
    %v4303 = vunpack.c.l.b16 %v4040
    %v4304 = vunpack.c.l.b16 %v4041
    %v4305 = vunpack.c.l.b16 %v4042
    %v4306 = vunpack.c.l.b16 %v4043
    %v4307 = vunpack.c.l.b16 %v4044
    %v4308 = vunpack.c.l.b16 %v4045
    %v4309 = vunpack.c.l.b16 %v4046
    %v4310 = vunpack.c.l.b16 %v4047
    %v4311 = vunpack.c.l.b16 %v4048
    %v4312 = vunpack.c.l.b16 %v4049
    %v4313 = vunpack.c.l.b16 %v4050
    %v4314 = vunpack.c.l.b16 %v4051
    %v4315 = vunpack.c.l.b16 %v4052
    %v4316 = vunpack.c.l.b16 %v4053
    %v4317 = vunpack.c.l.b16 %v4054
    %v4318 = vunpack.c.l.b16 %v4055
    %v4319 = vunpack.c.l.b16 %v4056
    %v4320 = vunpack.c.l.b16 %v4057
    %v4321 = vunpack.c.l.b16 %v4058
    %v4322 = vunpack.c.l.b16 %v4059
    %v4323 = vunpack.c.l.b16 %v4060
    %v4324 = vunpack.c.l.b16 %v4061
    %v4325 = vunpack.c.l.b16 %v4062
    %v4326 = vunpack.c.l.b16 %v4063
    %v4327 = vunpack.c.l.b16 %v4064
    %v4328 = vunpack.c.l.b16 %v4065
    %v4329 = vunpack.c.l.b16 %v4066
    %v4330 = vunpack.c.l.b16 %v4067
    %v4331 = vunpack.c.l.b16 %v4068
    %v4332 = vunpack.c.l.b16 %v4069
    %v4333 = vunpack.c.l.b16 %v4070
    %v4334 = vunpack.c.l.b16 %v4071
    %v4335 = vunpack.c.l.b16 %v4072
    %v4336 = vunpack.c.l.b16 %v4073
    %v4337 = vunpack.c.l.b16 %v4074
    %v4338 = vunpack.c.l.b16 %v4075
    %v4339 = vunpack.c.l.b16 %v4076
    %v4340 = vunpack.c.l.b16 %v4077
    %v4341 = vunpack.c.l.b16 %v4078
    %v4342 = vunpack.c.l.b16 %v4079
    %v4343 = vunpack.c.l.b16 %v4080
    %v4344 = vunpack.c.l.b16 %v4081
    %v4345 = vunpack.c.l.b16 %v4082
    %v4346 = vunpack.c.l.b16 %v4083
    %v4347 = vunpack.c.l.b16 %v4084
    %v4348 = vunpack.c.l.b16 %v4085
    %v4349 = vunpack.c.l.b16 %v4086
    %v4350 = vunpack.c.l.b16 %v4087
    %v4351 = vunpack.c.l.b16 %v4088
    %v4352 = vunpack.c.l.b16 %v4089
    %v4353 = vunpack.c.l.b16 %v4090
    %v4354 = vunpack.c.l.b16 %v4091
    %v4355 = vunpack.c.l.b16 %v4092
    %v4356 = vunpack.c.l.b16 %v4093
    %v4357 = vunpack.c.l.b16 %v4094
    %v4358 = vunpack.c.l.b16 %v4095
    %v4359 = vunpack.c.l.b16 %v4096
    %v4360 = vunpack.c.l.b16 %v4097
    %v4361 = vunpack.c.l.b16 %v4098
    %v4362 = vunpack.c.l.b16 %v4099
    %v4363 = vunpack.c.l.b16 %v4100
    %v4364 = vunpack.c.l.b16 %v4101
    %v4365 = vunpack.c.l.b16 %v4102
    %v4366 = vunpack.c.l.b16 %v4103
    %v4367 = vunpack.c.l.b16 %v4104
    %v4368 = vunpack.c.l.b16 %v4105
    %v4369 = vunpack.c.l.b16 %v4106
    %v4370 = vunpack.c.l.b16 %v4107
    %v4371 = vunpack.c.l.b16 %v4108
    %v4372 = vunpack.c.l.b16 %v4109
    %v4373 = vunpack.c.l.b16 %v4110
    %v4374 = vunpack.c.l.b16 %v4111
    %v4375 = vunpack.c.l.b16 %v4112
    %v4376 = vunpack.c.l.b16 %v4113
    %v4377 = vunpack.c.l.b16 %v4114
    %v4378 = vunpack.c.l.b16 %v4115
    %v4379 = vunpack.c.l.b16 %v4116
    %v4380 = vunpack.c.l.b16 %v4117
    %v4381 = vunpack.c.l.b16 %v4118
    %v4382 = vunpack.c.l.b16 %v4119
    %v4383 = vunpack.c.l.b16 %v4120
    %v4384 = vunpack.c.l.b16 %v4121
    %v4385 = vunpack.c.l.b16 %v4122
    %v4386 = vunpack.c.l.b16 %v4123
    %v4387 = vpack.c.b16 %v4260, %v4259
    %v4388 = vpack.c.b16 %v4262, %v4261
    %v4389 = vpack.c.b16 %v4264, %v4263
    %v4390 = vpack.c.b16 %v4266, %v4265
    %v4391 = vpack.c.b16 %v4268, %v4267
    %v4392 = vpack.c.b16 %v4270, %v4269
    %v4393 = vpack.c.b16 %v4272, %v4271
    %v4394 = vpack.c.b16 %v4274, %v4273
    %v4395 = vpack.c.b16 %v4276, %v4275
    %v4396 = vpack.c.b16 %v4278, %v4277
    %v4397 = vpack.c.b16 %v4280, %v4279
    %v4398 = vpack.c.b16 %v4282, %v4281
    %v4399 = vpack.c.b16 %v4284, %v4283
    %v4400 = vpack.c.b16 %v4286, %v4285
    %v4401 = vpack.c.b16 %v4288, %v4287
    %v4402 = vpack.c.b16 %v4290, %v4289
    %v4403 = vpack.c.b16 %v4292, %v4291
    %v4404 = vpack.c.b16 %v4294, %v4293
    %v4405 = vpack.c.b16 %v4296, %v4295
    %v4406 = vpack.c.b16 %v4298, %v4297
    %v4407 = vpack.c.b16 %v4300, %v4299
    %v4408 = vpack.c.b16 %v4302, %v4301
    %v4409 = vpack.c.b16 %v4304, %v4303
    %v4410 = vpack.c.b16 %v4306, %v4305
    %v4411 = vpack.c.b16 %v4308, %v4307
    %v4412 = vpack.c.b16 %v4310, %v4309
    %v4413 = vpack.c.b16 %v4312, %v4311
    %v4414 = vpack.c.b16 %v4314, %v4313
    %v4415 = vpack.c.b16 %v4316, %v4315
    %v4416 = vpack.c.b16 %v4318, %v4317
    %v4417 = vpack.c.b16 %v4320, %v4319
    %v4418 = vpack.c.b16 %v4322, %v4321
    %v4419 = vpack.c.b16 %v4324, %v4323
    %v4420 = vpack.c.b16 %v4326, %v4325
    %v4421 = vpack.c.b16 %v4328, %v4327
    %v4422 = vpack.c.b16 %v4330, %v4329
    %v4423 = vpack.c.b16 %v4332, %v4331
    %v4424 = vpack.c.b16 %v4334, %v4333
    %v4425 = vpack.c.b16 %v4336, %v4335
    %v4426 = vpack.c.b16 %v4338, %v4337
    %v4427 = vpack.c.b16 %v4340, %v4339
    %v4428 = vpack.c.b16 %v4342, %v4341
    %v4429 = vpack.c.b16 %v4344, %v4343
    %v4430 = vpack.c.b16 %v4346, %v4345
    %v4431 = vpack.c.b16 %v4348, %v4347
    %v4432 = vpack.c.b16 %v4350, %v4349
    %v4433 = vpack.c.b16 %v4352, %v4351
    %v4434 = vpack.c.b16 %v4354, %v4353
    %v4435 = vpack.c.b16 %v4356, %v4355
    %v4436 = vpack.c.b16 %v4358, %v4357
    %v4437 = vpack.c.b16 %v4360, %v4359
    %v4438 = vpack.c.b16 %v4362, %v4361
    %v4439 = vpack.c.b16 %v4364, %v4363
    %v4440 = vpack.c.b16 %v4366, %v4365
    %v4441 = vpack.c.b16 %v4368, %v4367
    %v4442 = vpack.c.b16 %v4370, %v4369
    %v4443 = vpack.c.b16 %v4372, %v4371
    %v4444 = vpack.c.b16 %v4374, %v4373
    %v4445 = vpack.c.b16 %v4376, %v4375
    %v4446 = vpack.c.b16 %v4378, %v4377
    %v4447 = vpack.c.b16 %v4380, %v4379
    %v4448 = vpack.c.b16 %v4382, %v4381
    %v4449 = vpack.c.b16 %v4384, %v4383
    %v4450 = vpack.c.b16 %v4386, %v4385
    %4515 = vmatprep.subr.bf16.mxu0 0
    %4516 = vmatpush1.bf16.msra.mxu0 %v4387
    %4517 = vmatprep.subr.bf16.mxu0 0
    %4518 = vmatpush1.bf16.msra.mxu0 %v4388
    %4519 = vmatprep.subr.bf16.mxu0 0
    %4520 = vmatpush1.bf16.msra.mxu0 %v4389
    %4521 = vmatprep.subr.bf16.mxu0 0
    %4522 = vmatpush1.bf16.msra.mxu0 %v4390
    %4523 = vmatprep.subr.bf16.mxu0 0
    %4524 = vmatpush1.bf16.msra.mxu0 %v4391
    %4525 = vmatprep.subr.bf16.mxu0 0
    %4526 = vmatpush1.bf16.msra.mxu0 %v4392
    %4527 = vmatprep.subr.bf16.mxu0 0
    %4528 = vmatpush1.bf16.msra.mxu0 %v4393
    %4529 = vmatprep.subr.bf16.mxu0 0
    %4530 = vmatpush1.bf16.msra.mxu0 %v4394
    %4531 = vmatprep.subr.bf16.mxu0 0
    %4532 = vmatpush1.bf16.msra.mxu0 %v4395
    %4533 = vmatprep.subr.bf16.mxu0 0
    %4534 = vmatpush1.bf16.msra.mxu0 %v4396
    %4535 = vmatprep.subr.bf16.mxu0 0
    %4536 = vmatpush1.bf16.msra.mxu0 %v4397
    %4537 = vmatprep.subr.bf16.mxu0 0
    %4538 = vmatpush1.bf16.msra.mxu0 %v4398
    %4539 = vmatprep.subr.bf16.mxu0 0
    %4540 = vmatpush1.bf16.msra.mxu0 %v4399
    %4541 = vmatprep.subr.bf16.mxu0 0
    %4542 = vmatpush1.bf16.msra.mxu0 %v4400
    %4543 = vmatprep.subr.bf16.mxu0 0
    %4544 = vmatpush1.bf16.msra.mxu0 %v4401
    %4545 = vmatprep.subr.bf16.mxu0 0
    %4546 = vmatpush1.bf16.msra.mxu0 %v4402
    %4547 = vmatprep.mubr.bf16.mxu0 %v3989
    %4548 = vmatmul.mubr.bf16.gmra.mrb[0].mxu0 %v3988
    %v4549 = vpop.f32.mrb[0].mxu0
    %v4550 = vadd.f32 %v4129, %v4549
    %v4551 = vpop.f32.mrb[0].mxu0
    %v4552 = vpop.f32.mrb[0].mxu0
    %v4553 = vadd.f32 %v4129, %v4552
    %v4554 = vpop.f32.mrb[0].mxu0
    %4555 = vdwg.mxu0
    %4556 = vmatprep.subr.bf16.mxu0 0
    %4557 = vmatpush1.bf16.msra.mxu0 %v4403
    %4558 = vmatprep.subr.bf16.mxu0 0
    %4559 = vmatpush1.bf16.msra.mxu0 %v4404
    %4560 = vmatprep.subr.bf16.mxu0 0
    %4561 = vmatpush1.bf16.msra.mxu0 %v4405
    %4562 = vmatprep.subr.bf16.mxu0 0
    %4563 = vmatpush1.bf16.msra.mxu0 %v4406
    %4564 = vmatprep.subr.bf16.mxu0 0
    %4565 = vmatpush1.bf16.msra.mxu0 %v4407
    %4566 = vmatprep.subr.bf16.mxu0 0
    %4567 = vmatpush1.bf16.msra.mxu0 %v4408
    %4568 = vmatprep.subr.bf16.mxu0 0
    %4569 = vmatpush1.bf16.msra.mxu0 %v4409
    %4570 = vmatprep.subr.bf16.mxu0 0
    %4571 = vmatpush1.bf16.msra.mxu0 %v4410
    %4572 = vmatprep.subr.bf16.mxu0 0
    %4573 = vmatpush1.bf16.msra.mxu0 %v4411
    %4574 = vmatprep.subr.bf16.mxu0 0
    %4575 = vmatpush1.bf16.msra.mxu0 %v4412
    %4576 = vmatprep.subr.bf16.mxu0 0
    %4577 = vmatpush1.bf16.msra.mxu0 %v4413
    %4578 = vmatprep.subr.bf16.mxu0 0
    %4579 = vmatpush1.bf16.msra.mxu0 %v4414
    %4580 = vmatprep.subr.bf16.mxu0 0
    %4581 = vmatpush1.bf16.msra.mxu0 %v4415
    %4582 = vmatprep.subr.bf16.mxu0 0
    %4583 = vmatpush1.bf16.msra.mxu0 %v4416
    %4584 = vmatprep.subr.bf16.mxu0 0
    %4585 = vmatpush1.bf16.msra.mxu0 %v4417
    %4586 = vmatprep.subr.bf16.mxu0 0
    %4587 = vmatpush1.bf16.msra.mxu0 %v4418
    %4588 = vmatprep.mubr.bf16.mxu0 %v3991
    %4589 = vmatmul.mubr.bf16.gmra.mrb[0].mxu0 %v3990
    %v4590 = vpop.f32.mrb[0].mxu0
    %v4591 = vadd.f32 %v4550, %v4590
    %v4592 = vpop.f32.mrb[0].mxu0
    %v4593 = vpop.f32.mrb[0].mxu0
    %v4594 = vadd.f32 %v4553, %v4593
    %v4595 = vpop.f32.mrb[0].mxu0
    %4596 = vdwg.mxu0
    %4597 = vmatprep.subr.bf16.mxu0 0
    %4598 = vmatpush1.bf16.msra.mxu0 %v4419
    %4599 = vmatprep.subr.bf16.mxu0 0
    %4600 = vmatpush1.bf16.msra.mxu0 %v4420
    %4601 = vmatprep.subr.bf16.mxu0 0
    %4602 = vmatpush1.bf16.msra.mxu0 %v4421
    %4603 = vmatprep.subr.bf16.mxu0 0
    %4604 = vmatpush1.bf16.msra.mxu0 %v4422
    %4605 = vmatprep.subr.bf16.mxu0 0
    %4606 = vmatpush1.bf16.msra.mxu0 %v4423
    %4607 = vmatprep.subr.bf16.mxu0 0
    %4608 = vmatpush1.bf16.msra.mxu0 %v4424
    %4609 = vmatprep.subr.bf16.mxu0 0
    %4610 = vmatpush1.bf16.msra.mxu0 %v4425
    %4611 = vmatprep.subr.bf16.mxu0 0
    %4612 = vmatpush1.bf16.msra.mxu0 %v4426
    %4613 = vmatprep.subr.bf16.mxu0 0
    %4614 = vmatpush1.bf16.msra.mxu0 %v4427
    %4615 = vmatprep.subr.bf16.mxu0 0
    %4616 = vmatpush1.bf16.msra.mxu0 %v4428
    %4617 = vmatprep.subr.bf16.mxu0 0
    %4618 = vmatpush1.bf16.msra.mxu0 %v4429
    %4619 = vmatprep.subr.bf16.mxu0 0
    %4620 = vmatpush1.bf16.msra.mxu0 %v4430
    %4621 = vmatprep.subr.bf16.mxu0 0
    %4622 = vmatpush1.bf16.msra.mxu0 %v4431
    %4623 = vmatprep.subr.bf16.mxu0 0
    %4624 = vmatpush1.bf16.msra.mxu0 %v4432
    %4625 = vmatprep.subr.bf16.mxu0 0
    %4626 = vmatpush1.bf16.msra.mxu0 %v4433
    %4627 = vmatprep.subr.bf16.mxu0 0
    %4628 = vmatpush1.bf16.msra.mxu0 %v4434
    %4629 = vmatprep.mubr.bf16.mxu0 %v3993
    %4630 = vmatmul.mubr.bf16.gmra.mrb[0].mxu0 %v3992
    %v4631 = vpop.f32.mrb[0].mxu0
    %v4632 = vadd.f32 %v4591, %v4631
    %v4633 = vpop.f32.mrb[0].mxu0
    %v4634 = vpop.f32.mrb[0].mxu0
    %v4635 = vadd.f32 %v4594, %v4634
    %v4636 = vpop.f32.mrb[0].mxu0
    %4637 = vdwg.mxu0
    %4638 = vmatprep.subr.bf16.mxu0 0
    %4639 = vmatpush1.bf16.msra.mxu0 %v4435
    %4640 = vmatprep.subr.bf16.mxu0 0
    %4641 = vmatpush1.bf16.msra.mxu0 %v4436
    %4642 = vmatprep.subr.bf16.mxu0 0
    %4643 = vmatpush1.bf16.msra.mxu0 %v4437
    %4644 = vmatprep.subr.bf16.mxu0 0
    %4645 = vmatpush1.bf16.msra.mxu0 %v4438
    %4646 = vmatprep.subr.bf16.mxu0 0
    %4647 = vmatpush1.bf16.msra.mxu0 %v4439
    %4648 = vmatprep.subr.bf16.mxu0 0
    %4649 = vmatpush1.bf16.msra.mxu0 %v4440
    %4650 = vmatprep.subr.bf16.mxu0 0
    %4651 = vmatpush1.bf16.msra.mxu0 %v4441
    %4652 = vmatprep.subr.bf16.mxu0 0
    %4653 = vmatpush1.bf16.msra.mxu0 %v4442
    %4654 = vmatprep.subr.bf16.mxu0 0
    %4655 = vmatpush1.bf16.msra.mxu0 %v4443
    %4656 = vmatprep.subr.bf16.mxu0 0
    %4657 = vmatpush1.bf16.msra.mxu0 %v4444
    %4658 = vmatprep.subr.bf16.mxu0 0
    %4659 = vmatpush1.bf16.msra.mxu0 %v4445
    %4660 = vmatprep.subr.bf16.mxu0 0
    %4661 = vmatpush1.bf16.msra.mxu0 %v4446
    %4662 = vmatprep.subr.bf16.mxu0 0
    %4663 = vmatpush1.bf16.msra.mxu0 %v4447
    %4664 = vmatprep.subr.bf16.mxu0 0
    %4665 = vmatpush1.bf16.msra.mxu0 %v4448
    %4666 = vmatprep.subr.bf16.mxu0 0
    %4667 = vmatpush1.bf16.msra.mxu0 %v4449
    %4668 = vmatprep.subr.bf16.mxu0 0
    %4669 = vmatpush1.bf16.msra.mxu0 %v4450
    %4670 = vmatprep.mubr.bf16.mxu0 %v3995
    %4671 = vmatmul.mubr.bf16.gmra.mrb[0].mxu0 %v3994
    %v4672 = vpop.f32.mrb[0].mxu0
    %v4673 = vadd.f32 %v4632, %v4672
    %v4674 = vpop.f32.mrb[0].mxu0
    %v4675 = vpop.f32.mrb[0].mxu0
    %v4676 = vadd.f32 %v4635, %v4675
    %v4677 = vpop.f32.mrb[0].mxu0
    %4678 = vdwg.mxu0
    %4679 = vst [vmem:[%s7] sm:$0xff] %v4673
    %4680 = vst [vmem:[%s7 + $0x8] sm:$0xff] %v4676
  $region37: #{forward.1} parent=0 // pred_fallthru
    _
  // Predicated region
  $region38: #{forward.1} parent=0 // pred_check
    _
  $region39: #{forward.1} parent=0 // pred_check_branch
    %4682 = sbr.rel (0) target = $region41
  $region40: #{forward.1} parent=0 // pred_region
    _
  $region41: #{forward.1} parent=0 // pred_fallthru
    _
  // Predicated region
  $region42: #{forward.1} parent=0 // pred_check
    _
  $region43: #{forward.1} parent=0 // pred_check_branch
    %4684 = sbr.rel (0) target = $region45
  $region44: #{forward.1} parent=0 // pred_region
    _
  $region45: #{forward.1} parent=0 // pred_fallthru
    _

</llo_original>
